<compile_context>
chip_gen: v7x
topology: tpu7x:2x2x1
jax: 0.10.0
libtpu: 0.0.40
codegen_flags: <defaults>
</compile_context>

<pallas_src>
import functools

import jax
import jax.numpy as jnp
from jax.experimental import pallas as pl
from jax.experimental.pallas import tpu as pltpu


CPAD = 128  # lane-dense channel padding for all internal activations / weights


# --------------------------------------------------------------------------
# Pallas kernels
# --------------------------------------------------------------------------

def _fused_mm_kernel(x_ref, w_ref, shift_ref, *rest, relu, has_res):
    """out = act( x @ w + shift [+ residual] ), f32 accumulate, bf16 store."""
    if has_res:
        res_ref, o_ref = rest
    else:
        (o_ref,) = rest
    acc = jnp.dot(x_ref[...], w_ref[...], preferred_element_type=jnp.float32)
    acc = acc + shift_ref[...]
    if has_res:
        acc = acc + res_ref[...].astype(jnp.float32)
    if relu:
        acc = jnp.maximum(acc, 0.0)
    o_ref[...] = acc.astype(o_ref.dtype)


def _pick_tm(m):
    # Cap at 256 so M=512 still splits 2-way across v7x's two TensorCores.
    for tm in (256, 128, 64, 32, 16, 8):
        if m % tm == 0:
            return tm
    return m


def fused_matmul_bn(x2d, wmat, shift2d, residual=None, relu=True,
                    out_dtype=jnp.bfloat16):
    """(M,K)@(K,N) fused with BN shift, optional residual, optional ReLU.

    Tiled over M with a real grid (auto-pipelined, megacore-parallel).  N is a
    single lane-dense 128-wide tile; K (= 9*Cin_real) is whole per block, so
    the weight tile stays resident across grid steps.
    """
    M, K = x2d.shape
    N = wmat.shape[1]
    tm = _pick_tm(M)
    grid = (M // tm,)
    has_res = residual is not None

    inputs = [x2d, wmat, shift2d]
    in_specs = [
        pl.BlockSpec((tm, K), lambda i: (i, 0)),
        pl.BlockSpec((K, N), lambda i: (0, 0)),
        pl.BlockSpec((1, N), lambda i: (0, 0)),
    ]
    if has_res:
        inputs.append(residual)
        in_specs.append(pl.BlockSpec((tm, N), lambda i: (i, 0)))

    bytes_accessed = (x2d.size * x2d.dtype.itemsize
                      + wmat.size * wmat.dtype.itemsize
                      + shift2d.size * shift2d.dtype.itemsize
                      + M * N * jnp.dtype(out_dtype).itemsize
                      + (residual.size * residual.dtype.itemsize if has_res else 0))

    kernel = functools.partial(_fused_mm_kernel, relu=relu, has_res=has_res)
    return pl.pallas_call(
        kernel,
        out_shape=jax.ShapeDtypeStruct((M, N), out_dtype),
        grid=grid,
        in_specs=in_specs,
        out_specs=pl.BlockSpec((tm, N), lambda i: (i, 0)),
        compiler_params=pltpu.CompilerParams(
            dimension_semantics=("parallel",),
            vmem_limit_bytes=32 * 1024 * 1024),
        cost_estimate=pl.CostEstimate(
            flops=2 * M * K * N,
            transcendentals=0,
            bytes_accessed=int(bytes_accessed)),
    )(*inputs)


def _head_kernel(x_ref, w_ref, b_ref, o_ref):
    """Fused global average pool + linear: (B,HW,C) -> (B,N)."""
    pooled = jnp.mean(x_ref[...].astype(jnp.float32), axis=1)          # (B, C)
    out = jnp.dot(pooled, w_ref[...], preferred_element_type=jnp.float32)
    o_ref[...] = (out + b_ref[...]).astype(o_ref.dtype)


def pooled_linear(x_bhwc, w_pad, b_pad):
    B, H, W, C = x_bhwc.shape
    x3 = x_bhwc.reshape(B, H * W, C)
    N = w_pad.shape[1]
    vmem = pl.BlockSpec(memory_space=pltpu.MemorySpace.VMEM)
    return pl.pallas_call(
        _head_kernel,
        out_shape=jax.ShapeDtypeStruct((B, N), jnp.float32),
        in_specs=[vmem, vmem, vmem],
        out_specs=vmem,
    )(x3, w_pad, b_pad)


# --------------------------------------------------------------------------
# Plain-JAX glue: im2col + block wiring (runs inside jit)
# --------------------------------------------------------------------------

def _im2col(x, k, stride, pad):
    """x: (B,H,W,C) NHWC -> patches (B,Ho,Wo,k*k*C), K ordered (kh, kw, cin)."""
    B, H, W, C = x.shape
    if pad:
        x = jnp.pad(x, ((0, 0), (pad, pad), (pad, pad), (0, 0)))
    Ho = (H + 2 * pad - k) // stride + 1
    Wo = (W + 2 * pad - k) // stride + 1
    cols = []
    for i in range(k):
        for j in range(k):
            cols.append(x[:, i:i + stride * Ho:stride, j:j + stride * Wo:stride, :])
    patches = cols[0] if len(cols) == 1 else jnp.concatenate(cols, axis=-1)
    return patches, Ho, Wo


def conv_bn(x, wmat, shift2d, *, ksize, stride, cin, relu=True, residual=None):
    """x: (B,H,W,Cx) bf16 NHWC; only the first `cin` channels are real (the rest
    are zero lane-padding) and are sliced off before im2col.  Output has CPAD
    channels with the padded lanes exactly zero.  padding = (ksize-1)//2."""
    if x.shape[-1] != cin:
        x = x[..., :cin]
    pad = (ksize - 1) // 2
    patches, Ho, Wo = _im2col(x, ksize, stride, pad)
    B = x.shape[0]
    K = patches.shape[-1]
    x2d = patches.reshape(B * Ho * Wo, K)
    res2d = None if residual is None else residual.reshape(B * Ho * Wo, CPAD)
    out2d = fused_matmul_bn(x2d, wmat, shift2d, res2d, relu)
    return out2d.reshape(B, Ho, Wo, CPAD)


@functools.partial(jax.jit, static_argnums=2)
def resnet_forward(prep, x_nchw, meta):
    stem_cin, block_meta, num_classes = meta
    x = jnp.transpose(x_nchw, (0, 2, 3, 1)).astype(jnp.bfloat16)   # NCHW -> NHWC
    out = conv_bn(x, prep["stem"]["w"], prep["stem"]["s"],
                  ksize=3, stride=1, cin=stem_cin, relu=True)
    for bp, (in_planes, planes, stride, has_sc) in zip(prep["blocks"], block_meta):
        h = conv_bn(out, bp["c1"]["w"], bp["c1"]["s"],
                    ksize=3, stride=stride, cin=in_planes, relu=True)
        if has_sc:
            sc = conv_bn(out, bp["sc"]["w"], bp["sc"]["s"],
                         ksize=1, stride=stride, cin=in_planes, relu=False)
        else:
            sc = out
        # conv2 -> bn2 -> (+ shortcut) -> relu, all fused in one Pallas call
        out = conv_bn(h, bp["c2"]["w"], bp["c2"]["s"],
                      ksize=3, stride=1, cin=planes, relu=True, residual=sc)
    logits = pooled_linear(out, prep["head"]["w"], prep["head"]["b"])
    return logits[:, :num_classes]                    # F.avg_pool2d + view + linear


# --------------------------------------------------------------------------
# One-time (outside jit) weight prep: BN folding, padding, bf16 cast
# --------------------------------------------------------------------------

def _fold_bn(bn):
    scale = bn["gamma"] / jnp.sqrt(bn["var"] + bn["eps"])
    shift = bn["beta"] - bn["mean"] * scale
    return scale, shift


def _prep_conv(w, bn, n_pad=CPAD):
    """PyTorch (Cout,Cin,k,k) -> bf16 (k*k*Cin, n_pad) with BN scale folded in,
    plus the f32 BN shift padded to n_pad.  Padded output columns are zero."""
    Cout, Cin, k, _ = w.shape
    scale, shift = _fold_bn(bn)
    wmat = jnp.transpose(w, (2, 3, 1, 0)).reshape(k * k * Cin, Cout)  # (kh,kw,cin)
    wmat = wmat * scale[None, :]                     # fold BN scale into weights
    wmat = jnp.pad(wmat, ((0, 0), (0, n_pad - Cout)))
    shift = jnp.pad(shift, ((0, n_pad - Cout),))
    return {"w": wmat.astype(jnp.bfloat16),
            "s": shift.astype(jnp.float32).reshape(1, n_pad)}


def prepare_resnet(params, arch):
    prep = {"stem": _prep_conv(params["conv1_w"], params["bn1"]), "blocks": []}
    stem_cin = int(params["conv1_w"].shape[1])
    block_meta = []
    for blk, (stride, has_sc) in zip(params["blocks"], arch):
        in_planes = int(blk["conv1_w"].shape[1])
        planes = int(blk["conv1_w"].shape[0])
        p = {"c1": _prep_conv(blk["conv1_w"], blk["bn1"]),
             "c2": _prep_conv(blk["conv2_w"], blk["bn2"])}
        if has_sc:
            p["sc"] = _prep_conv(blk["sc_w"], blk["sc_bn"])
        prep["blocks"].append(p)
        block_meta.append((in_planes, planes, int(stride), bool(has_sc)))
    num_classes, lin_in = (int(s) for s in params["linear_w"].shape)
    w = jnp.pad(params["linear_w"].T,
                ((0, CPAD - lin_in), (0, CPAD - num_classes)))
    b = jnp.pad(params["linear_b"], ((0, CPAD - num_classes),))
    prep["head"] = {"w": w.astype(jnp.float32),
                    "b": b.astype(jnp.float32).reshape(1, CPAD)}
    meta = (stem_cin, tuple(block_meta), num_classes)
    return prep, meta


# --------------------------------------------------------------------------
# Deterministic parameter initialization (mirrors _weights_init / defaults)
# --------------------------------------------------------------------------

def _kaiming_normal(key, shape, fan_in):
    std = (2.0 / fan_in) ** 0.5
    return jax.random.normal(key, shape, dtype=jnp.float32) * std


def init_resnet_params(key, num_channels=3, num_classes=10, num_blocks=(1, 1, 1)):
    base = num_channels * 4 + 2
    c1 = int(base / 10 * num_classes)
    widths = [c1, int(base / 10 * num_classes * 2), int(base / 10 * num_classes * 4)]
    strides0 = [1, 2, 2]

    keys = iter(jax.random.split(key, 64))

    def conv_w(cout, cin, k):
        return _kaiming_normal(next(keys), (cout, cin, k, k), cin * k * k)

    def bn(c):
        return {"gamma": jnp.ones((c,), jnp.float32),
                "beta": jnp.zeros((c,), jnp.float32),
                "mean": jnp.zeros((c,), jnp.float32),
                "var": jnp.ones((c,), jnp.float32),
                "eps": 1e-5}

    params = {"conv1_w": conv_w(c1, num_channels, 3), "bn1": bn(c1)}

    in_planes = c1
    blocks, arch = [], []
    for planes, nb, s0 in zip(widths, num_blocks, strides0):
        for s in [s0] + [1] * (nb - 1):
            blk = {"conv1_w": conv_w(planes, in_planes, 3), "bn1": bn(planes),
                   "conv2_w": conv_w(planes, planes, 3), "bn2": bn(planes)}
            has_sc = (s != 1) or (in_planes != planes)
            if has_sc:
                blk["sc_w"] = conv_w(planes, in_planes, 1)
                blk["sc_bn"] = bn(planes)
            blocks.append(blk)
            arch.append((s, has_sc))
            in_planes = planes
    params["blocks"] = blocks

    lin_in = widths[-1]
    params["linear_w"] = _kaiming_normal(next(keys), (num_classes, lin_in), lin_in)
    bound = 1.0 / (lin_in ** 0.5)
    params["linear_b"] = jax.random.uniform(
        next(keys), (num_classes,), minval=-bound, maxval=bound, dtype=jnp.float32)
    return params, tuple(arch)


# --------------------------------------------------------------------------

if __name__ == "__main__":
    key = jax.random.PRNGKey(0)
    pkey, xkey = jax.random.split(key)

    num_channels, num_classes = 3, 10           # -> channel widths 14 / 28 / 56
    params, arch = init_resnet_params(pkey, num_channels=num_channels,
                                      num_classes=num_classes,
                                      num_blocks=(1, 1, 1))
    prep, meta = prepare_resnet(params, arch)   # one-time weight prep (outside jit)

    x = jax.random.normal(xkey, (2, num_channels, 16, 16), dtype=jnp.float32)

    out = resnet_forward(prep, x, meta)
    out = jax.block_until_ready(out)
    assert out.shape == (2, num_classes), out.shape
    assert bool(jnp.all(jnp.isfinite(out)))
    print("KERNEL_OK")
</pallas_src>

<mosaic_0001>
module attributes {stable_mosaic.version = 11 : i64} {
  func.func @_fused_mm_kernel(%arg0: i32, %arg1: memref<256x27xbf16, #tpu.memory_space<vmem>>, %arg2: memref<27x128xbf16, #tpu.memory_space<vmem>>, %arg3: memref<1x128xf32, #tpu.memory_space<vmem>>, %arg4: memref<256x128xbf16, #tpu.memory_space<vmem>>) attributes {dimension_semantics = [#tpu.dimension_semantics<parallel>], iteration_bounds = array<i64: 2>, scalar_prefetch = 0 : i64, scratch_operands = 0 : i64, tpu.core_type = #tpu.core_type<tc>, window_params = [{transform_indices = @transform_0, window_bounds = array<i64: 256, 27>}, {pipeline_mode = #tpu.pipeline_mode<synchronous>, transform_indices = @transform_1, window_bounds = array<i64: 27, 128>}, {pipeline_mode = #tpu.pipeline_mode<synchronous>, transform_indices = @transform_2, window_bounds = array<i64: 1, 128>}, {transform_indices = @transform_3, window_bounds = array<i64: 256, 128>}]} {
    %c0 = arith.constant 0 : index
    %c0_0 = arith.constant 0 : index
    %0 = vector.load %arg1[%c0, %c0_0] : memref<256x27xbf16, #tpu.memory_space<vmem>>, vector<256x27xbf16>
    %c0_1 = arith.constant 0 : index
    %c0_2 = arith.constant 0 : index
    %1 = vector.load %arg2[%c0_1, %c0_2] : memref<27x128xbf16, #tpu.memory_space<vmem>>, vector<27x128xbf16>
    %cst = arith.constant dense<0.000000e+00> : vector<256x128xf32>
    %2 = tpu.matmul %0, %1, %cst {dimension_numbers = #tpu.dot_dimension_numbers<[1], [0], [0], [1], [0, 0, 1, 1], [], []>} : vector<256x27xbf16>, vector<27x128xbf16>, vector<256x128xf32> -> vector<256x128xf32>
    %c0_3 = arith.constant 0 : index
    %c0_4 = arith.constant 0 : index
    %3 = vector.load %arg3[%c0_3, %c0_4] : memref<1x128xf32, #tpu.memory_space<vmem>>, vector<1x128xf32>
    %4 = vector.broadcast %3 : vector<1x128xf32> to vector<256x128xf32>
    %5 = arith.addf %2, %4 : vector<256x128xf32>
    %cst_5 = arith.constant 0.000000e+00 : f32
    %6 = vector.broadcast %cst_5 : f32 to vector<256x128xf32>
    %7 = arith.maximumf %5, %6 : vector<256x128xf32>
    %8 = arith.truncf %7 : vector<256x128xf32> to vector<256x128xbf16>
    %c0_6 = arith.constant 0 : index
    %c0_7 = arith.constant 0 : index
    %9 = vector.load %arg4[%c0_6, %c0_7] : memref<256x128xbf16, #tpu.memory_space<vmem>>, vector<256x128xbf16>
    tpu.vector_store %arg4[%c0_6, %c0_7], %8 {strides = array<i32>} : memref<256x128xbf16, #tpu.memory_space<vmem>>, vector<256x128xbf16>,
    return
  }
  func.func @transform_0(%arg0: i32) -> (i32, i32) {
    %c0_i32 = arith.constant 0 : i32
    %c0_i32_0 = arith.constant 0 : i32
    return %arg0, %c0_i32 : i32, i32
  }
  func.func @transform_1(%arg0: i32) -> (i32, i32) {
    %c0_i32 = arith.constant 0 : i32
    %c0_i32_0 = arith.constant 0 : i32
    %c0_i32_1 = arith.constant 0 : i32
    return %c0_i32, %c0_i32_0 : i32, i32
  }
  func.func @transform_2(%arg0: i32) -> (i32, i32) {
    %c0_i32 = arith.constant 0 : i32
    %c0_i32_0 = arith.constant 0 : i32
    %c0_i32_1 = arith.constant 0 : i32
    return %c0_i32, %c0_i32_0 : i32, i32
  }
  func.func @transform_3(%arg0: i32) -> (i32, i32) {
    %c0_i32 = arith.constant 0 : i32
    %c0_i32_0 = arith.constant 0 : i32
    return %arg0, %c0_i32 : i32, i32
  }
}

module attributes {stable_mosaic.version = 11 : i64} {
  func.func @_fused_mm_kernel(%arg0: i32, %arg1: memref<256x126xbf16, #tpu.memory_space<vmem>>, %arg2: memref<126x128xbf16, #tpu.memory_space<vmem>>, %arg3: memref<1x128xf32, #tpu.memory_space<vmem>>, %arg4: memref<256x128xbf16, #tpu.memory_space<vmem>>) attributes {dimension_semantics = [#tpu.dimension_semantics<parallel>], iteration_bounds = array<i64: 2>, scalar_prefetch = 0 : i64, scratch_operands = 0 : i64, tpu.core_type = #tpu.core_type<tc>, window_params = [{transform_indices = @transform_0, window_bounds = array<i64: 256, 126>}, {pipeline_mode = #tpu.pipeline_mode<synchronous>, transform_indices = @transform_1, window_bounds = array<i64: 126, 128>}, {pipeline_mode = #tpu.pipeline_mode<synchronous>, transform_indices = @transform_2, window_bounds = array<i64: 1, 128>}, {transform_indices = @transform_3, window_bounds = array<i64: 256, 128>}]} {
    %c0 = arith.constant 0 : index
    %c0_0 = arith.constant 0 : index
    %0 = vector.load %arg1[%c0, %c0_0] : memref<256x126xbf16, #tpu.memory_space<vmem>>, vector<256x126xbf16>
    %c0_1 = arith.constant 0 : index
    %c0_2 = arith.constant 0 : index
    %1 = vector.load %arg2[%c0_1, %c0_2] : memref<126x128xbf16, #tpu.memory_space<vmem>>, vector<126x128xbf16>
    %cst = arith.constant dense<0.000000e+00> : vector<256x128xf32>
    %2 = tpu.matmul %0, %1, %cst {dimension_numbers = #tpu.dot_dimension_numbers<[1], [0], [0], [1], [0, 0, 1, 1], [], []>} : vector<256x126xbf16>, vector<126x128xbf16>, vector<256x128xf32> -> vector<256x128xf32>
    %c0_3 = arith.constant 0 : index
    %c0_4 = arith.constant 0 : index
    %3 = vector.load %arg3[%c0_3, %c0_4] : memref<1x128xf32, #tpu.memory_space<vmem>>, vector<1x128xf32>
    %4 = vector.broadcast %3 : vector<1x128xf32> to vector<256x128xf32>
    %5 = arith.addf %2, %4 : vector<256x128xf32>
    %cst_5 = arith.constant 0.000000e+00 : f32
    %6 = vector.broadcast %cst_5 : f32 to vector<256x128xf32>
    %7 = arith.maximumf %5, %6 : vector<256x128xf32>
    %8 = arith.truncf %7 : vector<256x128xf32> to vector<256x128xbf16>
    %c0_6 = arith.constant 0 : index
    %c0_7 = arith.constant 0 : index
    %9 = vector.load %arg4[%c0_6, %c0_7] : memref<256x128xbf16, #tpu.memory_space<vmem>>, vector<256x128xbf16>
    tpu.vector_store %arg4[%c0_6, %c0_7], %8 {strides = array<i32>} : memref<256x128xbf16, #tpu.memory_space<vmem>>, vector<256x128xbf16>,
    return
  }
  func.func @transform_0(%arg0: i32) -> (i32, i32) {
    %c0_i32 = arith.constant 0 : i32
    %c0_i32_0 = arith.constant 0 : i32
    return %arg0, %c0_i32 : i32, i32
  }
  func.func @transform_1(%arg0: i32) -> (i32, i32) {
    %c0_i32 = arith.constant 0 : i32
    %c0_i32_0 = arith.constant 0 : i32
    %c0_i32_1 = arith.constant 0 : i32
    return %c0_i32, %c0_i32_0 : i32, i32
  }
  func.func @transform_2(%arg0: i32) -> (i32, i32) {
    %c0_i32 = arith.constant 0 : i32
    %c0_i32_0 = arith.constant 0 : i32
    %c0_i32_1 = arith.constant 0 : i32
    return %c0_i32, %c0_i32_0 : i32, i32
  }
  func.func @transform_3(%arg0: i32) -> (i32, i32) {
    %c0_i32 = arith.constant 0 : i32
    %c0_i32_0 = arith.constant 0 : i32
    return %arg0, %c0_i32 : i32, i32
  }
}

module attributes {stable_mosaic.version = 11 : i64} {
  func.func @_fused_mm_kernel(%arg0: i32, %arg1: memref<256x126xbf16, #tpu.memory_space<vmem>>, %arg2: memref<126x128xbf16, #tpu.memory_space<vmem>>, %arg3: memref<1x128xf32, #tpu.memory_space<vmem>>, %arg4: memref<256x128xbf16, #tpu.memory_space<vmem>>, %arg5: memref<256x128xbf16, #tpu.memory_space<vmem>>) attributes {dimension_semantics = [#tpu.dimension_semantics<parallel>], iteration_bounds = array<i64: 2>, scalar_prefetch = 0 : i64, scratch_operands = 0 : i64, tpu.core_type = #tpu.core_type<tc>, window_params = [{transform_indices = @transform_0, window_bounds = array<i64: 256, 126>}, {pipeline_mode = #tpu.pipeline_mode<synchronous>, transform_indices = @transform_1, window_bounds = array<i64: 126, 128>}, {pipeline_mode = #tpu.pipeline_mode<synchronous>, transform_indices = @transform_2, window_bounds = array<i64: 1, 128>}, {transform_indices = @transform_3, window_bounds = array<i64: 256, 128>}, {transform_indices = @transform_4, window_bounds = array<i64: 256, 128>}]} {
    %c0 = arith.constant 0 : index
    %c0_0 = arith.constant 0 : index
    %0 = vector.load %arg1[%c0, %c0_0] : memref<256x126xbf16, #tpu.memory_space<vmem>>, vector<256x126xbf16>
    %c0_1 = arith.constant 0 : index
    %c0_2 = arith.constant 0 : index
    %1 = vector.load %arg2[%c0_1, %c0_2] : memref<126x128xbf16, #tpu.memory_space<vmem>>, vector<126x128xbf16>
    %cst = arith.constant dense<0.000000e+00> : vector<256x128xf32>
    %2 = tpu.matmul %0, %1, %cst {dimension_numbers = #tpu.dot_dimension_numbers<[1], [0], [0], [1], [0, 0, 1, 1], [], []>} : vector<256x126xbf16>, vector<126x128xbf16>, vector<256x128xf32> -> vector<256x128xf32>
    %c0_3 = arith.constant 0 : index
    %c0_4 = arith.constant 0 : index
    %3 = vector.load %arg3[%c0_3, %c0_4] : memref<1x128xf32, #tpu.memory_space<vmem>>, vector<1x128xf32>
    %4 = vector.broadcast %3 : vector<1x128xf32> to vector<256x128xf32>
    %5 = arith.addf %2, %4 : vector<256x128xf32>
    %c0_5 = arith.constant 0 : index
    %c0_6 = arith.constant 0 : index
    %6 = vector.load %arg4[%c0_5, %c0_6] : memref<256x128xbf16, #tpu.memory_space<vmem>>, vector<256x128xbf16>
    %7 = arith.extf %6 : vector<256x128xbf16> to vector<256x128xf32>
    %8 = arith.addf %5, %7 : vector<256x128xf32>
    %cst_7 = arith.constant 0.000000e+00 : f32
    %9 = vector.broadcast %cst_7 : f32 to vector<256x128xf32>
    %10 = arith.maximumf %8, %9 : vector<256x128xf32>
    %11 = arith.truncf %10 : vector<256x128xf32> to vector<256x128xbf16>
    %c0_8 = arith.constant 0 : index
    %c0_9 = arith.constant 0 : index
    %12 = vector.load %arg5[%c0_8, %c0_9] : memref<256x128xbf16, #tpu.memory_space<vmem>>, vector<256x128xbf16>
    tpu.vector_store %arg5[%c0_8, %c0_9], %11 {strides = array<i32>} : memref<256x128xbf16, #tpu.memory_space<vmem>>, vector<256x128xbf16>,
    return
  }
  func.func @transform_0(%arg0: i32) -> (i32, i32) {
    %c0_i32 = arith.constant 0 : i32
    %c0_i32_0 = arith.constant 0 : i32
    return %arg0, %c0_i32 : i32, i32
  }
  func.func @transform_1(%arg0: i32) -> (i32, i32) {
    %c0_i32 = arith.constant 0 : i32
    %c0_i32_0 = arith.constant 0 : i32
    %c0_i32_1 = arith.constant 0 : i32
    return %c0_i32, %c0_i32_0 : i32, i32
  }
  func.func @transform_2(%arg0: i32) -> (i32, i32) {
    %c0_i32 = arith.constant 0 : i32
    %c0_i32_0 = arith.constant 0 : i32
    %c0_i32_1 = arith.constant 0 : i32
    return %c0_i32, %c0_i32_0 : i32, i32
  }
  func.func @transform_3(%arg0: i32) -> (i32, i32) {
    %c0_i32 = arith.constant 0 : i32
    %c0_i32_0 = arith.constant 0 : i32
    return %arg0, %c0_i32 : i32, i32
  }
  func.func @transform_4(%arg0: i32) -> (i32, i32) {
    %c0_i32 = arith.constant 0 : i32
    %c0_i32_0 = arith.constant 0 : i32
    return %arg0, %c0_i32 : i32, i32
  }
}

module attributes {stable_mosaic.version = 11 : i64} {
  func.func @_fused_mm_kernel(%arg0: i32, %arg1: memref<128x14xbf16, #tpu.memory_space<vmem>>, %arg2: memref<14x128xbf16, #tpu.memory_space<vmem>>, %arg3: memref<1x128xf32, #tpu.memory_space<vmem>>, %arg4: memref<128x128xbf16, #tpu.memory_space<vmem>>) attributes {dimension_semantics = [#tpu.dimension_semantics<parallel>], iteration_bounds = array<i64: 1>, scalar_prefetch = 0 : i64, scratch_operands = 0 : i64, tpu.core_type = #tpu.core_type<tc>, window_params = [{transform_indices = @transform_0, window_bounds = array<i64: 128, 14>}, {pipeline_mode = #tpu.pipeline_mode<synchronous>, transform_indices = @transform_1, window_bounds = array<i64: 14, 128>}, {pipeline_mode = #tpu.pipeline_mode<synchronous>, transform_indices = @transform_2, window_bounds = array<i64: 1, 128>}, {transform_indices = @transform_3, window_bounds = array<i64: 128, 128>}]} {
    %c0 = arith.constant 0 : index
    %c0_0 = arith.constant 0 : index
    %0 = vector.load %arg1[%c0, %c0_0] : memref<128x14xbf16, #tpu.memory_space<vmem>>, vector<128x14xbf16>
    %c0_1 = arith.constant 0 : index
    %c0_2 = arith.constant 0 : index
    %1 = vector.load %arg2[%c0_1, %c0_2] : memref<14x128xbf16, #tpu.memory_space<vmem>>, vector<14x128xbf16>
    %cst = arith.constant dense<0.000000e+00> : vector<128x128xf32>
    %2 = tpu.matmul %0, %1, %cst {dimension_numbers = #tpu.dot_dimension_numbers<[1], [0], [0], [1], [0, 0, 1, 1], [], []>} : vector<128x14xbf16>, vector<14x128xbf16>, vector<128x128xf32> -> vector<128x128xf32>
    %c0_3 = arith.constant 0 : index
    %c0_4 = arith.constant 0 : index
    %3 = vector.load %arg3[%c0_3, %c0_4] : memref<1x128xf32, #tpu.memory_space<vmem>>, vector<1x128xf32>
    %4 = vector.broadcast %3 : vector<1x128xf32> to vector<128x128xf32>
    %5 = arith.addf %2, %4 : vector<128x128xf32>
    %6 = arith.truncf %5 : vector<128x128xf32> to vector<128x128xbf16>
    %c0_5 = arith.constant 0 : index
    %c0_6 = arith.constant 0 : index
    %7 = vector.load %arg4[%c0_5, %c0_6] : memref<128x128xbf16, #tpu.memory_space<vmem>>, vector<128x128xbf16>
    tpu.vector_store %arg4[%c0_5, %c0_6], %6 {strides = array<i32>} : memref<128x128xbf16, #tpu.memory_space<vmem>>, vector<128x128xbf16>,
    return
  }
  func.func @transform_0(%arg0: i32) -> (i32, i32) {
    %c0_i32 = arith.constant 0 : i32
    %c0_i32_0 = arith.constant 0 : i32
    return %arg0, %c0_i32 : i32, i32
  }
  func.func @transform_1(%arg0: i32) -> (i32, i32) {
    %c0_i32 = arith.constant 0 : i32
    %c0_i32_0 = arith.constant 0 : i32
    %c0_i32_1 = arith.constant 0 : i32
    return %c0_i32, %c0_i32_0 : i32, i32
  }
  func.func @transform_2(%arg0: i32) -> (i32, i32) {
    %c0_i32 = arith.constant 0 : i32
    %c0_i32_0 = arith.constant 0 : i32
    %c0_i32_1 = arith.constant 0 : i32
    return %c0_i32, %c0_i32_0 : i32, i32
  }
  func.func @transform_3(%arg0: i32) -> (i32, i32) {
    %c0_i32 = arith.constant 0 : i32
    %c0_i32_0 = arith.constant 0 : i32
    return %arg0, %c0_i32 : i32, i32
  }
}

module attributes {stable_mosaic.version = 11 : i64} {
  func.func @_fused_mm_kernel(%arg0: i32, %arg1: memref<128x126xbf16, #tpu.memory_space<vmem>>, %arg2: memref<126x128xbf16, #tpu.memory_space<vmem>>, %arg3: memref<1x128xf32, #tpu.memory_space<vmem>>, %arg4: memref<128x128xbf16, #tpu.memory_space<vmem>>) attributes {dimension_semantics = [#tpu.dimension_semantics<parallel>], iteration_bounds = array<i64: 1>, scalar_prefetch = 0 : i64, scratch_operands = 0 : i64, tpu.core_type = #tpu.core_type<tc>, window_params = [{transform_indices = @transform_0, window_bounds = array<i64: 128, 126>}, {pipeline_mode = #tpu.pipeline_mode<synchronous>, transform_indices = @transform_1, window_bounds = array<i64: 126, 128>}, {pipeline_mode = #tpu.pipeline_mode<synchronous>, transform_indices = @transform_2, window_bounds = array<i64: 1, 128>}, {transform_indices = @transform_3, window_bounds = array<i64: 128, 128>}]} {
    %c0 = arith.constant 0 : index
    %c0_0 = arith.constant 0 : index
    %0 = vector.load %arg1[%c0, %c0_0] : memref<128x126xbf16, #tpu.memory_space<vmem>>, vector<128x126xbf16>
    %c0_1 = arith.constant 0 : index
    %c0_2 = arith.constant 0 : index
    %1 = vector.load %arg2[%c0_1, %c0_2] : memref<126x128xbf16, #tpu.memory_space<vmem>>, vector<126x128xbf16>
    %cst = arith.constant dense<0.000000e+00> : vector<128x128xf32>
    %2 = tpu.matmul %0, %1, %cst {dimension_numbers = #tpu.dot_dimension_numbers<[1], [0], [0], [1], [0, 0, 1, 1], [], []>} : vector<128x126xbf16>, vector<126x128xbf16>, vector<128x128xf32> -> vector<128x128xf32>
    %c0_3 = arith.constant 0 : index
    %c0_4 = arith.constant 0 : index
    %3 = vector.load %arg3[%c0_3, %c0_4] : memref<1x128xf32, #tpu.memory_space<vmem>>, vector<1x128xf32>
    %4 = vector.broadcast %3 : vector<1x128xf32> to vector<128x128xf32>
    %5 = arith.addf %2, %4 : vector<128x128xf32>
    %cst_5 = arith.constant 0.000000e+00 : f32
    %6 = vector.broadcast %cst_5 : f32 to vector<128x128xf32>
    %7 = arith.maximumf %5, %6 : vector<128x128xf32>
    %8 = arith.truncf %7 : vector<128x128xf32> to vector<128x128xbf16>
    %c0_6 = arith.constant 0 : index
    %c0_7 = arith.constant 0 : index
    %9 = vector.load %arg4[%c0_6, %c0_7] : memref<128x128xbf16, #tpu.memory_space<vmem>>, vector<128x128xbf16>
    tpu.vector_store %arg4[%c0_6, %c0_7], %8 {strides = array<i32>} : memref<128x128xbf16, #tpu.memory_space<vmem>>, vector<128x128xbf16>,
    return
  }
  func.func @transform_0(%arg0: i32) -> (i32, i32) {
    %c0_i32 = arith.constant 0 : i32
    %c0_i32_0 = arith.constant 0 : i32
    return %arg0, %c0_i32 : i32, i32
  }
  func.func @transform_1(%arg0: i32) -> (i32, i32) {
    %c0_i32 = arith.constant 0 : i32
    %c0_i32_0 = arith.constant 0 : i32
    %c0_i32_1 = arith.constant 0 : i32
    return %c0_i32, %c0_i32_0 : i32, i32
  }
  func.func @transform_2(%arg0: i32) -> (i32, i32) {
    %c0_i32 = arith.constant 0 : i32
    %c0_i32_0 = arith.constant 0 : i32
    %c0_i32_1 = arith.constant 0 : i32
    return %c0_i32, %c0_i32_0 : i32, i32
  }
  func.func @transform_3(%arg0: i32) -> (i32, i32) {
    %c0_i32 = arith.constant 0 : i32
    %c0_i32_0 = arith.constant 0 : i32
    return %arg0, %c0_i32 : i32, i32
  }
}

module attributes {stable_mosaic.version = 11 : i64} {
  func.func @_fused_mm_kernel(%arg0: i32, %arg1: memref<128x252xbf16, #tpu.memory_space<vmem>>, %arg2: memref<252x128xbf16, #tpu.memory_space<vmem>>, %arg3: memref<1x128xf32, #tpu.memory_space<vmem>>, %arg4: memref<128x128xbf16, #tpu.memory_space<vmem>>, %arg5: memref<128x128xbf16, #tpu.memory_space<vmem>>) attributes {dimension_semantics = [#tpu.dimension_semantics<parallel>], iteration_bounds = array<i64: 1>, scalar_prefetch = 0 : i64, scratch_operands = 0 : i64, tpu.core_type = #tpu.core_type<tc>, window_params = [{transform_indices = @transform_0, window_bounds = array<i64: 128, 252>}, {pipeline_mode = #tpu.pipeline_mode<synchronous>, transform_indices = @transform_1, window_bounds = array<i64: 252, 128>}, {pipeline_mode = #tpu.pipeline_mode<synchronous>, transform_indices = @transform_2, window_bounds = array<i64: 1, 128>}, {transform_indices = @transform_3, window_bounds = array<i64: 128, 128>}, {transform_indices = @transform_4, window_bounds = array<i64: 128, 128>}]} {
    %c0 = arith.constant 0 : index
    %c0_0 = arith.constant 0 : index
    %0 = vector.load %arg1[%c0, %c0_0] : memref<128x252xbf16, #tpu.memory_space<vmem>>, vector<128x252xbf16>
    %c0_1 = arith.constant 0 : index
    %c0_2 = arith.constant 0 : index
    %1 = vector.load %arg2[%c0_1, %c0_2] : memref<252x128xbf16, #tpu.memory_space<vmem>>, vector<252x128xbf16>
    %cst = arith.constant dense<0.000000e+00> : vector<128x128xf32>
    %2 = tpu.matmul %0, %1, %cst {dimension_numbers = #tpu.dot_dimension_numbers<[1], [0], [0], [1], [0, 0, 1, 1], [], []>} : vector<128x252xbf16>, vector<252x128xbf16>, vector<128x128xf32> -> vector<128x128xf32>
    %c0_3 = arith.constant 0 : index
    %c0_4 = arith.constant 0 : index
    %3 = vector.load %arg3[%c0_3, %c0_4] : memref<1x128xf32, #tpu.memory_space<vmem>>, vector<1x128xf32>
    %4 = vector.broadcast %3 : vector<1x128xf32> to vector<128x128xf32>
    %5 = arith.addf %2, %4 : vector<128x128xf32>
    %c0_5 = arith.constant 0 : index
    %c0_6 = arith.constant 0 : index
    %6 = vector.load %arg4[%c0_5, %c0_6] : memref<128x128xbf16, #tpu.memory_space<vmem>>, vector<128x128xbf16>
    %7 = arith.extf %6 : vector<128x128xbf16> to vector<128x128xf32>
    %8 = arith.addf %5, %7 : vector<128x128xf32>
    %cst_7 = arith.constant 0.000000e+00 : f32
    %9 = vector.broadcast %cst_7 : f32 to vector<128x128xf32>
    %10 = arith.maximumf %8, %9 : vector<128x128xf32>
    %11 = arith.truncf %10 : vector<128x128xf32> to vector<128x128xbf16>
    %c0_8 = arith.constant 0 : index
    %c0_9 = arith.constant 0 : index
    %12 = vector.load %arg5[%c0_8, %c0_9] : memref<128x128xbf16, #tpu.memory_space<vmem>>, vector<128x128xbf16>
    tpu.vector_store %arg5[%c0_8, %c0_9], %11 {strides = array<i32>} : memref<128x128xbf16, #tpu.memory_space<vmem>>, vector<128x128xbf16>,
    return
  }
  func.func @transform_0(%arg0: i32) -> (i32, i32) {
    %c0_i32 = arith.constant 0 : i32
    %c0_i32_0 = arith.constant 0 : i32
    return %arg0, %c0_i32 : i32, i32
  }
  func.func @transform_1(%arg0: i32) -> (i32, i32) {
    %c0_i32 = arith.constant 0 : i32
    %c0_i32_0 = arith.constant 0 : i32
    %c0_i32_1 = arith.constant 0 : i32
    return %c0_i32, %c0_i32_0 : i32, i32
  }
  func.func @transform_2(%arg0: i32) -> (i32, i32) {
    %c0_i32 = arith.constant 0 : i32
    %c0_i32_0 = arith.constant 0 : i32
    %c0_i32_1 = arith.constant 0 : i32
    return %c0_i32, %c0_i32_0 : i32, i32
  }
  func.func @transform_3(%arg0: i32) -> (i32, i32) {
    %c0_i32 = arith.constant 0 : i32
    %c0_i32_0 = arith.constant 0 : i32
    return %arg0, %c0_i32 : i32, i32
  }
  func.func @transform_4(%arg0: i32) -> (i32, i32) {
    %c0_i32 = arith.constant 0 : i32
    %c0_i32_0 = arith.constant 0 : i32
    return %arg0, %c0_i32 : i32, i32
  }
}

module attributes {stable_mosaic.version = 11 : i64} {
  func.func @_fused_mm_kernel(%arg0: i32, %arg1: memref<32x28xbf16, #tpu.memory_space<vmem>>, %arg2: memref<28x128xbf16, #tpu.memory_space<vmem>>, %arg3: memref<1x128xf32, #tpu.memory_space<vmem>>, %arg4: memref<32x128xbf16, #tpu.memory_space<vmem>>) attributes {dimension_semantics = [#tpu.dimension_semantics<parallel>], iteration_bounds = array<i64: 1>, scalar_prefetch = 0 : i64, scratch_operands = 0 : i64, tpu.core_type = #tpu.core_type<tc>, window_params = [{transform_indices = @transform_0, window_bounds = array<i64: 32, 28>}, {pipeline_mode = #tpu.pipeline_mode<synchronous>, transform_indices = @transform_1, window_bounds = array<i64: 28, 128>}, {pipeline_mode = #tpu.pipeline_mode<synchronous>, transform_indices = @transform_2, window_bounds = array<i64: 1, 128>}, {transform_indices = @transform_3, window_bounds = array<i64: 32, 128>}]} {
    %c0 = arith.constant 0 : index
    %c0_0 = arith.constant 0 : index
    %0 = vector.load %arg1[%c0, %c0_0] : memref<32x28xbf16, #tpu.memory_space<vmem>>, vector<32x28xbf16>
    %c0_1 = arith.constant 0 : index
    %c0_2 = arith.constant 0 : index
    %1 = vector.load %arg2[%c0_1, %c0_2] : memref<28x128xbf16, #tpu.memory_space<vmem>>, vector<28x128xbf16>
    %cst = arith.constant dense<0.000000e+00> : vector<32x128xf32>
    %2 = tpu.matmul %0, %1, %cst {dimension_numbers = #tpu.dot_dimension_numbers<[1], [0], [0], [1], [0, 0, 1, 1], [], []>} : vector<32x28xbf16>, vector<28x128xbf16>, vector<32x128xf32> -> vector<32x128xf32>
    %c0_3 = arith.constant 0 : index
    %c0_4 = arith.constant 0 : index
    %3 = vector.load %arg3[%c0_3, %c0_4] : memref<1x128xf32, #tpu.memory_space<vmem>>, vector<1x128xf32>
    %4 = vector.broadcast %3 : vector<1x128xf32> to vector<32x128xf32>
    %5 = arith.addf %2, %4 : vector<32x128xf32>
    %6 = arith.truncf %5 : vector<32x128xf32> to vector<32x128xbf16>
    %c0_5 = arith.constant 0 : index
    %c0_6 = arith.constant 0 : index
    %7 = vector.load %arg4[%c0_5, %c0_6] : memref<32x128xbf16, #tpu.memory_space<vmem>>, vector<32x128xbf16>
    tpu.vector_store %arg4[%c0_5, %c0_6], %6 {strides = array<i32>} : memref<32x128xbf16, #tpu.memory_space<vmem>>, vector<32x128xbf16>,
    return
  }
  func.func @transform_0(%arg0: i32) -> (i32, i32) {
    %c0_i32 = arith.constant 0 : i32
    %c0_i32_0 = arith.constant 0 : i32
    return %arg0, %c0_i32 : i32, i32
  }
  func.func @transform_1(%arg0: i32) -> (i32, i32) {
    %c0_i32 = arith.constant 0 : i32
    %c0_i32_0 = arith.constant 0 : i32
    %c0_i32_1 = arith.constant 0 : i32
    return %c0_i32, %c0_i32_0 : i32, i32
  }
  func.func @transform_2(%arg0: i32) -> (i32, i32) {
    %c0_i32 = arith.constant 0 : i32
    %c0_i32_0 = arith.constant 0 : i32
    %c0_i32_1 = arith.constant 0 : i32
    return %c0_i32, %c0_i32_0 : i32, i32
  }
  func.func @transform_3(%arg0: i32) -> (i32, i32) {
    %c0_i32 = arith.constant 0 : i32
    %c0_i32_0 = arith.constant 0 : i32
    return %arg0, %c0_i32 : i32, i32
  }
}

module attributes {stable_mosaic.version = 11 : i64} {
  func.func @_fused_mm_kernel(%arg0: i32, %arg1: memref<32x252xbf16, #tpu.memory_space<vmem>>, %arg2: memref<252x128xbf16, #tpu.memory_space<vmem>>, %arg3: memref<1x128xf32, #tpu.memory_space<vmem>>, %arg4: memref<32x128xbf16, #tpu.memory_space<vmem>>) attributes {dimension_semantics = [#tpu.dimension_semantics<parallel>], iteration_bounds = array<i64: 1>, scalar_prefetch = 0 : i64, scratch_operands = 0 : i64, tpu.core_type = #tpu.core_type<tc>, window_params = [{transform_indices = @transform_0, window_bounds = array<i64: 32, 252>}, {pipeline_mode = #tpu.pipeline_mode<synchronous>, transform_indices = @transform_1, window_bounds = array<i64: 252, 128>}, {pipeline_mode = #tpu.pipeline_mode<synchronous>, transform_indices = @transform_2, window_bounds = array<i64: 1, 128>}, {transform_indices = @transform_3, window_bounds = array<i64: 32, 128>}]} {
    %c0 = arith.constant 0 : index
    %c0_0 = arith.constant 0 : index
    %0 = vector.load %arg1[%c0, %c0_0] : memref<32x252xbf16, #tpu.memory_space<vmem>>, vector<32x252xbf16>
    %c0_1 = arith.constant 0 : index
    %c0_2 = arith.constant 0 : index
    %1 = vector.load %arg2[%c0_1, %c0_2] : memref<252x128xbf16, #tpu.memory_space<vmem>>, vector<252x128xbf16>
    %cst = arith.constant dense<0.000000e+00> : vector<32x128xf32>
    %2 = tpu.matmul %0, %1, %cst {dimension_numbers = #tpu.dot_dimension_numbers<[1], [0], [0], [1], [0, 0, 1, 1], [], []>} : vector<32x252xbf16>, vector<252x128xbf16>, vector<32x128xf32> -> vector<32x128xf32>
    %c0_3 = arith.constant 0 : index
    %c0_4 = arith.constant 0 : index
    %3 = vector.load %arg3[%c0_3, %c0_4] : memref<1x128xf32, #tpu.memory_space<vmem>>, vector<1x128xf32>
    %4 = vector.broadcast %3 : vector<1x128xf32> to vector<32x128xf32>
    %5 = arith.addf %2, %4 : vector<32x128xf32>
    %cst_5 = arith.constant 0.000000e+00 : f32
    %6 = vector.broadcast %cst_5 : f32 to vector<32x128xf32>
    %7 = arith.maximumf %5, %6 : vector<32x128xf32>
    %8 = arith.truncf %7 : vector<32x128xf32> to vector<32x128xbf16>
    %c0_6 = arith.constant 0 : index
    %c0_7 = arith.constant 0 : index
    %9 = vector.load %arg4[%c0_6, %c0_7] : memref<32x128xbf16, #tpu.memory_space<vmem>>, vector<32x128xbf16>
    tpu.vector_store %arg4[%c0_6, %c0_7], %8 {strides = array<i32>} : memref<32x128xbf16, #tpu.memory_space<vmem>>, vector<32x128xbf16>,
    return
  }
  func.func @transform_0(%arg0: i32) -> (i32, i32) {
    %c0_i32 = arith.constant 0 : i32
    %c0_i32_0 = arith.constant 0 : i32
    return %arg0, %c0_i32 : i32, i32
  }
  func.func @transform_1(%arg0: i32) -> (i32, i32) {
    %c0_i32 = arith.constant 0 : i32
    %c0_i32_0 = arith.constant 0 : i32
    %c0_i32_1 = arith.constant 0 : i32
    return %c0_i32, %c0_i32_0 : i32, i32
  }
  func.func @transform_2(%arg0: i32) -> (i32, i32) {
    %c0_i32 = arith.constant 0 : i32
    %c0_i32_0 = arith.constant 0 : i32
    %c0_i32_1 = arith.constant 0 : i32
    return %c0_i32, %c0_i32_0 : i32, i32
  }
  func.func @transform_3(%arg0: i32) -> (i32, i32) {
    %c0_i32 = arith.constant 0 : i32
    %c0_i32_0 = arith.constant 0 : i32
    return %arg0, %c0_i32 : i32, i32
  }
}

module attributes {stable_mosaic.version = 11 : i64} {
  func.func @_head_kernel(%arg0: memref<2x16x128xbf16, #tpu.memory_space<vmem>>, %arg1: memref<128x128xf32, #tpu.memory_space<vmem>>, %arg2: memref<1x128xf32, #tpu.memory_space<vmem>>, %arg3: memref<2x128xf32, #tpu.memory_space<vmem>>) attributes {dimension_semantics = [], scalar_prefetch = 0 : i64, scratch_operands = 0 : i64, tpu.core_type = #tpu.core_type<tc>} {
    %c0 = arith.constant 0 : index
    %c0_0 = arith.constant 0 : index
    %c0_1 = arith.constant 0 : index
    %0 = vector.load %arg0[%c0, %c0_0, %c0_1] : memref<2x16x128xbf16, #tpu.memory_space<vmem>>, vector<2x16x128xbf16>
    %1 = arith.extf %0 : vector<2x16x128xbf16> to vector<2x16x128xf32>
    %cst = arith.constant dense<0.000000e+00> : vector<2x128xf32>
    %2 = vector.multi_reduction <add>, %1, %cst [1] : vector<2x16x128xf32> to vector<2x128xf32>
    %cst_2 = arith.constant 1.600000e+01 : f32
    %3 = vector.broadcast %cst_2 : f32 to vector<2x128xf32>
    %4 = arith.divf %2, %3 : vector<2x128xf32>
    %c0_3 = arith.constant 0 : index
    %c0_4 = arith.constant 0 : index
    %5 = vector.load %arg1[%c0_3, %c0_4] : memref<128x128xf32, #tpu.memory_space<vmem>>, vector<128x128xf32>
    %cst_5 = arith.constant dense<0.000000e+00> : vector<2x128xf32>
    %6 = tpu.matmul %4, %5, %cst_5 {dimension_numbers = #tpu.dot_dimension_numbers<[1], [0], [0], [1], [0, 0, 1, 1], [], []>} : vector<2x128xf32>, vector<128x128xf32>, vector<2x128xf32> -> vector<2x128xf32>
    %c0_6 = arith.constant 0 : index
    %c0_7 = arith.constant 0 : index
    %7 = vector.load %arg2[%c0_6, %c0_7] : memref<1x128xf32, #tpu.memory_space<vmem>>, vector<1x128xf32>
    %8 = vector.broadcast %7 : vector<1x128xf32> to vector<2x128xf32>
    %9 = arith.addf %6, %8 : vector<2x128xf32>
    %c0_8 = arith.constant 0 : index
    %c0_9 = arith.constant 0 : index
    %10 = vector.load %arg3[%c0_8, %c0_9] : memref<2x128xf32, #tpu.memory_space<vmem>>, vector<2x128xf32>
    tpu.vector_store %arg3[%c0_8, %c0_9], %9 {strides = array<i32>} : memref<2x128xf32, #tpu.memory_space<vmem>>, vector<2x128xf32>,
    return
  }
}

module attributes {stable_mosaic.version = 11 : i64} {
  func.func @_fused_mm_kernel(%arg0: i32, %arg1: memref<32x504xbf16, #tpu.memory_space<vmem>>, %arg2: memref<504x128xbf16, #tpu.memory_space<vmem>>, %arg3: memref<1x128xf32, #tpu.memory_space<vmem>>, %arg4: memref<32x128xbf16, #tpu.memory_space<vmem>>, %arg5: memref<32x128xbf16, #tpu.memory_space<vmem>>) attributes {dimension_semantics = [#tpu.dimension_semantics<parallel>], iteration_bounds = array<i64: 1>, scalar_prefetch = 0 : i64, scratch_operands = 0 : i64, tpu.core_type = #tpu.core_type<tc>, window_params = [{transform_indices = @transform_0, window_bounds = array<i64: 32, 504>}, {pipeline_mode = #tpu.pipeline_mode<synchronous>, transform_indices = @transform_1, window_bounds = array<i64: 504, 128>}, {pipeline_mode = #tpu.pipeline_mode<synchronous>, transform_indices = @transform_2, window_bounds = array<i64: 1, 128>}, {transform_indices = @transform_3, window_bounds = array<i64: 32, 128>}, {transform_indices = @transform_4, window_bounds = array<i64: 32, 128>}]} {
    %c0 = arith.constant 0 : index
    %c0_0 = arith.constant 0 : index
    %0 = vector.load %arg1[%c0, %c0_0] : memref<32x504xbf16, #tpu.memory_space<vmem>>, vector<32x504xbf16>
    %c0_1 = arith.constant 0 : index
    %c0_2 = arith.constant 0 : index
    %1 = vector.load %arg2[%c0_1, %c0_2] : memref<504x128xbf16, #tpu.memory_space<vmem>>, vector<504x128xbf16>
    %cst = arith.constant dense<0.000000e+00> : vector<32x128xf32>
    %2 = tpu.matmul %0, %1, %cst {dimension_numbers = #tpu.dot_dimension_numbers<[1], [0], [0], [1], [0, 0, 1, 1], [], []>} : vector<32x504xbf16>, vector<504x128xbf16>, vector<32x128xf32> -> vector<32x128xf32>
    %c0_3 = arith.constant 0 : index
    %c0_4 = arith.constant 0 : index
    %3 = vector.load %arg3[%c0_3, %c0_4] : memref<1x128xf32, #tpu.memory_space<vmem>>, vector<1x128xf32>
    %4 = vector.broadcast %3 : vector<1x128xf32> to vector<32x128xf32>
    %5 = arith.addf %2, %4 : vector<32x128xf32>
    %c0_5 = arith.constant 0 : index
    %c0_6 = arith.constant 0 : index
    %6 = vector.load %arg4[%c0_5, %c0_6] : memref<32x128xbf16, #tpu.memory_space<vmem>>, vector<32x128xbf16>
    %7 = arith.extf %6 : vector<32x128xbf16> to vector<32x128xf32>
    %8 = arith.addf %5, %7 : vector<32x128xf32>
    %cst_7 = arith.constant 0.000000e+00 : f32
    %9 = vector.broadcast %cst_7 : f32 to vector<32x128xf32>
    %10 = arith.maximumf %8, %9 : vector<32x128xf32>
    %11 = arith.truncf %10 : vector<32x128xf32> to vector<32x128xbf16>
    %c0_8 = arith.constant 0 : index
    %c0_9 = arith.constant 0 : index
    %12 = vector.load %arg5[%c0_8, %c0_9] : memref<32x128xbf16, #tpu.memory_space<vmem>>, vector<32x128xbf16>
    tpu.vector_store %arg5[%c0_8, %c0_9], %11 {strides = array<i32>} : memref<32x128xbf16, #tpu.memory_space<vmem>>, vector<32x128xbf16>,
    return
  }
  func.func @transform_0(%arg0: i32) -> (i32, i32) {
    %c0_i32 = arith.constant 0 : i32
    %c0_i32_0 = arith.constant 0 : i32
    return %arg0, %c0_i32 : i32, i32
  }
  func.func @transform_1(%arg0: i32) -> (i32, i32) {
    %c0_i32 = arith.constant 0 : i32
    %c0_i32_0 = arith.constant 0 : i32
    %c0_i32_1 = arith.constant 0 : i32
    return %c0_i32, %c0_i32_0 : i32, i32
  }
  func.func @transform_2(%arg0: i32) -> (i32, i32) {
    %c0_i32 = arith.constant 0 : i32
    %c0_i32_0 = arith.constant 0 : i32
    %c0_i32_1 = arith.constant 0 : i32
    return %c0_i32, %c0_i32_0 : i32, i32
  }
  func.func @transform_3(%arg0: i32) -> (i32, i32) {
    %c0_i32 = arith.constant 0 : i32
    %c0_i32_0 = arith.constant 0 : i32
    return %arg0, %c0_i32 : i32, i32
  }
  func.func @transform_4(%arg0: i32) -> (i32, i32) {
    %c0_i32 = arith.constant 0 : i32
    %c0_i32_0 = arith.constant 0 : i32
    return %arg0, %c0_i32 : i32, i32
  }
}

</mosaic_0001>

<llo_original>
// kernel: resnet_forward.10
$region0: #{resnet_forward.10}
  #allocation0 [shape = 'u32[]', space=smem, size = 0x4, offset = 0x4, fixed_abs, tag = 'smem constant byte address 0x4 - core index']
  #allocation1 [shape = 'u32[144,128]{1,0:T(1,128)}', space=vmem, size = 0x12000, scoped, tag = 'internal scratch']
  %s0 = inlined_call_operand.vmem [shape: bf16[512,27], index: 0, kind: input, shape index: {}]
  %s1 = inlined_call_operand.vmem [shape: bf16[27,128], index: 1, kind: input, shape index: {}]
  %s2 = inlined_call_operand.vmem [shape: f32[1,128], index: 2, kind: input, shape index: {}]
  %s3 = inlined_call_operand.vmem [shape: bf16[512,128], index: 3, kind: output, shape index: {}]
  %s4 = sld [smem:[#allocation0]]
  $region45: #{resnet_forward.10} parent=0
    _
  %s6 = ssub.s32 1, %s4
  %s7 = scalar_select 0, %s6, %s4
  loop: start=0, step=1, limit=4
  $region2: #{resnet_forward.10} parent=0 // loop_pre_header
    _
  $region3: #{resnet_forward.10} parent=0 // loop_header
    %s9 = sphi 0, %s13
    %p10 = scmp.ge.s32.totalorder %s9, 4
    %s19 = sphi 0, %s21
    %s22 = sphi 0, %s19
    %s23 = sphi 0, %s22
    %s39 = sphi 0, %s23
    %s43 = sphi 0, %s43
    %s45 = sphi 0, %s43
    %s46 = sphi 0, %s45
    %s60 = sphi 0, %s46
    %s64 = sphi 0, %s64
    %s66 = sphi 0, %s64
    %s67 = sphi 0, %s66
    %s81 = sphi 0, %s67
    %s87 = sphi 0, %s89
    %s90 = sphi 0, %s87
    %s91 = sphi 0, %s90
    %s107 = sphi 0, %s91
  $region4: #{resnet_forward.10} parent=0 // loop_header_branch
    %12 = sbr.rel (%p10) target = $region8
  $region5: #{resnet_forward.10} parent=0 // loop_body
    %s14 = ssub.s32 %s9, 1
    %s15 = ssub.s32 %s9, 2
    %s16 = sadd.s32 %s9, 1
    %s17 = ssub.s32 %s9, %s16
    %p18 = scmp.eq.s32.totalorder %s17, 0
    %s20 = sadd.s32 %s19, 1
    %s21 = scalar_select %p18, %s19, %s20
    %p24 = pneg %p18
    %p25 = scmp.eq.s32.totalorder %s9, 1
    %p26 = por %p24, %p25
    %p27 = scmp.ne.s32.totalorder %s19, %s22
    %p28 = scmp.eq.s32.totalorder %s9, 0
    %p29 = por %p27, %p28
    %p30 = scmp.ne.s32.totalorder %s19, %s22
    %p31 = scmp.eq.s32.totalorder %s14, 1
    %p32 = por %p30, %p31
    %p33 = scmp.ne.s32.totalorder %s22, %s23
    %p34 = scmp.eq.s32.totalorder %s14, 0
    %p35 = por %p33, %p34
    %p36 = scmp.ne.s32.totalorder %s22, %s23
    %p37 = scmp.eq.s32.totalorder %s15, 1
    %p38 = por %p36, %p37
    %p40 = scmp.ne.s32.totalorder %s23, %s39
    %p41 = scmp.eq.s32.totalorder %s15, 0
    %p42 = por %p40, %p41
    %s44 = sadd.s32 %s43, 1
    %p47 = scmp.eq.s32.totalorder %s9, 1
    %p48 = scmp.ne.s32.totalorder %s43, %s45
    %p49 = scmp.eq.s32.totalorder %s9, 0
    %p50 = por %p48, %p49
    %p51 = scmp.ne.s32.totalorder %s43, %s45
    %p52 = scmp.eq.s32.totalorder %s14, 1
    %p53 = por %p51, %p52
    %p54 = scmp.ne.s32.totalorder %s45, %s46
    %p55 = scmp.eq.s32.totalorder %s14, 0
    %p56 = por %p54, %p55
    %p57 = scmp.ne.s32.totalorder %s45, %s46
    %p58 = scmp.eq.s32.totalorder %s15, 1
    %p59 = por %p57, %p58
    %p61 = scmp.ne.s32.totalorder %s46, %s60
    %p62 = scmp.eq.s32.totalorder %s15, 0
    %p63 = por %p61, %p62
    %s65 = sadd.s32 %s64, 1
    %p68 = scmp.eq.s32.totalorder %s9, 1
    %p69 = scmp.ne.s32.totalorder %s64, %s66
    %p70 = scmp.eq.s32.totalorder %s9, 0
    %p71 = por %p69, %p70
    %p72 = scmp.ne.s32.totalorder %s64, %s66
    %p73 = scmp.eq.s32.totalorder %s14, 1
    %p74 = por %p72, %p73
    %p75 = scmp.ne.s32.totalorder %s66, %s67
    %p76 = scmp.eq.s32.totalorder %s14, 0
    %p77 = por %p75, %p76
    %p78 = scmp.ne.s32.totalorder %s66, %s67
    %p79 = scmp.eq.s32.totalorder %s15, 1
    %p80 = por %p78, %p79
    %p82 = scmp.ne.s32.totalorder %s67, %s81
    %p83 = scmp.eq.s32.totalorder %s15, 0
    %p84 = por %p82, %p83
    %s85 = ssub.s32 %s9, %s16
    %p86 = scmp.eq.s32.totalorder %s85, 0
    %s88 = sadd.s32 %s87, 1
    %s89 = scalar_select %p86, %s87, %s88
    %p92 = pneg %p86
    %p93 = scmp.eq.s32.totalorder %s9, 1
    %p94 = por %p92, %p93
    %p95 = scmp.ne.s32.totalorder %s87, %s90
    %p96 = scmp.eq.s32.totalorder %s9, 0
    %p97 = por %p95, %p96
    %p98 = scmp.ne.s32.totalorder %s87, %s90
    %p99 = scmp.eq.s32.totalorder %s14, 1
    %p100 = por %p98, %p99
    %p101 = scmp.ne.s32.totalorder %s90, %s91
    %p102 = scmp.eq.s32.totalorder %s14, 0
    %p103 = por %p101, %p102
    %p104 = scmp.ne.s32.totalorder %s90, %s91
    %p105 = scmp.eq.s32.totalorder %s15, 1
    %p106 = por %p104, %p105
    %p108 = scmp.ne.s32.totalorder %s91, %s107
    %p109 = scmp.eq.s32.totalorder %s15, 0
    %p110 = por %p108, %p109
    %p111 = scmp.le.s32.totalorder 1, %s9
    %p112 = scmp.lt.s32.totalorder %s9, 3
    %p113 = pnand %p111, %p112
    %p114 = pneg %p113
    // Predicated region
    $region9: #{resnet_forward.10} parent=5 // pred_check
      _
    $region10: #{resnet_forward.10} parent=5 // pred_check_branch
      %116 = sbr.rel (%p113) target = $region12
    $region11: #{resnet_forward.10} parent=5 // pred_region
      %s117 = ssub.s32 %s9, 1
      // Predicated region
      $region13: #{resnet_forward.10} parent=11 // pred_check
        %p118 = pneg %p56
      $region14: #{resnet_forward.10} parent=11 // pred_check_branch
        %120 = sbr.rel (%p118) target = $region16
      $region15: #{resnet_forward.10} parent=11 // pred_region
        _
      $region16: #{resnet_forward.10} parent=11 // pred_fallthru
        _
      // Predicated region
      $region17: #{resnet_forward.10} parent=11 // pred_check
        %p121 = pneg %p77
      $region18: #{resnet_forward.10} parent=11 // pred_check_branch
        %123 = sbr.rel (%p121) target = $region20
      $region19: #{resnet_forward.10} parent=11 // pred_region
        _
      $region20: #{resnet_forward.10} parent=11 // pred_fallthru
        _
    $region12: #{resnet_forward.10} parent=5 // pred_fallthru
      _
    %p124 = scmp.lt.s32.totalorder %s9, 2
    // Predicated region
    $region21: #{resnet_forward.10} parent=5 // pred_check
      %p125 = pneg %p124
    $region22: #{resnet_forward.10} parent=5 // pred_check_branch
      %127 = sbr.rel (%p125) target = $region24
    $region23: #{resnet_forward.10} parent=5 // pred_region
      // Predicated region
      $region25: #{resnet_forward.10} parent=23 // pred_check
        %p128 = pneg %p29
      $region26: #{resnet_forward.10} parent=23 // pred_check_branch
        %130 = sbr.rel (%p128) target = $region28
      $region27: #{resnet_forward.10} parent=23 // pred_region
        %s131 = smul.u32 32, %s9
        %p132 = scmp.lt.s32.totalorder %s131, 63
        %s133 = scalar_select %p132, %s131, 63
        %s134 = smul.addr %s133, 4
        %s135 = scalar_lea.vmem %s0, %s134
        %s136 = smul.u32 32, %s9
      $region28: #{resnet_forward.10} parent=23 // pred_fallthru
        _
    $region24: #{resnet_forward.10} parent=5 // pred_fallthru
      _
    %p137 = scmp.le.s32.totalorder 1, %s9
    %p138 = scmp.lt.s32.totalorder %s9, 3
    %p139 = pnand %p137, %p138
    %p140 = pneg %p139
    // Predicated region
    $region29: #{resnet_forward.10} parent=5 // pred_check
      _
    $region30: #{resnet_forward.10} parent=5 // pred_check_branch
      %142 = sbr.rel (%p139) target = $region32
    $region31: #{resnet_forward.10} parent=5 // pred_region
      %s143 = ssub.s32 %s9, 1
      %s144 = smul.u32 32, %s14
      %p145 = scmp.lt.s32.totalorder %s144, 63
      %s146 = scalar_select %p145, %s144, 63
      %s147 = smul.addr %s146, 4
      %s148 = scalar_lea.vmem %s0, %s147
      %p149 = pneg %p35
      %p150 = pneg %p32
      %p151 = pneg %p56
      %p152 = pneg %p53
      %p153 = pneg %p77
      %p154 = pneg %p74
      %p155 = pneg %p103
      %p156 = pneg %p100
      %s157 = smul.u32 32, %s14
      %p158 = scmp.lt.s32.totalorder %s157, 63
      %s159 = scalar_select %p158, %s157, 63
      %s160 = smul.addr %s159, 4
      %s161 = scalar_lea.vmem %s3, %s160
      %s162 = smul.u32 32, %s14
      %p163 = scmp.lt.s32.totalorder %s162, 63
      %s164 = scalar_select %p163, %s162, 63
      %s165 = smul.addr %s164, 4
      %s166 = scalar_lea.vmem %s0, %s165
      %s167 = smul.u32 32, %s14
      %s168 = smul.u32 32, %s14
      %p169 = scmp.lt.s32.totalorder %s168, 63
      %s170 = scalar_select %p169, %s168, 63
      %s171 = smul.addr %s170, 4
      %s172 = scalar_lea.vmem %s3, %s171
      %s173 = smul.u32 32, %s14
      %v175 = vld [vmem:[%s166] sm:$0xf]
      %v176 = vld [vmem:[%s166 + $0x4] sm:$0xf]
      %v177 = vld [vmem:[%s166 + $0x8] sm:$0xf]
      %v178 = vld [vmem:[%s166 + $0xc] sm:$0xf]
      %v179 = vld [vmem:[%s166 + $0x10] sm:$0xf]
      %v180 = vld [vmem:[%s166 + $0x14] sm:$0xf]
      %v181 = vld [vmem:[%s166 + $0x18] sm:$0xf]
      %v182 = vld [vmem:[%s166 + $0x1c] sm:$0xf]
      %v183 = vld [vmem:[%s166 + $0x20] sm:$0xf]
      %v184 = vld [vmem:[%s166 + $0x24] sm:$0xf]
      %v185 = vld [vmem:[%s166 + $0x28] sm:$0xf]
      %v186 = vld [vmem:[%s166 + $0x2c] sm:$0xf]
      %v187 = vld [vmem:[%s166 + $0x30] sm:$0xf]
      %v188 = vld [vmem:[%s166 + $0x34] sm:$0xf]
      %v189 = vld [vmem:[%s166 + $0x38] sm:$0xf]
      %v190 = vld [vmem:[%s166 + $0x3c] sm:$0xf]
      %v191 = vld [vmem:[%s166 + $0x40] sm:$0xf]
      %v192 = vld [vmem:[%s166 + $0x44] sm:$0xf]
      %v193 = vld [vmem:[%s166 + $0x48] sm:$0xf]
      %v194 = vld [vmem:[%s166 + $0x4c] sm:$0xf]
      %v195 = vld [vmem:[%s166 + $0x50] sm:$0xf]
      %v196 = vld [vmem:[%s166 + $0x54] sm:$0xf]
      %v197 = vld [vmem:[%s166 + $0x58] sm:$0xf]
      %v198 = vld [vmem:[%s166 + $0x5c] sm:$0xf]
      %v199 = vld [vmem:[%s166 + $0x60] sm:$0xf]
      %v200 = vld [vmem:[%s166 + $0x64] sm:$0xf]
      %v201 = vld [vmem:[%s166 + $0x68] sm:$0xf]
      %v202 = vld [vmem:[%s166 + $0x6c] sm:$0xf]
      %v203 = vld [vmem:[%s166 + $0x70] sm:$0xf]
      %v204 = vld [vmem:[%s166 + $0x74] sm:$0xf]
      %v205 = vld [vmem:[%s166 + $0x78] sm:$0xf]
      %v206 = vld [vmem:[%s166 + $0x7c] sm:$0xf]
      %v207 = vld [vmem:[%s1] sm:$0xf]
      %v208 = vld [vmem:[%s1 + $0x4] sm:$0xf]
      %v209 = vld [vmem:[%s1 + $0x8] sm:$0xf]
      %v210 = vld [vmem:[%s1 + $0xc] sm:$0x3]
      %v211 = vld [vmem:[%s2] sm:$0x1]
      %v213 = vlaneseq
      %v214 = vshrl.u32 %v213, 7
      %v215 = vsub.s32 0, %v214
      %v216 = vrot.slane %v211, %v215
      %v250 = vunpack.c.l.b16 %v175
      %v251 = vunpack.c.l.b16 %v176
      %v252 = vunpack.c.l.b16 %v177
      %v253 = vunpack.c.l.b16 %v178
      %v254 = vunpack.c.l.b16 %v179
      %v255 = vunpack.c.l.b16 %v180
      %v256 = vunpack.c.l.b16 %v181
      %v257 = vunpack.c.l.b16 %v182
      %v258 = vunpack.c.l.b16 %v183
      %v259 = vunpack.c.l.b16 %v184
      %v260 = vunpack.c.l.b16 %v185
      %v261 = vunpack.c.l.b16 %v186
      %v262 = vunpack.c.l.b16 %v187
      %v263 = vunpack.c.l.b16 %v188
      %v264 = vunpack.c.l.b16 %v189
      %v265 = vunpack.c.l.b16 %v190
      %v266 = vunpack.c.l.b16 %v191
      %v267 = vunpack.c.l.b16 %v192
      %v268 = vunpack.c.l.b16 %v193
      %v269 = vunpack.c.l.b16 %v194
      %v270 = vunpack.c.l.b16 %v195
      %v271 = vunpack.c.l.b16 %v196
      %v272 = vunpack.c.l.b16 %v197
      %v273 = vunpack.c.l.b16 %v198
      %v274 = vunpack.c.l.b16 %v199
      %v275 = vunpack.c.l.b16 %v200
      %v276 = vunpack.c.l.b16 %v201
      %v277 = vunpack.c.l.b16 %v202
      %v278 = vunpack.c.l.b16 %v203
      %v279 = vunpack.c.l.b16 %v204
      %v280 = vunpack.c.l.b16 %v205
      %v281 = vunpack.c.l.b16 %v206
      %v282 = vpack.c.b16 %v251, %v250
      %v283 = vpack.c.b16 %v253, %v252
      %v284 = vpack.c.b16 %v255, %v254
      %v285 = vpack.c.b16 %v257, %v256
      %v286 = vpack.c.b16 %v259, %v258
      %v287 = vpack.c.b16 %v261, %v260
      %v288 = vpack.c.b16 %v263, %v262
      %v289 = vpack.c.b16 %v265, %v264
      %v290 = vpack.c.b16 %v267, %v266
      %v291 = vpack.c.b16 %v269, %v268
      %v292 = vpack.c.b16 %v271, %v270
      %v293 = vpack.c.b16 %v273, %v272
      %v294 = vpack.c.b16 %v275, %v274
      %v295 = vpack.c.b16 %v277, %v276
      %v296 = vpack.c.b16 %v279, %v278
      %v297 = vpack.c.b16 %v281, %v280
      %v302 = vunpack.c.l.b16 %v207
      %v303 = vunpack.c.l.b16 %v208
      %v304 = vunpack.c.l.b16 %v209
      %v305 = vunpack.c.l.b16 %v210
      %v306 = vpack.c.b16 %v303, %v302
      %v307 = vpack.c.b16 %v305, %v304
      %vm309 = vcmask 220160
      %v311 = vsel %vm309, %v282, 0
      %v314 = vsel %vm309, %v283, 0
      %v317 = vsel %vm309, %v284, 0
      %v320 = vsel %vm309, %v285, 0
      %v323 = vsel %vm309, %v286, 0
      %v326 = vsel %vm309, %v287, 0
      %v329 = vsel %vm309, %v288, 0
      %v332 = vsel %vm309, %v289, 0
      %v335 = vsel %vm309, %v290, 0
      %v338 = vsel %vm309, %v291, 0
      %v341 = vsel %vm309, %v292, 0
      %v344 = vsel %vm309, %v293, 0
      %v347 = vsel %vm309, %v294, 0
      %v350 = vsel %vm309, %v295, 0
      %v353 = vsel %vm309, %v296, 0
      %v356 = vsel %vm309, %v297, 0
      %vm358 = vcmask 1044480
      %vm359 = vcmask 1045504
      %v360 = vsel %vm358, 4294967295, 65535
      %v361 = vsel %vm359, %v360, 0
      %v363 = vand.u32 %v307, %v361
      %365 = vmatprep.subr.bf16.mxu0 0
      %366 = vmatpush1.bf16.msra.mxu0 %v306
      %367 = vmatprep.subr.bf16.mxu0 0
      %368 = vmatpush1.bf16.msra.mxu0 %v363
      %369 = vmatprep.subr.bf16.mxu0 0
      %370 = vmatpush1.bf16.msra.mxu0 0
      %371 = vmatprep.subr.bf16.mxu0 0
      %372 = vmatpush1.bf16.msra.mxu0 0
      %373 = vmatprep.subr.bf16.mxu0 0
      %374 = vmatpush1.bf16.msra.mxu0 0
      %375 = vmatprep.subr.bf16.mxu0 0
      %376 = vmatpush1.bf16.msra.mxu0 0
      %377 = vmatprep.subr.bf16.mxu0 0
      %378 = vmatpush1.bf16.msra.mxu0 0
      %379 = vmatprep.subr.bf16.mxu0 0
      %380 = vmatpush1.bf16.msra.mxu0 0
      %381 = vmatprep.subr.bf16.mxu0 0
      %382 = vmatpush1.bf16.msra.mxu0 0
      %383 = vmatprep.subr.bf16.mxu0 0
      %384 = vmatpush1.bf16.msra.mxu0 0
      %385 = vmatprep.subr.bf16.mxu0 0
      %386 = vmatpush1.bf16.msra.mxu0 0
      %387 = vmatprep.subr.bf16.mxu0 0
      %388 = vmatpush1.bf16.msra.mxu0 0
      %389 = vmatprep.subr.bf16.mxu0 0
      %390 = vmatpush1.bf16.msra.mxu0 0
      %391 = vmatprep.subr.bf16.mxu0 0
      %392 = vmatpush1.bf16.msra.mxu0 0
      %393 = vmatprep.subr.bf16.mxu0 0
      %394 = vmatpush1.bf16.msra.mxu0 0
      %395 = vmatprep.subr.bf16.mxu0 0
      %396 = vmatpush1.bf16.msra.mxu0 0
      %397 = vmatprep.mubr.bf16.mxu0 0
      %398 = vmatmul.mubr.bf16.gmra.mrb[0].mxu0 %v311
      %v399 = vpop.f32.mrb[0].mxu0
      %v400 = vadd.f32 %v216, %v399
      %v401 = vpop.f32.mrb[0].mxu0
      %v402 = vpop.f32.mrb[0].mxu0
      %v403 = vadd.f32 %v216, %v402
      %v404 = vpop.f32.mrb[0].mxu0
      %405 = vmatprep.mubr.bf16.mxu0 0
      %406 = vmatmul.mubr.bf16.gmra.mrb[0].mxu0 %v314
      %v407 = vpop.f32.mrb[0].mxu0
      %v408 = vadd.f32 %v216, %v407
      %v409 = vpop.f32.mrb[0].mxu0
      %v410 = vpop.f32.mrb[0].mxu0
      %v411 = vadd.f32 %v216, %v410
      %v412 = vpop.f32.mrb[0].mxu0
      %413 = vmatprep.mubr.bf16.mxu0 0
      %414 = vmatmul.mubr.bf16.gmra.mrb[0].mxu0 %v317
      %v415 = vpop.f32.mrb[0].mxu0
      %v416 = vadd.f32 %v216, %v415
      %v417 = vpop.f32.mrb[0].mxu0
      %v418 = vpop.f32.mrb[0].mxu0
      %v419 = vadd.f32 %v216, %v418
      %v420 = vpop.f32.mrb[0].mxu0
      %421 = vmatprep.mubr.bf16.mxu0 0
      %422 = vmatmul.mubr.bf16.gmra.mrb[0].mxu0 %v320
      %v423 = vpop.f32.mrb[0].mxu0
      %v424 = vadd.f32 %v216, %v423
      %v425 = vpop.f32.mrb[0].mxu0
      %v426 = vpop.f32.mrb[0].mxu0
      %v427 = vadd.f32 %v216, %v426
      %v428 = vpop.f32.mrb[0].mxu0
      %429 = vmatprep.mubr.bf16.mxu0 0
      %430 = vmatmul.mubr.bf16.gmra.mrb[0].mxu0 %v323
      %v431 = vpop.f32.mrb[0].mxu0
      %v432 = vadd.f32 %v216, %v431
      %v433 = vpop.f32.mrb[0].mxu0
      %v434 = vpop.f32.mrb[0].mxu0
      %v435 = vadd.f32 %v216, %v434
      %v436 = vpop.f32.mrb[0].mxu0
      %437 = vmatprep.mubr.bf16.mxu0 0
      %438 = vmatmul.mubr.bf16.gmra.mrb[0].mxu0 %v326
      %v439 = vpop.f32.mrb[0].mxu0
      %v440 = vadd.f32 %v216, %v439
      %v441 = vpop.f32.mrb[0].mxu0
      %v442 = vpop.f32.mrb[0].mxu0
      %v443 = vadd.f32 %v216, %v442
      %v444 = vpop.f32.mrb[0].mxu0
      %445 = vmatprep.mubr.bf16.mxu0 0
      %446 = vmatmul.mubr.bf16.gmra.mrb[0].mxu0 %v329
      %v447 = vpop.f32.mrb[0].mxu0
      %v448 = vadd.f32 %v216, %v447
      %v449 = vpop.f32.mrb[0].mxu0
      %v450 = vpop.f32.mrb[0].mxu0
      %v451 = vadd.f32 %v216, %v450
      %v452 = vpop.f32.mrb[0].mxu0
      %453 = vmatprep.mubr.bf16.mxu0 0
      %454 = vmatmul.mubr.bf16.gmra.mrb[0].mxu0 %v332
      %v455 = vpop.f32.mrb[0].mxu0
      %v456 = vadd.f32 %v216, %v455
      %v457 = vpop.f32.mrb[0].mxu0
      %v458 = vpop.f32.mrb[0].mxu0
      %v459 = vadd.f32 %v216, %v458
      %v460 = vpop.f32.mrb[0].mxu0
      %461 = vmatprep.mubr.bf16.mxu0 0
      %462 = vmatmul.mubr.bf16.gmra.mrb[0].mxu0 %v335
      %v463 = vpop.f32.mrb[0].mxu0
      %v464 = vadd.f32 %v216, %v463
      %v465 = vpop.f32.mrb[0].mxu0
      %v466 = vpop.f32.mrb[0].mxu0
      %v467 = vadd.f32 %v216, %v466
      %v468 = vpop.f32.mrb[0].mxu0
      %469 = vmatprep.mubr.bf16.mxu0 0
      %470 = vmatmul.mubr.bf16.gmra.mrb[0].mxu0 %v338
      %v471 = vpop.f32.mrb[0].mxu0
      %v472 = vadd.f32 %v216, %v471
      %v473 = vpop.f32.mrb[0].mxu0
      %v474 = vpop.f32.mrb[0].mxu0
      %v475 = vadd.f32 %v216, %v474
      %v476 = vpop.f32.mrb[0].mxu0
      %477 = vmatprep.mubr.bf16.mxu0 0
      %478 = vmatmul.mubr.bf16.gmra.mrb[0].mxu0 %v341
      %v479 = vpop.f32.mrb[0].mxu0
      %v480 = vadd.f32 %v216, %v479
      %v481 = vpop.f32.mrb[0].mxu0
      %v482 = vpop.f32.mrb[0].mxu0
      %v483 = vadd.f32 %v216, %v482
      %v484 = vpop.f32.mrb[0].mxu0
      %485 = vmatprep.mubr.bf16.mxu0 0
      %486 = vmatmul.mubr.bf16.gmra.mrb[0].mxu0 %v344
      %v487 = vpop.f32.mrb[0].mxu0
      %v488 = vadd.f32 %v216, %v487
      %v489 = vpop.f32.mrb[0].mxu0
      %v490 = vpop.f32.mrb[0].mxu0
      %v491 = vadd.f32 %v216, %v490
      %v492 = vpop.f32.mrb[0].mxu0
      %493 = vmatprep.mubr.bf16.mxu0 0
      %494 = vmatmul.mubr.bf16.gmra.mrb[0].mxu0 %v347
      %v495 = vpop.f32.mrb[0].mxu0
      %v496 = vadd.f32 %v216, %v495
      %v497 = vpop.f32.mrb[0].mxu0
      %v498 = vpop.f32.mrb[0].mxu0
      %v499 = vadd.f32 %v216, %v498
      %v500 = vpop.f32.mrb[0].mxu0
      %501 = vmatprep.mubr.bf16.mxu0 0
      %502 = vmatmul.mubr.bf16.gmra.mrb[0].mxu0 %v350
      %v503 = vpop.f32.mrb[0].mxu0
      %v504 = vadd.f32 %v216, %v503
      %v505 = vpop.f32.mrb[0].mxu0
      %v506 = vpop.f32.mrb[0].mxu0
      %v507 = vadd.f32 %v216, %v506
      %v508 = vpop.f32.mrb[0].mxu0
      %509 = vmatprep.mubr.bf16.mxu0 0
      %510 = vmatmul.mubr.bf16.gmra.mrb[0].mxu0 %v353
      %v511 = vpop.f32.mrb[0].mxu0
      %v512 = vadd.f32 %v216, %v511
      %v513 = vpop.f32.mrb[0].mxu0
      %v514 = vpop.f32.mrb[0].mxu0
      %v515 = vadd.f32 %v216, %v514
      %v516 = vpop.f32.mrb[0].mxu0
      %517 = vmatprep.mubr.bf16.mxu0 0
      %518 = vmatmul.mubr.bf16.gmra.mrb[0].mxu0 %v356
      %v519 = vpop.f32.mrb[0].mxu0
      %v520 = vadd.f32 %v216, %v519
      %v521 = vpop.f32.mrb[0].mxu0
      %v522 = vpop.f32.mrb[0].mxu0
      %v523 = vadd.f32 %v216, %v522
      %v524 = vpop.f32.mrb[0].mxu0
      %525 = vdwg.mxu0
      %v526 = vmax.f32 %v400, 0.0
      %v527 = vmax.f32 %v403, 0.0
      %v528 = vmax.f32 %v408, 0.0
      %v529 = vmax.f32 %v411, 0.0
      %v530 = vmax.f32 %v416, 0.0
      %v531 = vmax.f32 %v419, 0.0
      %v532 = vmax.f32 %v424, 0.0
      %v533 = vmax.f32 %v427, 0.0
      %v534 = vmax.f32 %v432, 0.0
      %v535 = vmax.f32 %v435, 0.0
      %v536 = vmax.f32 %v440, 0.0
      %v537 = vmax.f32 %v443, 0.0
      %v538 = vmax.f32 %v448, 0.0
      %v539 = vmax.f32 %v451, 0.0
      %v540 = vmax.f32 %v456, 0.0
      %v541 = vmax.f32 %v459, 0.0
      %v542 = vmax.f32 %v464, 0.0
      %v543 = vmax.f32 %v467, 0.0
      %v544 = vmax.f32 %v472, 0.0
      %v545 = vmax.f32 %v475, 0.0
      %v546 = vmax.f32 %v480, 0.0
      %v547 = vmax.f32 %v483, 0.0
      %v548 = vmax.f32 %v488, 0.0
      %v549 = vmax.f32 %v491, 0.0
      %v550 = vmax.f32 %v496, 0.0
      %v551 = vmax.f32 %v499, 0.0
      %v552 = vmax.f32 %v504, 0.0
      %v553 = vmax.f32 %v507, 0.0
      %v554 = vmax.f32 %v512, 0.0
      %v555 = vmax.f32 %v515, 0.0
      %v556 = vmax.f32 %v520, 0.0
      %v557 = vmax.f32 %v523, 0.0
      %v558 = vpack.c.bf16 %v527, %v526
      %v559 = vpack.c.bf16 %v529, %v528
      %v560 = vpack.c.bf16 %v531, %v530
      %v561 = vpack.c.bf16 %v533, %v532
      %v562 = vpack.c.bf16 %v535, %v534
      %v563 = vpack.c.bf16 %v537, %v536
      %v564 = vpack.c.bf16 %v539, %v538
      %v565 = vpack.c.bf16 %v541, %v540
      %v566 = vpack.c.bf16 %v543, %v542
      %v567 = vpack.c.bf16 %v545, %v544
      %v568 = vpack.c.bf16 %v547, %v546
      %v569 = vpack.c.bf16 %v549, %v548
      %v570 = vpack.c.bf16 %v551, %v550
      %v571 = vpack.c.bf16 %v553, %v552
      %v572 = vpack.c.bf16 %v555, %v554
      %v573 = vpack.c.bf16 %v557, %v556
      %v590 = vunpack.c.l.b16 %v558
      %v591 = vunpack.c.h.b16 %v558
      %v592 = vunpack.c.l.b16 %v559
      %v593 = vunpack.c.h.b16 %v559
      %v594 = vunpack.c.l.b16 %v560
      %v595 = vunpack.c.h.b16 %v560
      %v596 = vunpack.c.l.b16 %v561
      %v597 = vunpack.c.h.b16 %v561
      %v598 = vunpack.c.l.b16 %v562
      %v599 = vunpack.c.h.b16 %v562
      %v600 = vunpack.c.l.b16 %v563
      %v601 = vunpack.c.h.b16 %v563
      %v602 = vunpack.c.l.b16 %v564
      %v603 = vunpack.c.h.b16 %v564
      %v604 = vunpack.c.l.b16 %v565
      %v605 = vunpack.c.h.b16 %v565
      %v606 = vunpack.c.l.b16 %v566
      %v607 = vunpack.c.h.b16 %v566
      %v608 = vunpack.c.l.b16 %v567
      %v609 = vunpack.c.h.b16 %v567
      %v610 = vunpack.c.l.b16 %v568
      %v611 = vunpack.c.h.b16 %v568
      %v612 = vunpack.c.l.b16 %v569
      %v613 = vunpack.c.h.b16 %v569
      %v614 = vunpack.c.l.b16 %v570
      %v615 = vunpack.c.h.b16 %v570
      %v616 = vunpack.c.l.b16 %v571
      %v617 = vunpack.c.h.b16 %v571
      %v618 = vunpack.c.l.b16 %v572
      %v619 = vunpack.c.h.b16 %v572
      %v620 = vunpack.c.l.b16 %v573
      %v621 = vunpack.c.h.b16 %v573
      %v622 = vpack.c.b16 %v590, %v590
      %v623 = vpack.c.b16 %v591, %v591
      %v624 = vpack.c.b16 %v592, %v592
      %v625 = vpack.c.b16 %v593, %v593
      %v626 = vpack.c.b16 %v594, %v594
      %v627 = vpack.c.b16 %v595, %v595
      %v628 = vpack.c.b16 %v596, %v596
      %v629 = vpack.c.b16 %v597, %v597
      %v630 = vpack.c.b16 %v598, %v598
      %v631 = vpack.c.b16 %v599, %v599
      %v632 = vpack.c.b16 %v600, %v600
      %v633 = vpack.c.b16 %v601, %v601
      %v634 = vpack.c.b16 %v602, %v602
      %v635 = vpack.c.b16 %v603, %v603
      %v636 = vpack.c.b16 %v604, %v604
      %v637 = vpack.c.b16 %v605, %v605
      %v638 = vpack.c.b16 %v606, %v606
      %v639 = vpack.c.b16 %v607, %v607
      %v640 = vpack.c.b16 %v608, %v608
      %v641 = vpack.c.b16 %v609, %v609
      %v642 = vpack.c.b16 %v610, %v610
      %v643 = vpack.c.b16 %v611, %v611
      %v644 = vpack.c.b16 %v612, %v612
      %v645 = vpack.c.b16 %v613, %v613
      %v646 = vpack.c.b16 %v614, %v614
      %v647 = vpack.c.b16 %v615, %v615
      %v648 = vpack.c.b16 %v616, %v616
      %v649 = vpack.c.b16 %v617, %v617
      %v650 = vpack.c.b16 %v618, %v618
      %v651 = vpack.c.b16 %v619, %v619
      %v652 = vpack.c.b16 %v620, %v620
      %v653 = vpack.c.b16 %v621, %v621
      %686 = vst [vmem:[%s172] sm:$0xf] %v622
      %687 = vst [vmem:[%s172 + $0x4] sm:$0xf] %v623
      %688 = vst [vmem:[%s172 + $0x8] sm:$0xf] %v624
      %689 = vst [vmem:[%s172 + $0xc] sm:$0xf] %v625
      %690 = vst [vmem:[%s172 + $0x10] sm:$0xf] %v626
      %691 = vst [vmem:[%s172 + $0x14] sm:$0xf] %v627
      %692 = vst [vmem:[%s172 + $0x18] sm:$0xf] %v628
      %693 = vst [vmem:[%s172 + $0x1c] sm:$0xf] %v629
      %694 = vst [vmem:[%s172 + $0x20] sm:$0xf] %v630
      %695 = vst [vmem:[%s172 + $0x24] sm:$0xf] %v631
      %696 = vst [vmem:[%s172 + $0x28] sm:$0xf] %v632
      %697 = vst [vmem:[%s172 + $0x2c] sm:$0xf] %v633
      %698 = vst [vmem:[%s172 + $0x30] sm:$0xf] %v634
      %699 = vst [vmem:[%s172 + $0x34] sm:$0xf] %v635
      %700 = vst [vmem:[%s172 + $0x38] sm:$0xf] %v636
      %701 = vst [vmem:[%s172 + $0x3c] sm:$0xf] %v637
      %702 = vst [vmem:[%s172 + $0x40] sm:$0xf] %v638
      %703 = vst [vmem:[%s172 + $0x44] sm:$0xf] %v639
      %704 = vst [vmem:[%s172 + $0x48] sm:$0xf] %v640
      %705 = vst [vmem:[%s172 + $0x4c] sm:$0xf] %v641
      %706 = vst [vmem:[%s172 + $0x50] sm:$0xf] %v642
      %707 = vst [vmem:[%s172 + $0x54] sm:$0xf] %v643
      %708 = vst [vmem:[%s172 + $0x58] sm:$0xf] %v644
      %709 = vst [vmem:[%s172 + $0x5c] sm:$0xf] %v645
      %710 = vst [vmem:[%s172 + $0x60] sm:$0xf] %v646
      %711 = vst [vmem:[%s172 + $0x64] sm:$0xf] %v647
      %712 = vst [vmem:[%s172 + $0x68] sm:$0xf] %v648
      %713 = vst [vmem:[%s172 + $0x6c] sm:$0xf] %v649
      %714 = vst [vmem:[%s172 + $0x70] sm:$0xf] %v650
      %715 = vst [vmem:[%s172 + $0x74] sm:$0xf] %v651
      %716 = vst [vmem:[%s172 + $0x78] sm:$0xf] %v652
      %717 = vst [vmem:[%s172 + $0x7c] sm:$0xf] %v653
      %s718 = smul.u32 32, %s14
      %p719 = scmp.lt.s32.totalorder %s718, 63
      %s720 = scalar_select %p719, %s718, 63
      %s721 = smul.addr %s720, 4
      %s722 = scalar_lea.vmem %s3, %s721
      // Predicated region
      $region33: #{resnet_forward.10} parent=31 // pred_check
        %p723 = pneg %p100
      $region34: #{resnet_forward.10} parent=31 // pred_check_branch
        %725 = sbr.rel (%p723) target = $region36
      $region35: #{resnet_forward.10} parent=31 // pred_region
        %s726 = smul.u32 32, %s14
      $region36: #{resnet_forward.10} parent=31 // pred_fallthru
        _
    $region32: #{resnet_forward.10} parent=5 // pred_fallthru
      _
    %p727 = scmp.le.s32.totalorder 2, %s9
    // Predicated region
    $region37: #{resnet_forward.10} parent=5 // pred_check
      %p728 = pneg %p727
    $region38: #{resnet_forward.10} parent=5 // pred_check_branch
      %730 = sbr.rel (%p728) target = $region40
    $region39: #{resnet_forward.10} parent=5 // pred_region
      %s731 = ssub.s32 %s9, 2
      // Predicated region
      $region41: #{resnet_forward.10} parent=39 // pred_check
        %p732 = pneg %p106
      $region42: #{resnet_forward.10} parent=39 // pred_check_branch
        %734 = sbr.rel (%p732) target = $region44
      $region43: #{resnet_forward.10} parent=39 // pred_region
        %s735 = smul.u32 32, %s15
        %p736 = scmp.lt.s32.totalorder %s735, 63
        %s737 = scalar_select %p736, %s735, 63
        %s738 = smul.addr %s737, 4
        %s739 = scalar_lea.vmem %s3, %s738
      $region44: #{resnet_forward.10} parent=39 // pred_fallthru
        _
    $region40: #{resnet_forward.10} parent=5 // pred_fallthru
      _
  $region6: #{resnet_forward.10} parent=0 // loop_footer
    %s13 = sadd.s32 1, %s9
  $region7: #{resnet_forward.10} parent=0 // loop_footer_branch
    %8 = sbr.rel target = $region3
  $region8: #{resnet_forward.10} parent=0 // loop_exit
    _

// kernel: resnet_forward.11
$region0: #{resnet_forward.11}
  #allocation0 [shape = 'u32[]', space=smem, size = 0x4, offset = 0x4, fixed_abs, tag = 'smem constant byte address 0x4 - core index']
  #allocation1 [shape = 'u32[144,128]{1,0:T(1,128)}', space=vmem, size = 0x12000, scoped, tag = 'internal scratch']
  %s0 = inlined_call_operand.vmem [shape: bf16[512,126], index: 0, kind: input, shape index: {}]
  %s1 = inlined_call_operand.vmem [shape: bf16[126,128], index: 1, kind: input, shape index: {}]
  %s2 = inlined_call_operand.vmem [shape: f32[1,128], index: 2, kind: input, shape index: {}]
  %s3 = inlined_call_operand.vmem [shape: bf16[512,128], index: 3, kind: output, shape index: {}]
  %s4 = sld [smem:[#allocation0]]
  $region45: #{resnet_forward.11} parent=0
    _
  %s6 = ssub.s32 1, %s4
  %s7 = scalar_select 0, %s6, %s4
  loop: start=0, step=1, limit=4
  $region2: #{resnet_forward.11} parent=0 // loop_pre_header
    _
  $region3: #{resnet_forward.11} parent=0 // loop_header
    %s9 = sphi 0, %s13
    %p10 = scmp.ge.s32.totalorder %s9, 4
    %s19 = sphi 0, %s21
    %s22 = sphi 0, %s19
    %s23 = sphi 0, %s22
    %s39 = sphi 0, %s23
    %s43 = sphi 0, %s43
    %s45 = sphi 0, %s43
    %s46 = sphi 0, %s45
    %s60 = sphi 0, %s46
    %s64 = sphi 0, %s64
    %s66 = sphi 0, %s64
    %s67 = sphi 0, %s66
    %s81 = sphi 0, %s67
    %s87 = sphi 0, %s89
    %s90 = sphi 0, %s87
    %s91 = sphi 0, %s90
    %s107 = sphi 0, %s91
  $region4: #{resnet_forward.11} parent=0 // loop_header_branch
    %12 = sbr.rel (%p10) target = $region8
  $region5: #{resnet_forward.11} parent=0 // loop_body
    %s14 = ssub.s32 %s9, 1
    %s15 = ssub.s32 %s9, 2
    %s16 = sadd.s32 %s9, 1
    %s17 = ssub.s32 %s9, %s16
    %p18 = scmp.eq.s32.totalorder %s17, 0
    %s20 = sadd.s32 %s19, 1
    %s21 = scalar_select %p18, %s19, %s20
    %p24 = pneg %p18
    %p25 = scmp.eq.s32.totalorder %s9, 1
    %p26 = por %p24, %p25
    %p27 = scmp.ne.s32.totalorder %s19, %s22
    %p28 = scmp.eq.s32.totalorder %s9, 0
    %p29 = por %p27, %p28
    %p30 = scmp.ne.s32.totalorder %s19, %s22
    %p31 = scmp.eq.s32.totalorder %s14, 1
    %p32 = por %p30, %p31
    %p33 = scmp.ne.s32.totalorder %s22, %s23
    %p34 = scmp.eq.s32.totalorder %s14, 0
    %p35 = por %p33, %p34
    %p36 = scmp.ne.s32.totalorder %s22, %s23
    %p37 = scmp.eq.s32.totalorder %s15, 1
    %p38 = por %p36, %p37
    %p40 = scmp.ne.s32.totalorder %s23, %s39
    %p41 = scmp.eq.s32.totalorder %s15, 0
    %p42 = por %p40, %p41
    %s44 = sadd.s32 %s43, 1
    %p47 = scmp.eq.s32.totalorder %s9, 1
    %p48 = scmp.ne.s32.totalorder %s43, %s45
    %p49 = scmp.eq.s32.totalorder %s9, 0
    %p50 = por %p48, %p49
    %p51 = scmp.ne.s32.totalorder %s43, %s45
    %p52 = scmp.eq.s32.totalorder %s14, 1
    %p53 = por %p51, %p52
    %p54 = scmp.ne.s32.totalorder %s45, %s46
    %p55 = scmp.eq.s32.totalorder %s14, 0
    %p56 = por %p54, %p55
    %p57 = scmp.ne.s32.totalorder %s45, %s46
    %p58 = scmp.eq.s32.totalorder %s15, 1
    %p59 = por %p57, %p58
    %p61 = scmp.ne.s32.totalorder %s46, %s60
    %p62 = scmp.eq.s32.totalorder %s15, 0
    %p63 = por %p61, %p62
    %s65 = sadd.s32 %s64, 1
    %p68 = scmp.eq.s32.totalorder %s9, 1
    %p69 = scmp.ne.s32.totalorder %s64, %s66
    %p70 = scmp.eq.s32.totalorder %s9, 0
    %p71 = por %p69, %p70
    %p72 = scmp.ne.s32.totalorder %s64, %s66
    %p73 = scmp.eq.s32.totalorder %s14, 1
    %p74 = por %p72, %p73
    %p75 = scmp.ne.s32.totalorder %s66, %s67
    %p76 = scmp.eq.s32.totalorder %s14, 0
    %p77 = por %p75, %p76
    %p78 = scmp.ne.s32.totalorder %s66, %s67
    %p79 = scmp.eq.s32.totalorder %s15, 1
    %p80 = por %p78, %p79
    %p82 = scmp.ne.s32.totalorder %s67, %s81
    %p83 = scmp.eq.s32.totalorder %s15, 0
    %p84 = por %p82, %p83
    %s85 = ssub.s32 %s9, %s16
    %p86 = scmp.eq.s32.totalorder %s85, 0
    %s88 = sadd.s32 %s87, 1
    %s89 = scalar_select %p86, %s87, %s88
    %p92 = pneg %p86
    %p93 = scmp.eq.s32.totalorder %s9, 1
    %p94 = por %p92, %p93
    %p95 = scmp.ne.s32.totalorder %s87, %s90
    %p96 = scmp.eq.s32.totalorder %s9, 0
    %p97 = por %p95, %p96
    %p98 = scmp.ne.s32.totalorder %s87, %s90
    %p99 = scmp.eq.s32.totalorder %s14, 1
    %p100 = por %p98, %p99
    %p101 = scmp.ne.s32.totalorder %s90, %s91
    %p102 = scmp.eq.s32.totalorder %s14, 0
    %p103 = por %p101, %p102
    %p104 = scmp.ne.s32.totalorder %s90, %s91
    %p105 = scmp.eq.s32.totalorder %s15, 1
    %p106 = por %p104, %p105
    %p108 = scmp.ne.s32.totalorder %s91, %s107
    %p109 = scmp.eq.s32.totalorder %s15, 0
    %p110 = por %p108, %p109
    %p111 = scmp.le.s32.totalorder 1, %s9
    %p112 = scmp.lt.s32.totalorder %s9, 3
    %p113 = pnand %p111, %p112
    %p114 = pneg %p113
    // Predicated region
    $region9: #{resnet_forward.11} parent=5 // pred_check
      _
    $region10: #{resnet_forward.11} parent=5 // pred_check_branch
      %116 = sbr.rel (%p113) target = $region12
    $region11: #{resnet_forward.11} parent=5 // pred_region
      %s117 = ssub.s32 %s9, 1
      // Predicated region
      $region13: #{resnet_forward.11} parent=11 // pred_check
        %p118 = pneg %p56
      $region14: #{resnet_forward.11} parent=11 // pred_check_branch
        %120 = sbr.rel (%p118) target = $region16
      $region15: #{resnet_forward.11} parent=11 // pred_region
        _
      $region16: #{resnet_forward.11} parent=11 // pred_fallthru
        _
      // Predicated region
      $region17: #{resnet_forward.11} parent=11 // pred_check
        %p121 = pneg %p77
      $region18: #{resnet_forward.11} parent=11 // pred_check_branch
        %123 = sbr.rel (%p121) target = $region20
      $region19: #{resnet_forward.11} parent=11 // pred_region
        _
      $region20: #{resnet_forward.11} parent=11 // pred_fallthru
        _
    $region12: #{resnet_forward.11} parent=5 // pred_fallthru
      _
    %p124 = scmp.lt.s32.totalorder %s9, 2
    // Predicated region
    $region21: #{resnet_forward.11} parent=5 // pred_check
      %p125 = pneg %p124
    $region22: #{resnet_forward.11} parent=5 // pred_check_branch
      %127 = sbr.rel (%p125) target = $region24
    $region23: #{resnet_forward.11} parent=5 // pred_region
      // Predicated region
      $region25: #{resnet_forward.11} parent=23 // pred_check
        %p128 = pneg %p29
      $region26: #{resnet_forward.11} parent=23 // pred_check_branch
        %130 = sbr.rel (%p128) target = $region28
      $region27: #{resnet_forward.11} parent=23 // pred_region
        %s131 = smul.u32 32, %s9
        %p132 = scmp.lt.s32.totalorder %s131, 63
        %s133 = scalar_select %p132, %s131, 63
        %s134 = smul.addr %s133, 4
        %s135 = scalar_lea.vmem %s0, %s134
        %s136 = smul.u32 32, %s9
      $region28: #{resnet_forward.11} parent=23 // pred_fallthru
        _
    $region24: #{resnet_forward.11} parent=5 // pred_fallthru
      _
    %p137 = scmp.le.s32.totalorder 1, %s9
    %p138 = scmp.lt.s32.totalorder %s9, 3
    %p139 = pnand %p137, %p138
    %p140 = pneg %p139
    // Predicated region
    $region29: #{resnet_forward.11} parent=5 // pred_check
      _
    $region30: #{resnet_forward.11} parent=5 // pred_check_branch
      %142 = sbr.rel (%p139) target = $region32
    $region31: #{resnet_forward.11} parent=5 // pred_region
      %s143 = ssub.s32 %s9, 1
      %s144 = smul.u32 32, %s14
      %p145 = scmp.lt.s32.totalorder %s144, 63
      %s146 = scalar_select %p145, %s144, 63
      %s147 = smul.addr %s146, 4
      %s148 = scalar_lea.vmem %s0, %s147
      %p149 = pneg %p35
      %p150 = pneg %p32
      %p151 = pneg %p56
      %p152 = pneg %p53
      %p153 = pneg %p77
      %p154 = pneg %p74
      %p155 = pneg %p103
      %p156 = pneg %p100
      %s157 = smul.u32 32, %s14
      %p158 = scmp.lt.s32.totalorder %s157, 63
      %s159 = scalar_select %p158, %s157, 63
      %s160 = smul.addr %s159, 4
      %s161 = scalar_lea.vmem %s3, %s160
      %s162 = smul.u32 32, %s14
      %p163 = scmp.lt.s32.totalorder %s162, 63
      %s164 = scalar_select %p163, %s162, 63
      %s165 = smul.addr %s164, 4
      %s166 = scalar_lea.vmem %s0, %s165
      %s167 = smul.u32 32, %s14
      %s168 = smul.u32 32, %s14
      %p169 = scmp.lt.s32.totalorder %s168, 63
      %s170 = scalar_select %p169, %s168, 63
      %s171 = smul.addr %s170, 4
      %s172 = scalar_lea.vmem %s3, %s171
      %s173 = smul.u32 32, %s14
      %v175 = vld [vmem:[%s166] sm:$0xf]
      %v176 = vld [vmem:[%s166 + $0x4] sm:$0xf]
      %v177 = vld [vmem:[%s166 + $0x8] sm:$0xf]
      %v178 = vld [vmem:[%s166 + $0xc] sm:$0xf]
      %v179 = vld [vmem:[%s166 + $0x10] sm:$0xf]
      %v180 = vld [vmem:[%s166 + $0x14] sm:$0xf]
      %v181 = vld [vmem:[%s166 + $0x18] sm:$0xf]
      %v182 = vld [vmem:[%s166 + $0x1c] sm:$0xf]
      %v183 = vld [vmem:[%s166 + $0x20] sm:$0xf]
      %v184 = vld [vmem:[%s166 + $0x24] sm:$0xf]
      %v185 = vld [vmem:[%s166 + $0x28] sm:$0xf]
      %v186 = vld [vmem:[%s166 + $0x2c] sm:$0xf]
      %v187 = vld [vmem:[%s166 + $0x30] sm:$0xf]
      %v188 = vld [vmem:[%s166 + $0x34] sm:$0xf]
      %v189 = vld [vmem:[%s166 + $0x38] sm:$0xf]
      %v190 = vld [vmem:[%s166 + $0x3c] sm:$0xf]
      %v191 = vld [vmem:[%s166 + $0x40] sm:$0xf]
      %v192 = vld [vmem:[%s166 + $0x44] sm:$0xf]
      %v193 = vld [vmem:[%s166 + $0x48] sm:$0xf]
      %v194 = vld [vmem:[%s166 + $0x4c] sm:$0xf]
      %v195 = vld [vmem:[%s166 + $0x50] sm:$0xf]
      %v196 = vld [vmem:[%s166 + $0x54] sm:$0xf]
      %v197 = vld [vmem:[%s166 + $0x58] sm:$0xf]
      %v198 = vld [vmem:[%s166 + $0x5c] sm:$0xf]
      %v199 = vld [vmem:[%s166 + $0x60] sm:$0xf]
      %v200 = vld [vmem:[%s166 + $0x64] sm:$0xf]
      %v201 = vld [vmem:[%s166 + $0x68] sm:$0xf]
      %v202 = vld [vmem:[%s166 + $0x6c] sm:$0xf]
      %v203 = vld [vmem:[%s166 + $0x70] sm:$0xf]
      %v204 = vld [vmem:[%s166 + $0x74] sm:$0xf]
      %v205 = vld [vmem:[%s166 + $0x78] sm:$0xf]
      %v206 = vld [vmem:[%s166 + $0x7c] sm:$0xf]
      %v207 = vld [vmem:[%s1] sm:$0xf]
      %v208 = vld [vmem:[%s1 + $0x4] sm:$0xf]
      %v209 = vld [vmem:[%s1 + $0x8] sm:$0xf]
      %v210 = vld [vmem:[%s1 + $0xc] sm:$0xf]
      %v211 = vld [vmem:[%s1 + $0x10] sm:$0xf]
      %v212 = vld [vmem:[%s1 + $0x14] sm:$0xf]
      %v213 = vld [vmem:[%s1 + $0x18] sm:$0xf]
      %v214 = vld [vmem:[%s1 + $0x1c] sm:$0xf]
      %v215 = vld [vmem:[%s1 + $0x20] sm:$0xf]
      %v216 = vld [vmem:[%s1 + $0x24] sm:$0xf]
      %v217 = vld [vmem:[%s1 + $0x28] sm:$0xf]
      %v218 = vld [vmem:[%s1 + $0x2c] sm:$0xf]
      %v219 = vld [vmem:[%s1 + $0x30] sm:$0xf]
      %v220 = vld [vmem:[%s1 + $0x34] sm:$0xf]
      %v221 = vld [vmem:[%s1 + $0x38] sm:$0xf]
      %v222 = vld [vmem:[%s1 + $0x3c] sm:$0x7]
      %v223 = vld [vmem:[%s2] sm:$0x1]
      %v225 = vlaneseq
      %v226 = vshrl.u32 %v225, 7
      %v227 = vsub.s32 0, %v226
      %v228 = vrot.slane %v223, %v227
      %v262 = vunpack.c.l.b16 %v175
      %v263 = vunpack.c.l.b16 %v176
      %v264 = vunpack.c.l.b16 %v177
      %v265 = vunpack.c.l.b16 %v178
      %v266 = vunpack.c.l.b16 %v179
      %v267 = vunpack.c.l.b16 %v180
      %v268 = vunpack.c.l.b16 %v181
      %v269 = vunpack.c.l.b16 %v182
      %v270 = vunpack.c.l.b16 %v183
      %v271 = vunpack.c.l.b16 %v184
      %v272 = vunpack.c.l.b16 %v185
      %v273 = vunpack.c.l.b16 %v186
      %v274 = vunpack.c.l.b16 %v187
      %v275 = vunpack.c.l.b16 %v188
      %v276 = vunpack.c.l.b16 %v189
      %v277 = vunpack.c.l.b16 %v190
      %v278 = vunpack.c.l.b16 %v191
      %v279 = vunpack.c.l.b16 %v192
      %v280 = vunpack.c.l.b16 %v193
      %v281 = vunpack.c.l.b16 %v194
      %v282 = vunpack.c.l.b16 %v195
      %v283 = vunpack.c.l.b16 %v196
      %v284 = vunpack.c.l.b16 %v197
      %v285 = vunpack.c.l.b16 %v198
      %v286 = vunpack.c.l.b16 %v199
      %v287 = vunpack.c.l.b16 %v200
      %v288 = vunpack.c.l.b16 %v201
      %v289 = vunpack.c.l.b16 %v202
      %v290 = vunpack.c.l.b16 %v203
      %v291 = vunpack.c.l.b16 %v204
      %v292 = vunpack.c.l.b16 %v205
      %v293 = vunpack.c.l.b16 %v206
      %v294 = vpack.c.b16 %v263, %v262
      %v295 = vpack.c.b16 %v265, %v264
      %v296 = vpack.c.b16 %v267, %v266
      %v297 = vpack.c.b16 %v269, %v268
      %v298 = vpack.c.b16 %v271, %v270
      %v299 = vpack.c.b16 %v273, %v272
      %v300 = vpack.c.b16 %v275, %v274
      %v301 = vpack.c.b16 %v277, %v276
      %v302 = vpack.c.b16 %v279, %v278
      %v303 = vpack.c.b16 %v281, %v280
      %v304 = vpack.c.b16 %v283, %v282
      %v305 = vpack.c.b16 %v285, %v284
      %v306 = vpack.c.b16 %v287, %v286
      %v307 = vpack.c.b16 %v289, %v288
      %v308 = vpack.c.b16 %v291, %v290
      %v309 = vpack.c.b16 %v293, %v292
      %v326 = vunpack.c.l.b16 %v207
      %v327 = vunpack.c.l.b16 %v208
      %v328 = vunpack.c.l.b16 %v209
      %v329 = vunpack.c.l.b16 %v210
      %v330 = vunpack.c.l.b16 %v211
      %v331 = vunpack.c.l.b16 %v212
      %v332 = vunpack.c.l.b16 %v213
      %v333 = vunpack.c.l.b16 %v214
      %v334 = vunpack.c.l.b16 %v215
      %v335 = vunpack.c.l.b16 %v216
      %v336 = vunpack.c.l.b16 %v217
      %v337 = vunpack.c.l.b16 %v218
      %v338 = vunpack.c.l.b16 %v219
      %v339 = vunpack.c.l.b16 %v220
      %v340 = vunpack.c.l.b16 %v221
      %v341 = vunpack.c.l.b16 %v222
      %v342 = vpack.c.b16 %v327, %v326
      %v343 = vpack.c.b16 %v329, %v328
      %v344 = vpack.c.b16 %v331, %v330
      %v345 = vpack.c.b16 %v333, %v332
      %v346 = vpack.c.b16 %v335, %v334
      %v347 = vpack.c.b16 %v337, %v336
      %v348 = vpack.c.b16 %v339, %v338
      %v349 = vpack.c.b16 %v341, %v340
      %vm357 = vcmask 1031168
      %v359 = vsel %vm357, %v294, 0
      %v362 = vsel %vm357, %v295, 0
      %v365 = vsel %vm357, %v296, 0
      %v368 = vsel %vm357, %v297, 0
      %v371 = vsel %vm357, %v298, 0
      %v374 = vsel %vm357, %v299, 0
      %v377 = vsel %vm357, %v300, 0
      %v380 = vsel %vm357, %v301, 0
      %v383 = vsel %vm357, %v302, 0
      %v386 = vsel %vm357, %v303, 0
      %v389 = vsel %vm357, %v304, 0
      %v392 = vsel %vm357, %v305, 0
      %v395 = vsel %vm357, %v306, 0
      %v398 = vsel %vm357, %v307, 0
      %v401 = vsel %vm357, %v308, 0
      %v404 = vsel %vm357, %v309, 0
      %vm406 = vcmask 1046528
      %v408 = vsel %vm406, %v349, 0
      %410 = vmatprep.subr.bf16.mxu0 0
      %411 = vmatpush1.bf16.msra.mxu0 %v342
      %412 = vmatprep.subr.bf16.mxu0 0
      %413 = vmatpush1.bf16.msra.mxu0 %v343
      %414 = vmatprep.subr.bf16.mxu0 0
      %415 = vmatpush1.bf16.msra.mxu0 %v344
      %416 = vmatprep.subr.bf16.mxu0 0
      %417 = vmatpush1.bf16.msra.mxu0 %v345
      %418 = vmatprep.subr.bf16.mxu0 0
      %419 = vmatpush1.bf16.msra.mxu0 %v346
      %420 = vmatprep.subr.bf16.mxu0 0
      %421 = vmatpush1.bf16.msra.mxu0 %v347
      %422 = vmatprep.subr.bf16.mxu0 0
      %423 = vmatpush1.bf16.msra.mxu0 %v348
      %424 = vmatprep.subr.bf16.mxu0 0
      %425 = vmatpush1.bf16.msra.mxu0 %v408
      %426 = vmatprep.subr.bf16.mxu0 0
      %427 = vmatpush1.bf16.msra.mxu0 0
      %428 = vmatprep.subr.bf16.mxu0 0
      %429 = vmatpush1.bf16.msra.mxu0 0
      %430 = vmatprep.subr.bf16.mxu0 0
      %431 = vmatpush1.bf16.msra.mxu0 0
      %432 = vmatprep.subr.bf16.mxu0 0
      %433 = vmatpush1.bf16.msra.mxu0 0
      %434 = vmatprep.subr.bf16.mxu0 0
      %435 = vmatpush1.bf16.msra.mxu0 0
      %436 = vmatprep.subr.bf16.mxu0 0
      %437 = vmatpush1.bf16.msra.mxu0 0
      %438 = vmatprep.subr.bf16.mxu0 0
      %439 = vmatpush1.bf16.msra.mxu0 0
      %440 = vmatprep.subr.bf16.mxu0 0
      %441 = vmatpush1.bf16.msra.mxu0 0
      %442 = vmatprep.mubr.bf16.mxu0 0
      %443 = vmatmul.mubr.bf16.gmra.mrb[0].mxu0 %v359
      %v444 = vpop.f32.mrb[0].mxu0
      %v445 = vadd.f32 %v228, %v444
      %v446 = vpop.f32.mrb[0].mxu0
      %v447 = vpop.f32.mrb[0].mxu0
      %v448 = vadd.f32 %v228, %v447
      %v449 = vpop.f32.mrb[0].mxu0
      %450 = vmatprep.mubr.bf16.mxu0 0
      %451 = vmatmul.mubr.bf16.gmra.mrb[0].mxu0 %v362
      %v452 = vpop.f32.mrb[0].mxu0
      %v453 = vadd.f32 %v228, %v452
      %v454 = vpop.f32.mrb[0].mxu0
      %v455 = vpop.f32.mrb[0].mxu0
      %v456 = vadd.f32 %v228, %v455
      %v457 = vpop.f32.mrb[0].mxu0
      %458 = vmatprep.mubr.bf16.mxu0 0
      %459 = vmatmul.mubr.bf16.gmra.mrb[0].mxu0 %v365
      %v460 = vpop.f32.mrb[0].mxu0
      %v461 = vadd.f32 %v228, %v460
      %v462 = vpop.f32.mrb[0].mxu0
      %v463 = vpop.f32.mrb[0].mxu0
      %v464 = vadd.f32 %v228, %v463
      %v465 = vpop.f32.mrb[0].mxu0
      %466 = vmatprep.mubr.bf16.mxu0 0
      %467 = vmatmul.mubr.bf16.gmra.mrb[0].mxu0 %v368
      %v468 = vpop.f32.mrb[0].mxu0
      %v469 = vadd.f32 %v228, %v468
      %v470 = vpop.f32.mrb[0].mxu0
      %v471 = vpop.f32.mrb[0].mxu0
      %v472 = vadd.f32 %v228, %v471
      %v473 = vpop.f32.mrb[0].mxu0
      %474 = vmatprep.mubr.bf16.mxu0 0
      %475 = vmatmul.mubr.bf16.gmra.mrb[0].mxu0 %v371
      %v476 = vpop.f32.mrb[0].mxu0
      %v477 = vadd.f32 %v228, %v476
      %v478 = vpop.f32.mrb[0].mxu0
      %v479 = vpop.f32.mrb[0].mxu0
      %v480 = vadd.f32 %v228, %v479
      %v481 = vpop.f32.mrb[0].mxu0
      %482 = vmatprep.mubr.bf16.mxu0 0
      %483 = vmatmul.mubr.bf16.gmra.mrb[0].mxu0 %v374
      %v484 = vpop.f32.mrb[0].mxu0
      %v485 = vadd.f32 %v228, %v484
      %v486 = vpop.f32.mrb[0].mxu0
      %v487 = vpop.f32.mrb[0].mxu0
      %v488 = vadd.f32 %v228, %v487
      %v489 = vpop.f32.mrb[0].mxu0
      %490 = vmatprep.mubr.bf16.mxu0 0
      %491 = vmatmul.mubr.bf16.gmra.mrb[0].mxu0 %v377
      %v492 = vpop.f32.mrb[0].mxu0
      %v493 = vadd.f32 %v228, %v492
      %v494 = vpop.f32.mrb[0].mxu0
      %v495 = vpop.f32.mrb[0].mxu0
      %v496 = vadd.f32 %v228, %v495
      %v497 = vpop.f32.mrb[0].mxu0
      %498 = vmatprep.mubr.bf16.mxu0 0
      %499 = vmatmul.mubr.bf16.gmra.mrb[0].mxu0 %v380
      %v500 = vpop.f32.mrb[0].mxu0
      %v501 = vadd.f32 %v228, %v500
      %v502 = vpop.f32.mrb[0].mxu0
      %v503 = vpop.f32.mrb[0].mxu0
      %v504 = vadd.f32 %v228, %v503
      %v505 = vpop.f32.mrb[0].mxu0
      %506 = vmatprep.mubr.bf16.mxu0 0
      %507 = vmatmul.mubr.bf16.gmra.mrb[0].mxu0 %v383
      %v508 = vpop.f32.mrb[0].mxu0
      %v509 = vadd.f32 %v228, %v508
      %v510 = vpop.f32.mrb[0].mxu0
      %v511 = vpop.f32.mrb[0].mxu0
      %v512 = vadd.f32 %v228, %v511
      %v513 = vpop.f32.mrb[0].mxu0
      %514 = vmatprep.mubr.bf16.mxu0 0
      %515 = vmatmul.mubr.bf16.gmra.mrb[0].mxu0 %v386
      %v516 = vpop.f32.mrb[0].mxu0
      %v517 = vadd.f32 %v228, %v516
      %v518 = vpop.f32.mrb[0].mxu0
      %v519 = vpop.f32.mrb[0].mxu0
      %v520 = vadd.f32 %v228, %v519
      %v521 = vpop.f32.mrb[0].mxu0
      %522 = vmatprep.mubr.bf16.mxu0 0
      %523 = vmatmul.mubr.bf16.gmra.mrb[0].mxu0 %v389
      %v524 = vpop.f32.mrb[0].mxu0
      %v525 = vadd.f32 %v228, %v524
      %v526 = vpop.f32.mrb[0].mxu0
      %v527 = vpop.f32.mrb[0].mxu0
      %v528 = vadd.f32 %v228, %v527
      %v529 = vpop.f32.mrb[0].mxu0
      %530 = vmatprep.mubr.bf16.mxu0 0
      %531 = vmatmul.mubr.bf16.gmra.mrb[0].mxu0 %v392
      %v532 = vpop.f32.mrb[0].mxu0
      %v533 = vadd.f32 %v228, %v532
      %v534 = vpop.f32.mrb[0].mxu0
      %v535 = vpop.f32.mrb[0].mxu0
      %v536 = vadd.f32 %v228, %v535
      %v537 = vpop.f32.mrb[0].mxu0
      %538 = vmatprep.mubr.bf16.mxu0 0
      %539 = vmatmul.mubr.bf16.gmra.mrb[0].mxu0 %v395
      %v540 = vpop.f32.mrb[0].mxu0
      %v541 = vadd.f32 %v228, %v540
      %v542 = vpop.f32.mrb[0].mxu0
      %v543 = vpop.f32.mrb[0].mxu0
      %v544 = vadd.f32 %v228, %v543
      %v545 = vpop.f32.mrb[0].mxu0
      %546 = vmatprep.mubr.bf16.mxu0 0
      %547 = vmatmul.mubr.bf16.gmra.mrb[0].mxu0 %v398
      %v548 = vpop.f32.mrb[0].mxu0
      %v549 = vadd.f32 %v228, %v548
      %v550 = vpop.f32.mrb[0].mxu0
      %v551 = vpop.f32.mrb[0].mxu0
      %v552 = vadd.f32 %v228, %v551
      %v553 = vpop.f32.mrb[0].mxu0
      %554 = vmatprep.mubr.bf16.mxu0 0
      %555 = vmatmul.mubr.bf16.gmra.mrb[0].mxu0 %v401
      %v556 = vpop.f32.mrb[0].mxu0
      %v557 = vadd.f32 %v228, %v556
      %v558 = vpop.f32.mrb[0].mxu0
      %v559 = vpop.f32.mrb[0].mxu0
      %v560 = vadd.f32 %v228, %v559
      %v561 = vpop.f32.mrb[0].mxu0
      %562 = vmatprep.mubr.bf16.mxu0 0
      %563 = vmatmul.mubr.bf16.gmra.mrb[0].mxu0 %v404
      %v564 = vpop.f32.mrb[0].mxu0
      %v565 = vadd.f32 %v228, %v564
      %v566 = vpop.f32.mrb[0].mxu0
      %v567 = vpop.f32.mrb[0].mxu0
      %v568 = vadd.f32 %v228, %v567
      %v569 = vpop.f32.mrb[0].mxu0
      %570 = vdwg.mxu0
      %v571 = vmax.f32 %v445, 0.0
      %v572 = vmax.f32 %v448, 0.0
      %v573 = vmax.f32 %v453, 0.0
      %v574 = vmax.f32 %v456, 0.0
      %v575 = vmax.f32 %v461, 0.0
      %v576 = vmax.f32 %v464, 0.0
      %v577 = vmax.f32 %v469, 0.0
      %v578 = vmax.f32 %v472, 0.0
      %v579 = vmax.f32 %v477, 0.0
      %v580 = vmax.f32 %v480, 0.0
      %v581 = vmax.f32 %v485, 0.0
      %v582 = vmax.f32 %v488, 0.0
      %v583 = vmax.f32 %v493, 0.0
      %v584 = vmax.f32 %v496, 0.0
      %v585 = vmax.f32 %v501, 0.0
      %v586 = vmax.f32 %v504, 0.0
      %v587 = vmax.f32 %v509, 0.0
      %v588 = vmax.f32 %v512, 0.0
      %v589 = vmax.f32 %v517, 0.0
      %v590 = vmax.f32 %v520, 0.0
      %v591 = vmax.f32 %v525, 0.0
      %v592 = vmax.f32 %v528, 0.0
      %v593 = vmax.f32 %v533, 0.0
      %v594 = vmax.f32 %v536, 0.0
      %v595 = vmax.f32 %v541, 0.0
      %v596 = vmax.f32 %v544, 0.0
      %v597 = vmax.f32 %v549, 0.0
      %v598 = vmax.f32 %v552, 0.0
      %v599 = vmax.f32 %v557, 0.0
      %v600 = vmax.f32 %v560, 0.0
      %v601 = vmax.f32 %v565, 0.0
      %v602 = vmax.f32 %v568, 0.0
      %v603 = vpack.c.bf16 %v572, %v571
      %v604 = vpack.c.bf16 %v574, %v573
      %v605 = vpack.c.bf16 %v576, %v575
      %v606 = vpack.c.bf16 %v578, %v577
      %v607 = vpack.c.bf16 %v580, %v579
      %v608 = vpack.c.bf16 %v582, %v581
      %v609 = vpack.c.bf16 %v584, %v583
      %v610 = vpack.c.bf16 %v586, %v585
      %v611 = vpack.c.bf16 %v588, %v587
      %v612 = vpack.c.bf16 %v590, %v589
      %v613 = vpack.c.bf16 %v592, %v591
      %v614 = vpack.c.bf16 %v594, %v593
      %v615 = vpack.c.bf16 %v596, %v595
      %v616 = vpack.c.bf16 %v598, %v597
      %v617 = vpack.c.bf16 %v600, %v599
      %v618 = vpack.c.bf16 %v602, %v601
      %v635 = vunpack.c.l.b16 %v603
      %v636 = vunpack.c.h.b16 %v603
      %v637 = vunpack.c.l.b16 %v604
      %v638 = vunpack.c.h.b16 %v604
      %v639 = vunpack.c.l.b16 %v605
      %v640 = vunpack.c.h.b16 %v605
      %v641 = vunpack.c.l.b16 %v606
      %v642 = vunpack.c.h.b16 %v606
      %v643 = vunpack.c.l.b16 %v607
      %v644 = vunpack.c.h.b16 %v607
      %v645 = vunpack.c.l.b16 %v608
      %v646 = vunpack.c.h.b16 %v608
      %v647 = vunpack.c.l.b16 %v609
      %v648 = vunpack.c.h.b16 %v609
      %v649 = vunpack.c.l.b16 %v610
      %v650 = vunpack.c.h.b16 %v610
      %v651 = vunpack.c.l.b16 %v611
      %v652 = vunpack.c.h.b16 %v611
      %v653 = vunpack.c.l.b16 %v612
      %v654 = vunpack.c.h.b16 %v612
      %v655 = vunpack.c.l.b16 %v613
      %v656 = vunpack.c.h.b16 %v613
      %v657 = vunpack.c.l.b16 %v614
      %v658 = vunpack.c.h.b16 %v614
      %v659 = vunpack.c.l.b16 %v615
      %v660 = vunpack.c.h.b16 %v615
      %v661 = vunpack.c.l.b16 %v616
      %v662 = vunpack.c.h.b16 %v616
      %v663 = vunpack.c.l.b16 %v617
      %v664 = vunpack.c.h.b16 %v617
      %v665 = vunpack.c.l.b16 %v618
      %v666 = vunpack.c.h.b16 %v618
      %v667 = vpack.c.b16 %v635, %v635
      %v668 = vpack.c.b16 %v636, %v636
      %v669 = vpack.c.b16 %v637, %v637
      %v670 = vpack.c.b16 %v638, %v638
      %v671 = vpack.c.b16 %v639, %v639
      %v672 = vpack.c.b16 %v640, %v640
      %v673 = vpack.c.b16 %v641, %v641
      %v674 = vpack.c.b16 %v642, %v642
      %v675 = vpack.c.b16 %v643, %v643
      %v676 = vpack.c.b16 %v644, %v644
      %v677 = vpack.c.b16 %v645, %v645
      %v678 = vpack.c.b16 %v646, %v646
      %v679 = vpack.c.b16 %v647, %v647
      %v680 = vpack.c.b16 %v648, %v648
      %v681 = vpack.c.b16 %v649, %v649
      %v682 = vpack.c.b16 %v650, %v650
      %v683 = vpack.c.b16 %v651, %v651
      %v684 = vpack.c.b16 %v652, %v652
      %v685 = vpack.c.b16 %v653, %v653
      %v686 = vpack.c.b16 %v654, %v654
      %v687 = vpack.c.b16 %v655, %v655
      %v688 = vpack.c.b16 %v656, %v656
      %v689 = vpack.c.b16 %v657, %v657
      %v690 = vpack.c.b16 %v658, %v658
      %v691 = vpack.c.b16 %v659, %v659
      %v692 = vpack.c.b16 %v660, %v660
      %v693 = vpack.c.b16 %v661, %v661
      %v694 = vpack.c.b16 %v662, %v662
      %v695 = vpack.c.b16 %v663, %v663
      %v696 = vpack.c.b16 %v664, %v664
      %v697 = vpack.c.b16 %v665, %v665
      %v698 = vpack.c.b16 %v666, %v666
      %731 = vst [vmem:[%s172] sm:$0xf] %v667
      %732 = vst [vmem:[%s172 + $0x4] sm:$0xf] %v668
      %733 = vst [vmem:[%s172 + $0x8] sm:$0xf] %v669
      %734 = vst [vmem:[%s172 + $0xc] sm:$0xf] %v670
      %735 = vst [vmem:[%s172 + $0x10] sm:$0xf] %v671
      %736 = vst [vmem:[%s172 + $0x14] sm:$0xf] %v672
      %737 = vst [vmem:[%s172 + $0x18] sm:$0xf] %v673
      %738 = vst [vmem:[%s172 + $0x1c] sm:$0xf] %v674
      %739 = vst [vmem:[%s172 + $0x20] sm:$0xf] %v675
      %740 = vst [vmem:[%s172 + $0x24] sm:$0xf] %v676
      %741 = vst [vmem:[%s172 + $0x28] sm:$0xf] %v677
      %742 = vst [vmem:[%s172 + $0x2c] sm:$0xf] %v678
      %743 = vst [vmem:[%s172 + $0x30] sm:$0xf] %v679
      %744 = vst [vmem:[%s172 + $0x34] sm:$0xf] %v680
      %745 = vst [vmem:[%s172 + $0x38] sm:$0xf] %v681
      %746 = vst [vmem:[%s172 + $0x3c] sm:$0xf] %v682
      %747 = vst [vmem:[%s172 + $0x40] sm:$0xf] %v683
      %748 = vst [vmem:[%s172 + $0x44] sm:$0xf] %v684
      %749 = vst [vmem:[%s172 + $0x48] sm:$0xf] %v685
      %750 = vst [vmem:[%s172 + $0x4c] sm:$0xf] %v686
      %751 = vst [vmem:[%s172 + $0x50] sm:$0xf] %v687
      %752 = vst [vmem:[%s172 + $0x54] sm:$0xf] %v688
      %753 = vst [vmem:[%s172 + $0x58] sm:$0xf] %v689
      %754 = vst [vmem:[%s172 + $0x5c] sm:$0xf] %v690
      %755 = vst [vmem:[%s172 + $0x60] sm:$0xf] %v691
      %756 = vst [vmem:[%s172 + $0x64] sm:$0xf] %v692
      %757 = vst [vmem:[%s172 + $0x68] sm:$0xf] %v693
      %758 = vst [vmem:[%s172 + $0x6c] sm:$0xf] %v694
      %759 = vst [vmem:[%s172 + $0x70] sm:$0xf] %v695
      %760 = vst [vmem:[%s172 + $0x74] sm:$0xf] %v696
      %761 = vst [vmem:[%s172 + $0x78] sm:$0xf] %v697
      %762 = vst [vmem:[%s172 + $0x7c] sm:$0xf] %v698
      %s763 = smul.u32 32, %s14
      %p764 = scmp.lt.s32.totalorder %s763, 63
      %s765 = scalar_select %p764, %s763, 63
      %s766 = smul.addr %s765, 4
      %s767 = scalar_lea.vmem %s3, %s766
      // Predicated region
      $region33: #{resnet_forward.11} parent=31 // pred_check
        %p768 = pneg %p100
      $region34: #{resnet_forward.11} parent=31 // pred_check_branch
        %770 = sbr.rel (%p768) target = $region36
      $region35: #{resnet_forward.11} parent=31 // pred_region
        %s771 = smul.u32 32, %s14
      $region36: #{resnet_forward.11} parent=31 // pred_fallthru
        _
    $region32: #{resnet_forward.11} parent=5 // pred_fallthru
      _
    %p772 = scmp.le.s32.totalorder 2, %s9
    // Predicated region
    $region37: #{resnet_forward.11} parent=5 // pred_check
      %p773 = pneg %p772
    $region38: #{resnet_forward.11} parent=5 // pred_check_branch
      %775 = sbr.rel (%p773) target = $region40
    $region39: #{resnet_forward.11} parent=5 // pred_region
      %s776 = ssub.s32 %s9, 2
      // Predicated region
      $region41: #{resnet_forward.11} parent=39 // pred_check
        %p777 = pneg %p106
      $region42: #{resnet_forward.11} parent=39 // pred_check_branch
        %779 = sbr.rel (%p777) target = $region44
      $region43: #{resnet_forward.11} parent=39 // pred_region
        %s780 = smul.u32 32, %s15
        %p781 = scmp.lt.s32.totalorder %s780, 63
        %s782 = scalar_select %p781, %s780, 63
        %s783 = smul.addr %s782, 4
        %s784 = scalar_lea.vmem %s3, %s783
      $region44: #{resnet_forward.11} parent=39 // pred_fallthru
        _
    $region40: #{resnet_forward.11} parent=5 // pred_fallthru
      _
  $region6: #{resnet_forward.11} parent=0 // loop_footer
    %s13 = sadd.s32 1, %s9
  $region7: #{resnet_forward.11} parent=0 // loop_footer_branch
    %8 = sbr.rel target = $region3
  $region8: #{resnet_forward.11} parent=0 // loop_exit
    _

// kernel: resnet_forward.14
$region0: #{resnet_forward.14}
  #allocation0 [shape = 'u32[]', space=smem, size = 0x4, offset = 0x4, fixed_abs, tag = 'smem constant byte address 0x4 - core index']
  #allocation1 [shape = 'u32[144,128]{1,0:T(1,128)}', space=vmem, size = 0x12000, scoped, tag = 'internal scratch']
  %s0 = inlined_call_operand.vmem [shape: bf16[128,14], index: 0, kind: input, shape index: {}]
  %s1 = inlined_call_operand.vmem [shape: bf16[14,128], index: 1, kind: input, shape index: {}]
  %s2 = inlined_call_operand.vmem [shape: f32[1,128], index: 2, kind: input, shape index: {}]
  %s3 = inlined_call_operand.vmem [shape: bf16[128,128], index: 3, kind: output, shape index: {}]
  %s4 = sld [smem:[#allocation0]]
  $region22: #{resnet_forward.14} parent=0
    _
  %s6 = ssub.s32 1, %s4
  %s7 = scalar_select 0, %s6, %s4
  // Predicated region
  $region2: #{resnet_forward.14} parent=0 // pred_check
    _
  $region3: #{resnet_forward.14} parent=0 // pred_check_branch
    %9 = sbr.rel (0) target = $region5
  $region4: #{resnet_forward.14} parent=0 // pred_region
    _
  $region5: #{resnet_forward.14} parent=0 // pred_fallthru
    _
  // Predicated region
  $region6: #{resnet_forward.14} parent=0 // pred_check
    _
  $region7: #{resnet_forward.14} parent=0 // pred_check_branch
    %11 = sbr.rel (0) target = $region9
  $region8: #{resnet_forward.14} parent=0 // pred_region
    _
  $region9: #{resnet_forward.14} parent=0 // pred_fallthru
    _
  // Predicated region
  $region10: #{resnet_forward.14} parent=0 // pred_check
    _
  $region11: #{resnet_forward.14} parent=0 // pred_check_branch
    %13 = sbr.rel (0) target = $region13
  $region12: #{resnet_forward.14} parent=0 // pred_region
    _
  $region13: #{resnet_forward.14} parent=0 // pred_fallthru
    _
  %v15 = vld [vmem:[%s0] sm:$0xf]
  %v16 = vld [vmem:[%s0 + $0x4] sm:$0xf]
  %v17 = vld [vmem:[%s0 + $0x8] sm:$0xf]
  %v18 = vld [vmem:[%s0 + $0xc] sm:$0xf]
  %v19 = vld [vmem:[%s0 + $0x10] sm:$0xf]
  %v20 = vld [vmem:[%s0 + $0x14] sm:$0xf]
  %v21 = vld [vmem:[%s0 + $0x18] sm:$0xf]
  %v22 = vld [vmem:[%s0 + $0x1c] sm:$0xf]
  %v23 = vld [vmem:[%s0 + $0x20] sm:$0xf]
  %v24 = vld [vmem:[%s0 + $0x24] sm:$0xf]
  %v25 = vld [vmem:[%s0 + $0x28] sm:$0xf]
  %v26 = vld [vmem:[%s0 + $0x2c] sm:$0xf]
  %v27 = vld [vmem:[%s0 + $0x30] sm:$0xf]
  %v28 = vld [vmem:[%s0 + $0x34] sm:$0xf]
  %v29 = vld [vmem:[%s0 + $0x38] sm:$0xf]
  %v30 = vld [vmem:[%s0 + $0x3c] sm:$0xf]
  %v31 = vld [vmem:[%s1] sm:$0xf]
  %v32 = vld [vmem:[%s1 + $0x4] sm:$0x7]
  %v33 = vld [vmem:[%s2] sm:$0x1]
  %v35 = vlaneseq
  %v36 = vshrl.u32 %v35, 7
  %v37 = vsub.s32 0, %v36
  %v38 = vrot.slane %v33, %v37
  %v56 = vunpack.c.l.b16 %v15
  %v57 = vunpack.c.l.b16 %v16
  %v58 = vunpack.c.l.b16 %v17
  %v59 = vunpack.c.l.b16 %v18
  %v60 = vunpack.c.l.b16 %v19
  %v61 = vunpack.c.l.b16 %v20
  %v62 = vunpack.c.l.b16 %v21
  %v63 = vunpack.c.l.b16 %v22
  %v64 = vunpack.c.l.b16 %v23
  %v65 = vunpack.c.l.b16 %v24
  %v66 = vunpack.c.l.b16 %v25
  %v67 = vunpack.c.l.b16 %v26
  %v68 = vunpack.c.l.b16 %v27
  %v69 = vunpack.c.l.b16 %v28
  %v70 = vunpack.c.l.b16 %v29
  %v71 = vunpack.c.l.b16 %v30
  %v72 = vpack.c.b16 %v57, %v56
  %v73 = vpack.c.b16 %v59, %v58
  %v74 = vpack.c.b16 %v61, %v60
  %v75 = vpack.c.b16 %v63, %v62
  %v76 = vpack.c.b16 %v65, %v64
  %v77 = vpack.c.b16 %v67, %v66
  %v78 = vpack.c.b16 %v69, %v68
  %v79 = vpack.c.b16 %v71, %v70
  %v82 = vunpack.c.l.b16 %v31
  %v83 = vunpack.c.l.b16 %v32
  %v84 = vpack.c.b16 %v83, %v82
  %vm85 = vcmask 113664
  %v87 = vsel %vm85, %v72, 0
  %v90 = vsel %vm85, %v73, 0
  %v93 = vsel %vm85, %v74, 0
  %v96 = vsel %vm85, %v75, 0
  %v99 = vsel %vm85, %v76, 0
  %v102 = vsel %vm85, %v77, 0
  %v105 = vsel %vm85, %v78, 0
  %v108 = vsel %vm85, %v79, 0
  %vm110 = vcmask 1046528
  %v112 = vsel %vm110, %v84, 0
  %114 = vmatprep.subr.bf16.mxu0 0
  %115 = vmatpush1.bf16.msra.mxu0 %v112
  %116 = vmatprep.subr.bf16.mxu0 0
  %117 = vmatpush1.bf16.msra.mxu0 0
  %118 = vmatprep.subr.bf16.mxu0 0
  %119 = vmatpush1.bf16.msra.mxu0 0
  %120 = vmatprep.subr.bf16.mxu0 0
  %121 = vmatpush1.bf16.msra.mxu0 0
  %122 = vmatprep.subr.bf16.mxu0 0
  %123 = vmatpush1.bf16.msra.mxu0 0
  %124 = vmatprep.subr.bf16.mxu0 0
  %125 = vmatpush1.bf16.msra.mxu0 0
  %126 = vmatprep.subr.bf16.mxu0 0
  %127 = vmatpush1.bf16.msra.mxu0 0
  %128 = vmatprep.subr.bf16.mxu0 0
  %129 = vmatpush1.bf16.msra.mxu0 0
  %130 = vmatprep.subr.bf16.mxu0 0
  %131 = vmatpush1.bf16.msra.mxu0 0
  %132 = vmatprep.subr.bf16.mxu0 0
  %133 = vmatpush1.bf16.msra.mxu0 0
  %134 = vmatprep.subr.bf16.mxu0 0
  %135 = vmatpush1.bf16.msra.mxu0 0
  %136 = vmatprep.subr.bf16.mxu0 0
  %137 = vmatpush1.bf16.msra.mxu0 0
  %138 = vmatprep.subr.bf16.mxu0 0
  %139 = vmatpush1.bf16.msra.mxu0 0
  %140 = vmatprep.subr.bf16.mxu0 0
  %141 = vmatpush1.bf16.msra.mxu0 0
  %142 = vmatprep.subr.bf16.mxu0 0
  %143 = vmatpush1.bf16.msra.mxu0 0
  %144 = vmatprep.subr.bf16.mxu0 0
  %145 = vmatpush1.bf16.msra.mxu0 0
  %146 = vmatprep.mubr.bf16.mxu0 0
  %147 = vmatmul.mubr.bf16.gmra.mrb[0].mxu0 %v87
  %v148 = vpop.f32.mrb[0].mxu0
  %v149 = vadd.f32 %v38, %v148
  %v150 = vpop.f32.mrb[0].mxu0
  %v151 = vpop.f32.mrb[0].mxu0
  %v152 = vadd.f32 %v38, %v151
  %v153 = vpop.f32.mrb[0].mxu0
  %154 = vmatprep.mubr.bf16.mxu0 0
  %155 = vmatmul.mubr.bf16.gmra.mrb[0].mxu0 %v90
  %v156 = vpop.f32.mrb[0].mxu0
  %v157 = vadd.f32 %v38, %v156
  %v158 = vpop.f32.mrb[0].mxu0
  %v159 = vpop.f32.mrb[0].mxu0
  %v160 = vadd.f32 %v38, %v159
  %v161 = vpop.f32.mrb[0].mxu0
  %162 = vmatprep.mubr.bf16.mxu0 0
  %163 = vmatmul.mubr.bf16.gmra.mrb[0].mxu0 %v93
  %v164 = vpop.f32.mrb[0].mxu0
  %v165 = vadd.f32 %v38, %v164
  %v166 = vpop.f32.mrb[0].mxu0
  %v167 = vpop.f32.mrb[0].mxu0
  %v168 = vadd.f32 %v38, %v167
  %v169 = vpop.f32.mrb[0].mxu0
  %170 = vmatprep.mubr.bf16.mxu0 0
  %171 = vmatmul.mubr.bf16.gmra.mrb[0].mxu0 %v96
  %v172 = vpop.f32.mrb[0].mxu0
  %v173 = vadd.f32 %v38, %v172
  %v174 = vpop.f32.mrb[0].mxu0
  %v175 = vpop.f32.mrb[0].mxu0
  %v176 = vadd.f32 %v38, %v175
  %v177 = vpop.f32.mrb[0].mxu0
  %178 = vmatprep.mubr.bf16.mxu0 0
  %179 = vmatmul.mubr.bf16.gmra.mrb[0].mxu0 %v99
  %v180 = vpop.f32.mrb[0].mxu0
  %v181 = vadd.f32 %v38, %v180
  %v182 = vpop.f32.mrb[0].mxu0
  %v183 = vpop.f32.mrb[0].mxu0
  %v184 = vadd.f32 %v38, %v183
  %v185 = vpop.f32.mrb[0].mxu0
  %186 = vmatprep.mubr.bf16.mxu0 0
  %187 = vmatmul.mubr.bf16.gmra.mrb[0].mxu0 %v102
  %v188 = vpop.f32.mrb[0].mxu0
  %v189 = vadd.f32 %v38, %v188
  %v190 = vpop.f32.mrb[0].mxu0
  %v191 = vpop.f32.mrb[0].mxu0
  %v192 = vadd.f32 %v38, %v191
  %v193 = vpop.f32.mrb[0].mxu0
  %194 = vmatprep.mubr.bf16.mxu0 0
  %195 = vmatmul.mubr.bf16.gmra.mrb[0].mxu0 %v105
  %v196 = vpop.f32.mrb[0].mxu0
  %v197 = vadd.f32 %v38, %v196
  %v198 = vpop.f32.mrb[0].mxu0
  %v199 = vpop.f32.mrb[0].mxu0
  %v200 = vadd.f32 %v38, %v199
  %v201 = vpop.f32.mrb[0].mxu0
  %202 = vmatprep.mubr.bf16.mxu0 0
  %203 = vmatmul.mubr.bf16.gmra.mrb[0].mxu0 %v108
  %v204 = vpop.f32.mrb[0].mxu0
  %v205 = vadd.f32 %v38, %v204
  %v206 = vpop.f32.mrb[0].mxu0
  %v207 = vpop.f32.mrb[0].mxu0
  %v208 = vadd.f32 %v38, %v207
  %v209 = vpop.f32.mrb[0].mxu0
  %210 = vdwg.mxu0
  %v211 = vpack.c.bf16 %v152, %v149
  %v212 = vpack.c.bf16 %v160, %v157
  %v213 = vpack.c.bf16 %v168, %v165
  %v214 = vpack.c.bf16 %v176, %v173
  %v215 = vpack.c.bf16 %v184, %v181
  %v216 = vpack.c.bf16 %v192, %v189
  %v217 = vpack.c.bf16 %v200, %v197
  %v218 = vpack.c.bf16 %v208, %v205
  %v227 = vunpack.c.l.b16 %v211
  %v228 = vunpack.c.h.b16 %v211
  %v229 = vunpack.c.l.b16 %v212
  %v230 = vunpack.c.h.b16 %v212
  %v231 = vunpack.c.l.b16 %v213
  %v232 = vunpack.c.h.b16 %v213
  %v233 = vunpack.c.l.b16 %v214
  %v234 = vunpack.c.h.b16 %v214
  %v235 = vunpack.c.l.b16 %v215
  %v236 = vunpack.c.h.b16 %v215
  %v237 = vunpack.c.l.b16 %v216
  %v238 = vunpack.c.h.b16 %v216
  %v239 = vunpack.c.l.b16 %v217
  %v240 = vunpack.c.h.b16 %v217
  %v241 = vunpack.c.l.b16 %v218
  %v242 = vunpack.c.h.b16 %v218
  %v243 = vpack.c.b16 %v227, %v227
  %v244 = vpack.c.b16 %v228, %v228
  %v245 = vpack.c.b16 %v229, %v229
  %v246 = vpack.c.b16 %v230, %v230
  %v247 = vpack.c.b16 %v231, %v231
  %v248 = vpack.c.b16 %v232, %v232
  %v249 = vpack.c.b16 %v233, %v233
  %v250 = vpack.c.b16 %v234, %v234
  %v251 = vpack.c.b16 %v235, %v235
  %v252 = vpack.c.b16 %v236, %v236
  %v253 = vpack.c.b16 %v237, %v237
  %v254 = vpack.c.b16 %v238, %v238
  %v255 = vpack.c.b16 %v239, %v239
  %v256 = vpack.c.b16 %v240, %v240
  %v257 = vpack.c.b16 %v241, %v241
  %v258 = vpack.c.b16 %v242, %v242
  %275 = vst [vmem:[%s3] sm:$0xf] %v243
  %276 = vst [vmem:[%s3 + $0x4] sm:$0xf] %v244
  %277 = vst [vmem:[%s3 + $0x8] sm:$0xf] %v245
  %278 = vst [vmem:[%s3 + $0xc] sm:$0xf] %v246
  %279 = vst [vmem:[%s3 + $0x10] sm:$0xf] %v247
  %280 = vst [vmem:[%s3 + $0x14] sm:$0xf] %v248
  %281 = vst [vmem:[%s3 + $0x18] sm:$0xf] %v249
  %282 = vst [vmem:[%s3 + $0x1c] sm:$0xf] %v250
  %283 = vst [vmem:[%s3 + $0x20] sm:$0xf] %v251
  %284 = vst [vmem:[%s3 + $0x24] sm:$0xf] %v252
  %285 = vst [vmem:[%s3 + $0x28] sm:$0xf] %v253
  %286 = vst [vmem:[%s3 + $0x2c] sm:$0xf] %v254
  %287 = vst [vmem:[%s3 + $0x30] sm:$0xf] %v255
  %288 = vst [vmem:[%s3 + $0x34] sm:$0xf] %v256
  %289 = vst [vmem:[%s3 + $0x38] sm:$0xf] %v257
  %290 = vst [vmem:[%s3 + $0x3c] sm:$0xf] %v258
  // Predicated region
  $region14: #{resnet_forward.14} parent=0 // pred_check
    _
  $region15: #{resnet_forward.14} parent=0 // pred_check_branch
    %292 = sbr.rel (0) target = $region17
  $region16: #{resnet_forward.14} parent=0 // pred_region
    _
  $region17: #{resnet_forward.14} parent=0 // pred_fallthru
    _
  // Predicated region
  $region18: #{resnet_forward.14} parent=0 // pred_check
    _
  $region19: #{resnet_forward.14} parent=0 // pred_check_branch
    %294 = sbr.rel (0) target = $region21
  $region20: #{resnet_forward.14} parent=0 // pred_region
    _
  $region21: #{resnet_forward.14} parent=0 // pred_fallthru
    _

// kernel: resnet_forward.12
$region0: #{resnet_forward.12}
  #allocation0 [shape = 'u32[]', space=smem, size = 0x4, offset = 0x4, fixed_abs, tag = 'smem constant byte address 0x4 - core index']
  #allocation1 [shape = 'u32[144,128]{1,0:T(1,128)}', space=vmem, size = 0x12000, scoped, tag = 'internal scratch']
  %s0 = inlined_call_operand.vmem [shape: bf16[512,126], index: 0, kind: input, shape index: {}]
  %s1 = inlined_call_operand.vmem [shape: bf16[126,128], index: 1, kind: input, shape index: {}]
  %s2 = inlined_call_operand.vmem [shape: f32[1,128], index: 2, kind: input, shape index: {}]
  %s3 = inlined_call_operand.vmem [shape: bf16[512,128], index: 3, kind: input, shape index: {}]
  %s4 = inlined_call_operand.vmem [shape: bf16[512,128], index: 4, kind: output, shape index: {}]
  %s5 = sld [smem:[#allocation0]]
  $region49: #{resnet_forward.12} parent=0
    _
  %s7 = ssub.s32 1, %s5
  %s8 = scalar_select 0, %s7, %s5
  loop: start=0, step=1, limit=4
  $region2: #{resnet_forward.12} parent=0 // loop_pre_header
    _
  $region3: #{resnet_forward.12} parent=0 // loop_header
    %s10 = sphi 0, %s14
    %p11 = scmp.ge.s32.totalorder %s10, 4
    %s20 = sphi 0, %s22
    %s23 = sphi 0, %s20
    %s24 = sphi 0, %s23
    %s40 = sphi 0, %s24
    %s44 = sphi 0, %s44
    %s46 = sphi 0, %s44
    %s47 = sphi 0, %s46
    %s61 = sphi 0, %s47
    %s65 = sphi 0, %s65
    %s67 = sphi 0, %s65
    %s68 = sphi 0, %s67
    %s82 = sphi 0, %s68
    %s88 = sphi 0, %s90
    %s91 = sphi 0, %s88
    %s92 = sphi 0, %s91
    %s108 = sphi 0, %s92
    %s114 = sphi 0, %s116
    %s117 = sphi 0, %s114
    %s118 = sphi 0, %s117
    %s134 = sphi 0, %s118
  $region4: #{resnet_forward.12} parent=0 // loop_header_branch
    %13 = sbr.rel (%p11) target = $region8
  $region5: #{resnet_forward.12} parent=0 // loop_body
    %s15 = ssub.s32 %s10, 1
    %s16 = ssub.s32 %s10, 2
    %s17 = sadd.s32 %s10, 1
    %s18 = ssub.s32 %s10, %s17
    %p19 = scmp.eq.s32.totalorder %s18, 0
    %s21 = sadd.s32 %s20, 1
    %s22 = scalar_select %p19, %s20, %s21
    %p25 = pneg %p19
    %p26 = scmp.eq.s32.totalorder %s10, 1
    %p27 = por %p25, %p26
    %p28 = scmp.ne.s32.totalorder %s20, %s23
    %p29 = scmp.eq.s32.totalorder %s10, 0
    %p30 = por %p28, %p29
    %p31 = scmp.ne.s32.totalorder %s20, %s23
    %p32 = scmp.eq.s32.totalorder %s15, 1
    %p33 = por %p31, %p32
    %p34 = scmp.ne.s32.totalorder %s23, %s24
    %p35 = scmp.eq.s32.totalorder %s15, 0
    %p36 = por %p34, %p35
    %p37 = scmp.ne.s32.totalorder %s23, %s24
    %p38 = scmp.eq.s32.totalorder %s16, 1
    %p39 = por %p37, %p38
    %p41 = scmp.ne.s32.totalorder %s24, %s40
    %p42 = scmp.eq.s32.totalorder %s16, 0
    %p43 = por %p41, %p42
    %s45 = sadd.s32 %s44, 1
    %p48 = scmp.eq.s32.totalorder %s10, 1
    %p49 = scmp.ne.s32.totalorder %s44, %s46
    %p50 = scmp.eq.s32.totalorder %s10, 0
    %p51 = por %p49, %p50
    %p52 = scmp.ne.s32.totalorder %s44, %s46
    %p53 = scmp.eq.s32.totalorder %s15, 1
    %p54 = por %p52, %p53
    %p55 = scmp.ne.s32.totalorder %s46, %s47
    %p56 = scmp.eq.s32.totalorder %s15, 0
    %p57 = por %p55, %p56
    %p58 = scmp.ne.s32.totalorder %s46, %s47
    %p59 = scmp.eq.s32.totalorder %s16, 1
    %p60 = por %p58, %p59
    %p62 = scmp.ne.s32.totalorder %s47, %s61
    %p63 = scmp.eq.s32.totalorder %s16, 0
    %p64 = por %p62, %p63
    %s66 = sadd.s32 %s65, 1
    %p69 = scmp.eq.s32.totalorder %s10, 1
    %p70 = scmp.ne.s32.totalorder %s65, %s67
    %p71 = scmp.eq.s32.totalorder %s10, 0
    %p72 = por %p70, %p71
    %p73 = scmp.ne.s32.totalorder %s65, %s67
    %p74 = scmp.eq.s32.totalorder %s15, 1
    %p75 = por %p73, %p74
    %p76 = scmp.ne.s32.totalorder %s67, %s68
    %p77 = scmp.eq.s32.totalorder %s15, 0
    %p78 = por %p76, %p77
    %p79 = scmp.ne.s32.totalorder %s67, %s68
    %p80 = scmp.eq.s32.totalorder %s16, 1
    %p81 = por %p79, %p80
    %p83 = scmp.ne.s32.totalorder %s68, %s82
    %p84 = scmp.eq.s32.totalorder %s16, 0
    %p85 = por %p83, %p84
    %s86 = ssub.s32 %s10, %s17
    %p87 = scmp.eq.s32.totalorder %s86, 0
    %s89 = sadd.s32 %s88, 1
    %s90 = scalar_select %p87, %s88, %s89
    %p93 = pneg %p87
    %p94 = scmp.eq.s32.totalorder %s10, 1
    %p95 = por %p93, %p94
    %p96 = scmp.ne.s32.totalorder %s88, %s91
    %p97 = scmp.eq.s32.totalorder %s10, 0
    %p98 = por %p96, %p97
    %p99 = scmp.ne.s32.totalorder %s88, %s91
    %p100 = scmp.eq.s32.totalorder %s15, 1
    %p101 = por %p99, %p100
    %p102 = scmp.ne.s32.totalorder %s91, %s92
    %p103 = scmp.eq.s32.totalorder %s15, 0
    %p104 = por %p102, %p103
    %p105 = scmp.ne.s32.totalorder %s91, %s92
    %p106 = scmp.eq.s32.totalorder %s16, 1
    %p107 = por %p105, %p106
    %p109 = scmp.ne.s32.totalorder %s92, %s108
    %p110 = scmp.eq.s32.totalorder %s16, 0
    %p111 = por %p109, %p110
    %s112 = ssub.s32 %s10, %s17
    %p113 = scmp.eq.s32.totalorder %s112, 0
    %s115 = sadd.s32 %s114, 1
    %s116 = scalar_select %p113, %s114, %s115
    %p119 = pneg %p113
    %p120 = scmp.eq.s32.totalorder %s10, 1
    %p121 = por %p119, %p120
    %p122 = scmp.ne.s32.totalorder %s114, %s117
    %p123 = scmp.eq.s32.totalorder %s10, 0
    %p124 = por %p122, %p123
    %p125 = scmp.ne.s32.totalorder %s114, %s117
    %p126 = scmp.eq.s32.totalorder %s15, 1
    %p127 = por %p125, %p126
    %p128 = scmp.ne.s32.totalorder %s117, %s118
    %p129 = scmp.eq.s32.totalorder %s15, 0
    %p130 = por %p128, %p129
    %p131 = scmp.ne.s32.totalorder %s117, %s118
    %p132 = scmp.eq.s32.totalorder %s16, 1
    %p133 = por %p131, %p132
    %p135 = scmp.ne.s32.totalorder %s118, %s134
    %p136 = scmp.eq.s32.totalorder %s16, 0
    %p137 = por %p135, %p136
    %p138 = scmp.le.s32.totalorder 1, %s10
    %p139 = scmp.lt.s32.totalorder %s10, 3
    %p140 = pnand %p138, %p139
    %p141 = pneg %p140
    // Predicated region
    $region9: #{resnet_forward.12} parent=5 // pred_check
      _
    $region10: #{resnet_forward.12} parent=5 // pred_check_branch
      %143 = sbr.rel (%p140) target = $region12
    $region11: #{resnet_forward.12} parent=5 // pred_region
      %s144 = ssub.s32 %s10, 1
      // Predicated region
      $region13: #{resnet_forward.12} parent=11 // pred_check
        %p145 = pneg %p57
      $region14: #{resnet_forward.12} parent=11 // pred_check_branch
        %147 = sbr.rel (%p145) target = $region16
      $region15: #{resnet_forward.12} parent=11 // pred_region
        _
      $region16: #{resnet_forward.12} parent=11 // pred_fallthru
        _
      // Predicated region
      $region17: #{resnet_forward.12} parent=11 // pred_check
        %p148 = pneg %p78
      $region18: #{resnet_forward.12} parent=11 // pred_check_branch
        %150 = sbr.rel (%p148) target = $region20
      $region19: #{resnet_forward.12} parent=11 // pred_region
        _
      $region20: #{resnet_forward.12} parent=11 // pred_fallthru
        _
    $region12: #{resnet_forward.12} parent=5 // pred_fallthru
      _
    %p151 = scmp.lt.s32.totalorder %s10, 2
    // Predicated region
    $region21: #{resnet_forward.12} parent=5 // pred_check
      %p152 = pneg %p151
    $region22: #{resnet_forward.12} parent=5 // pred_check_branch
      %154 = sbr.rel (%p152) target = $region24
    $region23: #{resnet_forward.12} parent=5 // pred_region
      // Predicated region
      $region25: #{resnet_forward.12} parent=23 // pred_check
        %p155 = pneg %p30
      $region26: #{resnet_forward.12} parent=23 // pred_check_branch
        %157 = sbr.rel (%p155) target = $region28
      $region27: #{resnet_forward.12} parent=23 // pred_region
        %s158 = smul.u32 32, %s10
        %p159 = scmp.lt.s32.totalorder %s158, 63
        %s160 = scalar_select %p159, %s158, 63
        %s161 = smul.addr %s160, 4
        %s162 = scalar_lea.vmem %s0, %s161
        %s163 = smul.u32 32, %s10
      $region28: #{resnet_forward.12} parent=23 // pred_fallthru
        _
      // Predicated region
      $region29: #{resnet_forward.12} parent=23 // pred_check
        %p164 = pneg %p98
      $region30: #{resnet_forward.12} parent=23 // pred_check_branch
        %166 = sbr.rel (%p164) target = $region32
      $region31: #{resnet_forward.12} parent=23 // pred_region
        %s167 = smul.u32 32, %s10
        %p168 = scmp.lt.s32.totalorder %s167, 63
        %s169 = scalar_select %p168, %s167, 63
        %s170 = smul.addr %s169, 4
        %s171 = scalar_lea.vmem %s3, %s170
        %s172 = smul.u32 32, %s10
      $region32: #{resnet_forward.12} parent=23 // pred_fallthru
        _
    $region24: #{resnet_forward.12} parent=5 // pred_fallthru
      _
    %p173 = scmp.le.s32.totalorder 1, %s10
    %p174 = scmp.lt.s32.totalorder %s10, 3
    %p175 = pnand %p173, %p174
    %p176 = pneg %p175
    // Predicated region
    $region33: #{resnet_forward.12} parent=5 // pred_check
      _
    $region34: #{resnet_forward.12} parent=5 // pred_check_branch
      %178 = sbr.rel (%p175) target = $region36
    $region35: #{resnet_forward.12} parent=5 // pred_region
      %s179 = ssub.s32 %s10, 1
      %s180 = smul.u32 32, %s15
      %p181 = scmp.lt.s32.totalorder %s180, 63
      %s182 = scalar_select %p181, %s180, 63
      %s183 = smul.addr %s182, 4
      %s184 = scalar_lea.vmem %s0, %s183
      %p185 = pneg %p36
      %p186 = pneg %p33
      %p187 = pneg %p57
      %p188 = pneg %p54
      %p189 = pneg %p78
      %p190 = pneg %p75
      %s191 = smul.u32 32, %s15
      %p192 = scmp.lt.s32.totalorder %s191, 63
      %s193 = scalar_select %p192, %s191, 63
      %s194 = smul.addr %s193, 4
      %s195 = scalar_lea.vmem %s3, %s194
      %p196 = pneg %p104
      %p197 = pneg %p101
      %p198 = pneg %p130
      %p199 = pneg %p127
      %s200 = smul.u32 32, %s15
      %p201 = scmp.lt.s32.totalorder %s200, 63
      %s202 = scalar_select %p201, %s200, 63
      %s203 = smul.addr %s202, 4
      %s204 = scalar_lea.vmem %s4, %s203
      %s205 = smul.u32 32, %s15
      %p206 = scmp.lt.s32.totalorder %s205, 63
      %s207 = scalar_select %p206, %s205, 63
      %s208 = smul.addr %s207, 4
      %s209 = scalar_lea.vmem %s0, %s208
      %s210 = smul.u32 32, %s15
      %s211 = smul.u32 32, %s15
      %p212 = scmp.lt.s32.totalorder %s211, 63
      %s213 = scalar_select %p212, %s211, 63
      %s214 = smul.addr %s213, 4
      %s215 = scalar_lea.vmem %s3, %s214
      %s216 = smul.u32 32, %s15
      %s217 = smul.u32 32, %s15
      %p218 = scmp.lt.s32.totalorder %s217, 63
      %s219 = scalar_select %p218, %s217, 63
      %s220 = smul.addr %s219, 4
      %s221 = scalar_lea.vmem %s4, %s220
      %s222 = smul.u32 32, %s15
      %v224 = vld [vmem:[%s209] sm:$0xf]
      %v225 = vld [vmem:[%s209 + $0x4] sm:$0xf]
      %v226 = vld [vmem:[%s209 + $0x8] sm:$0xf]
      %v227 = vld [vmem:[%s209 + $0xc] sm:$0xf]
      %v228 = vld [vmem:[%s209 + $0x10] sm:$0xf]
      %v229 = vld [vmem:[%s209 + $0x14] sm:$0xf]
      %v230 = vld [vmem:[%s209 + $0x18] sm:$0xf]
      %v231 = vld [vmem:[%s209 + $0x1c] sm:$0xf]
      %v232 = vld [vmem:[%s209 + $0x20] sm:$0xf]
      %v233 = vld [vmem:[%s209 + $0x24] sm:$0xf]
      %v234 = vld [vmem:[%s209 + $0x28] sm:$0xf]
      %v235 = vld [vmem:[%s209 + $0x2c] sm:$0xf]
      %v236 = vld [vmem:[%s209 + $0x30] sm:$0xf]
      %v237 = vld [vmem:[%s209 + $0x34] sm:$0xf]
      %v238 = vld [vmem:[%s209 + $0x38] sm:$0xf]
      %v239 = vld [vmem:[%s209 + $0x3c] sm:$0xf]
      %v240 = vld [vmem:[%s209 + $0x40] sm:$0xf]
      %v241 = vld [vmem:[%s209 + $0x44] sm:$0xf]
      %v242 = vld [vmem:[%s209 + $0x48] sm:$0xf]
      %v243 = vld [vmem:[%s209 + $0x4c] sm:$0xf]
      %v244 = vld [vmem:[%s209 + $0x50] sm:$0xf]
      %v245 = vld [vmem:[%s209 + $0x54] sm:$0xf]
      %v246 = vld [vmem:[%s209 + $0x58] sm:$0xf]
      %v247 = vld [vmem:[%s209 + $0x5c] sm:$0xf]
      %v248 = vld [vmem:[%s209 + $0x60] sm:$0xf]
      %v249 = vld [vmem:[%s209 + $0x64] sm:$0xf]
      %v250 = vld [vmem:[%s209 + $0x68] sm:$0xf]
      %v251 = vld [vmem:[%s209 + $0x6c] sm:$0xf]
      %v252 = vld [vmem:[%s209 + $0x70] sm:$0xf]
      %v253 = vld [vmem:[%s209 + $0x74] sm:$0xf]
      %v254 = vld [vmem:[%s209 + $0x78] sm:$0xf]
      %v255 = vld [vmem:[%s209 + $0x7c] sm:$0xf]
      %v256 = vld [vmem:[%s1] sm:$0xf]
      %v257 = vld [vmem:[%s1 + $0x4] sm:$0xf]
      %v258 = vld [vmem:[%s1 + $0x8] sm:$0xf]
      %v259 = vld [vmem:[%s1 + $0xc] sm:$0xf]
      %v260 = vld [vmem:[%s1 + $0x10] sm:$0xf]
      %v261 = vld [vmem:[%s1 + $0x14] sm:$0xf]
      %v262 = vld [vmem:[%s1 + $0x18] sm:$0xf]
      %v263 = vld [vmem:[%s1 + $0x1c] sm:$0xf]
      %v264 = vld [vmem:[%s1 + $0x20] sm:$0xf]
      %v265 = vld [vmem:[%s1 + $0x24] sm:$0xf]
      %v266 = vld [vmem:[%s1 + $0x28] sm:$0xf]
      %v267 = vld [vmem:[%s1 + $0x2c] sm:$0xf]
      %v268 = vld [vmem:[%s1 + $0x30] sm:$0xf]
      %v269 = vld [vmem:[%s1 + $0x34] sm:$0xf]
      %v270 = vld [vmem:[%s1 + $0x38] sm:$0xf]
      %v271 = vld [vmem:[%s1 + $0x3c] sm:$0x7]
      %v272 = vld [vmem:[%s2] sm:$0x1]
      %v274 = vlaneseq
      %v275 = vshrl.u32 %v274, 7
      %v276 = vsub.s32 0, %v275
      %v277 = vrot.slane %v272, %v276
      %v311 = vunpack.c.l.b16 %v224
      %v312 = vunpack.c.l.b16 %v225
      %v313 = vunpack.c.l.b16 %v226
      %v314 = vunpack.c.l.b16 %v227
      %v315 = vunpack.c.l.b16 %v228
      %v316 = vunpack.c.l.b16 %v229
      %v317 = vunpack.c.l.b16 %v230
      %v318 = vunpack.c.l.b16 %v231
      %v319 = vunpack.c.l.b16 %v232
      %v320 = vunpack.c.l.b16 %v233
      %v321 = vunpack.c.l.b16 %v234
      %v322 = vunpack.c.l.b16 %v235
      %v323 = vunpack.c.l.b16 %v236
      %v324 = vunpack.c.l.b16 %v237
      %v325 = vunpack.c.l.b16 %v238
      %v326 = vunpack.c.l.b16 %v239
      %v327 = vunpack.c.l.b16 %v240
      %v328 = vunpack.c.l.b16 %v241
      %v329 = vunpack.c.l.b16 %v242
      %v330 = vunpack.c.l.b16 %v243
      %v331 = vunpack.c.l.b16 %v244
      %v332 = vunpack.c.l.b16 %v245
      %v333 = vunpack.c.l.b16 %v246
      %v334 = vunpack.c.l.b16 %v247
      %v335 = vunpack.c.l.b16 %v248
      %v336 = vunpack.c.l.b16 %v249
      %v337 = vunpack.c.l.b16 %v250
      %v338 = vunpack.c.l.b16 %v251
      %v339 = vunpack.c.l.b16 %v252
      %v340 = vunpack.c.l.b16 %v253
      %v341 = vunpack.c.l.b16 %v254
      %v342 = vunpack.c.l.b16 %v255
      %v343 = vpack.c.b16 %v312, %v311
      %v344 = vpack.c.b16 %v314, %v313
      %v345 = vpack.c.b16 %v316, %v315
      %v346 = vpack.c.b16 %v318, %v317
      %v347 = vpack.c.b16 %v320, %v319
      %v348 = vpack.c.b16 %v322, %v321
      %v349 = vpack.c.b16 %v324, %v323
      %v350 = vpack.c.b16 %v326, %v325
      %v351 = vpack.c.b16 %v328, %v327
      %v352 = vpack.c.b16 %v330, %v329
      %v353 = vpack.c.b16 %v332, %v331
      %v354 = vpack.c.b16 %v334, %v333
      %v355 = vpack.c.b16 %v336, %v335
      %v356 = vpack.c.b16 %v338, %v337
      %v357 = vpack.c.b16 %v340, %v339
      %v358 = vpack.c.b16 %v342, %v341
      %v375 = vunpack.c.l.b16 %v256
      %v376 = vunpack.c.l.b16 %v257
      %v377 = vunpack.c.l.b16 %v258
      %v378 = vunpack.c.l.b16 %v259
      %v379 = vunpack.c.l.b16 %v260
      %v380 = vunpack.c.l.b16 %v261
      %v381 = vunpack.c.l.b16 %v262
      %v382 = vunpack.c.l.b16 %v263
      %v383 = vunpack.c.l.b16 %v264
      %v384 = vunpack.c.l.b16 %v265
      %v385 = vunpack.c.l.b16 %v266
      %v386 = vunpack.c.l.b16 %v267
      %v387 = vunpack.c.l.b16 %v268
      %v388 = vunpack.c.l.b16 %v269
      %v389 = vunpack.c.l.b16 %v270
      %v390 = vunpack.c.l.b16 %v271
      %v391 = vpack.c.b16 %v376, %v375
      %v392 = vpack.c.b16 %v378, %v377
      %v393 = vpack.c.b16 %v380, %v379
      %v394 = vpack.c.b16 %v382, %v381
      %v395 = vpack.c.b16 %v384, %v383
      %v396 = vpack.c.b16 %v386, %v385
      %v397 = vpack.c.b16 %v388, %v387
      %v398 = vpack.c.b16 %v390, %v389
      %vm406 = vcmask 1031168
      %v408 = vsel %vm406, %v343, 0
      %v411 = vsel %vm406, %v344, 0
      %v414 = vsel %vm406, %v345, 0
      %v417 = vsel %vm406, %v346, 0
      %v420 = vsel %vm406, %v347, 0
      %v423 = vsel %vm406, %v348, 0
      %v426 = vsel %vm406, %v349, 0
      %v429 = vsel %vm406, %v350, 0
      %v432 = vsel %vm406, %v351, 0
      %v435 = vsel %vm406, %v352, 0
      %v438 = vsel %vm406, %v353, 0
      %v441 = vsel %vm406, %v354, 0
      %v444 = vsel %vm406, %v355, 0
      %v447 = vsel %vm406, %v356, 0
      %v450 = vsel %vm406, %v357, 0
      %v453 = vsel %vm406, %v358, 0
      %vm455 = vcmask 1046528
      %v457 = vsel %vm455, %v398, 0
      %459 = vmatprep.subr.bf16.mxu0 0
      %460 = vmatpush1.bf16.msra.mxu0 %v391
      %461 = vmatprep.subr.bf16.mxu0 0
      %462 = vmatpush1.bf16.msra.mxu0 %v392
      %463 = vmatprep.subr.bf16.mxu0 0
      %464 = vmatpush1.bf16.msra.mxu0 %v393
      %465 = vmatprep.subr.bf16.mxu0 0
      %466 = vmatpush1.bf16.msra.mxu0 %v394
      %467 = vmatprep.subr.bf16.mxu0 0
      %468 = vmatpush1.bf16.msra.mxu0 %v395
      %469 = vmatprep.subr.bf16.mxu0 0
      %470 = vmatpush1.bf16.msra.mxu0 %v396
      %471 = vmatprep.subr.bf16.mxu0 0
      %472 = vmatpush1.bf16.msra.mxu0 %v397
      %473 = vmatprep.subr.bf16.mxu0 0
      %474 = vmatpush1.bf16.msra.mxu0 %v457
      %475 = vmatprep.subr.bf16.mxu0 0
      %476 = vmatpush1.bf16.msra.mxu0 0
      %477 = vmatprep.subr.bf16.mxu0 0
      %478 = vmatpush1.bf16.msra.mxu0 0
      %479 = vmatprep.subr.bf16.mxu0 0
      %480 = vmatpush1.bf16.msra.mxu0 0
      %481 = vmatprep.subr.bf16.mxu0 0
      %482 = vmatpush1.bf16.msra.mxu0 0
      %483 = vmatprep.subr.bf16.mxu0 0
      %484 = vmatpush1.bf16.msra.mxu0 0
      %485 = vmatprep.subr.bf16.mxu0 0
      %486 = vmatpush1.bf16.msra.mxu0 0
      %487 = vmatprep.subr.bf16.mxu0 0
      %488 = vmatpush1.bf16.msra.mxu0 0
      %489 = vmatprep.subr.bf16.mxu0 0
      %490 = vmatpush1.bf16.msra.mxu0 0
      %491 = vmatprep.mubr.bf16.mxu0 0
      %492 = vmatmul.mubr.bf16.gmra.mrb[0].mxu0 %v408
      %v493 = vpop.f32.mrb[0].mxu0
      %v494 = vadd.f32 %v277, %v493
      %v495 = vpop.f32.mrb[0].mxu0
      %v496 = vpop.f32.mrb[0].mxu0
      %v497 = vadd.f32 %v277, %v496
      %v498 = vpop.f32.mrb[0].mxu0
      %499 = vmatprep.mubr.bf16.mxu0 0
      %500 = vmatmul.mubr.bf16.gmra.mrb[0].mxu0 %v411
      %v501 = vpop.f32.mrb[0].mxu0
      %v502 = vadd.f32 %v277, %v501
      %v503 = vpop.f32.mrb[0].mxu0
      %v504 = vpop.f32.mrb[0].mxu0
      %v505 = vadd.f32 %v277, %v504
      %v506 = vpop.f32.mrb[0].mxu0
      %507 = vmatprep.mubr.bf16.mxu0 0
      %508 = vmatmul.mubr.bf16.gmra.mrb[0].mxu0 %v414
      %v509 = vpop.f32.mrb[0].mxu0
      %v510 = vadd.f32 %v277, %v509
      %v511 = vpop.f32.mrb[0].mxu0
      %v512 = vpop.f32.mrb[0].mxu0
      %v513 = vadd.f32 %v277, %v512
      %v514 = vpop.f32.mrb[0].mxu0
      %515 = vmatprep.mubr.bf16.mxu0 0
      %516 = vmatmul.mubr.bf16.gmra.mrb[0].mxu0 %v417
      %v517 = vpop.f32.mrb[0].mxu0
      %v518 = vadd.f32 %v277, %v517
      %v519 = vpop.f32.mrb[0].mxu0
      %v520 = vpop.f32.mrb[0].mxu0
      %v521 = vadd.f32 %v277, %v520
      %v522 = vpop.f32.mrb[0].mxu0
      %523 = vmatprep.mubr.bf16.mxu0 0
      %524 = vmatmul.mubr.bf16.gmra.mrb[0].mxu0 %v420
      %v525 = vpop.f32.mrb[0].mxu0
      %v526 = vadd.f32 %v277, %v525
      %v527 = vpop.f32.mrb[0].mxu0
      %v528 = vpop.f32.mrb[0].mxu0
      %v529 = vadd.f32 %v277, %v528
      %v530 = vpop.f32.mrb[0].mxu0
      %531 = vmatprep.mubr.bf16.mxu0 0
      %532 = vmatmul.mubr.bf16.gmra.mrb[0].mxu0 %v423
      %v533 = vpop.f32.mrb[0].mxu0
      %v534 = vadd.f32 %v277, %v533
      %v535 = vpop.f32.mrb[0].mxu0
      %v536 = vpop.f32.mrb[0].mxu0
      %v537 = vadd.f32 %v277, %v536
      %v538 = vpop.f32.mrb[0].mxu0
      %539 = vmatprep.mubr.bf16.mxu0 0
      %540 = vmatmul.mubr.bf16.gmra.mrb[0].mxu0 %v426
      %v541 = vpop.f32.mrb[0].mxu0
      %v542 = vadd.f32 %v277, %v541
      %v543 = vpop.f32.mrb[0].mxu0
      %v544 = vpop.f32.mrb[0].mxu0
      %v545 = vadd.f32 %v277, %v544
      %v546 = vpop.f32.mrb[0].mxu0
      %547 = vmatprep.mubr.bf16.mxu0 0
      %548 = vmatmul.mubr.bf16.gmra.mrb[0].mxu0 %v429
      %v549 = vpop.f32.mrb[0].mxu0
      %v550 = vadd.f32 %v277, %v549
      %v551 = vpop.f32.mrb[0].mxu0
      %v552 = vpop.f32.mrb[0].mxu0
      %v553 = vadd.f32 %v277, %v552
      %v554 = vpop.f32.mrb[0].mxu0
      %555 = vmatprep.mubr.bf16.mxu0 0
      %556 = vmatmul.mubr.bf16.gmra.mrb[0].mxu0 %v432
      %v557 = vpop.f32.mrb[0].mxu0
      %v558 = vadd.f32 %v277, %v557
      %v559 = vpop.f32.mrb[0].mxu0
      %v560 = vpop.f32.mrb[0].mxu0
      %v561 = vadd.f32 %v277, %v560
      %v562 = vpop.f32.mrb[0].mxu0
      %563 = vmatprep.mubr.bf16.mxu0 0
      %564 = vmatmul.mubr.bf16.gmra.mrb[0].mxu0 %v435
      %v565 = vpop.f32.mrb[0].mxu0
      %v566 = vadd.f32 %v277, %v565
      %v567 = vpop.f32.mrb[0].mxu0
      %v568 = vpop.f32.mrb[0].mxu0
      %v569 = vadd.f32 %v277, %v568
      %v570 = vpop.f32.mrb[0].mxu0
      %571 = vmatprep.mubr.bf16.mxu0 0
      %572 = vmatmul.mubr.bf16.gmra.mrb[0].mxu0 %v438
      %v573 = vpop.f32.mrb[0].mxu0
      %v574 = vadd.f32 %v277, %v573
      %v575 = vpop.f32.mrb[0].mxu0
      %v576 = vpop.f32.mrb[0].mxu0
      %v577 = vadd.f32 %v277, %v576
      %v578 = vpop.f32.mrb[0].mxu0
      %579 = vmatprep.mubr.bf16.mxu0 0
      %580 = vmatmul.mubr.bf16.gmra.mrb[0].mxu0 %v441
      %v581 = vpop.f32.mrb[0].mxu0
      %v582 = vadd.f32 %v277, %v581
      %v583 = vpop.f32.mrb[0].mxu0
      %v584 = vpop.f32.mrb[0].mxu0
      %v585 = vadd.f32 %v277, %v584
      %v586 = vpop.f32.mrb[0].mxu0
      %587 = vmatprep.mubr.bf16.mxu0 0
      %588 = vmatmul.mubr.bf16.gmra.mrb[0].mxu0 %v444
      %v589 = vpop.f32.mrb[0].mxu0
      %v590 = vadd.f32 %v277, %v589
      %v591 = vpop.f32.mrb[0].mxu0
      %v592 = vpop.f32.mrb[0].mxu0
      %v593 = vadd.f32 %v277, %v592
      %v594 = vpop.f32.mrb[0].mxu0
      %595 = vmatprep.mubr.bf16.mxu0 0
      %596 = vmatmul.mubr.bf16.gmra.mrb[0].mxu0 %v447
      %v597 = vpop.f32.mrb[0].mxu0
      %v598 = vadd.f32 %v277, %v597
      %v599 = vpop.f32.mrb[0].mxu0
      %v600 = vpop.f32.mrb[0].mxu0
      %v601 = vadd.f32 %v277, %v600
      %v602 = vpop.f32.mrb[0].mxu0
      %603 = vmatprep.mubr.bf16.mxu0 0
      %604 = vmatmul.mubr.bf16.gmra.mrb[0].mxu0 %v450
      %v605 = vpop.f32.mrb[0].mxu0
      %v606 = vadd.f32 %v277, %v605
      %v607 = vpop.f32.mrb[0].mxu0
      %v608 = vpop.f32.mrb[0].mxu0
      %v609 = vadd.f32 %v277, %v608
      %v610 = vpop.f32.mrb[0].mxu0
      %611 = vmatprep.mubr.bf16.mxu0 0
      %612 = vmatmul.mubr.bf16.gmra.mrb[0].mxu0 %v453
      %v613 = vpop.f32.mrb[0].mxu0
      %v614 = vadd.f32 %v277, %v613
      %v615 = vpop.f32.mrb[0].mxu0
      %v616 = vpop.f32.mrb[0].mxu0
      %v617 = vadd.f32 %v277, %v616
      %v618 = vpop.f32.mrb[0].mxu0
      %619 = vdwg.mxu0
      %v620 = vld [vmem:[%s215] sm:$0xf]
      %v621 = vld [vmem:[%s215 + $0x4] sm:$0xf]
      %v622 = vld [vmem:[%s215 + $0x8] sm:$0xf]
      %v623 = vld [vmem:[%s215 + $0xc] sm:$0xf]
      %v624 = vld [vmem:[%s215 + $0x10] sm:$0xf]
      %v625 = vld [vmem:[%s215 + $0x14] sm:$0xf]
      %v626 = vld [vmem:[%s215 + $0x18] sm:$0xf]
      %v627 = vld [vmem:[%s215 + $0x1c] sm:$0xf]
      %v628 = vld [vmem:[%s215 + $0x20] sm:$0xf]
      %v629 = vld [vmem:[%s215 + $0x24] sm:$0xf]
      %v630 = vld [vmem:[%s215 + $0x28] sm:$0xf]
      %v631 = vld [vmem:[%s215 + $0x2c] sm:$0xf]
      %v632 = vld [vmem:[%s215 + $0x30] sm:$0xf]
      %v633 = vld [vmem:[%s215 + $0x34] sm:$0xf]
      %v634 = vld [vmem:[%s215 + $0x38] sm:$0xf]
      %v635 = vld [vmem:[%s215 + $0x3c] sm:$0xf]
      %v636 = vld [vmem:[%s215 + $0x40] sm:$0xf]
      %v637 = vld [vmem:[%s215 + $0x44] sm:$0xf]
      %v638 = vld [vmem:[%s215 + $0x48] sm:$0xf]
      %v639 = vld [vmem:[%s215 + $0x4c] sm:$0xf]
      %v640 = vld [vmem:[%s215 + $0x50] sm:$0xf]
      %v641 = vld [vmem:[%s215 + $0x54] sm:$0xf]
      %v642 = vld [vmem:[%s215 + $0x58] sm:$0xf]
      %v643 = vld [vmem:[%s215 + $0x5c] sm:$0xf]
      %v644 = vld [vmem:[%s215 + $0x60] sm:$0xf]
      %v645 = vld [vmem:[%s215 + $0x64] sm:$0xf]
      %v646 = vld [vmem:[%s215 + $0x68] sm:$0xf]
      %v647 = vld [vmem:[%s215 + $0x6c] sm:$0xf]
      %v648 = vld [vmem:[%s215 + $0x70] sm:$0xf]
      %v649 = vld [vmem:[%s215 + $0x74] sm:$0xf]
      %v650 = vld [vmem:[%s215 + $0x78] sm:$0xf]
      %v651 = vld [vmem:[%s215 + $0x7c] sm:$0xf]
      %v652 = vunpack.c.l.bf16 %v620
      %v653 = vunpack.c.l.bf16 %v621
      %v654 = vunpack.c.l.bf16 %v622
      %v655 = vunpack.c.l.bf16 %v623
      %v656 = vunpack.c.l.bf16 %v624
      %v657 = vunpack.c.l.bf16 %v625
      %v658 = vunpack.c.l.bf16 %v626
      %v659 = vunpack.c.l.bf16 %v627
      %v660 = vunpack.c.l.bf16 %v628
      %v661 = vunpack.c.l.bf16 %v629
      %v662 = vunpack.c.l.bf16 %v630
      %v663 = vunpack.c.l.bf16 %v631
      %v664 = vunpack.c.l.bf16 %v632
      %v665 = vunpack.c.l.bf16 %v633
      %v666 = vunpack.c.l.bf16 %v634
      %v667 = vunpack.c.l.bf16 %v635
      %v668 = vunpack.c.l.bf16 %v636
      %v669 = vunpack.c.l.bf16 %v637
      %v670 = vunpack.c.l.bf16 %v638
      %v671 = vunpack.c.l.bf16 %v639
      %v672 = vunpack.c.l.bf16 %v640
      %v673 = vunpack.c.l.bf16 %v641
      %v674 = vunpack.c.l.bf16 %v642
      %v675 = vunpack.c.l.bf16 %v643
      %v676 = vunpack.c.l.bf16 %v644
      %v677 = vunpack.c.l.bf16 %v645
      %v678 = vunpack.c.l.bf16 %v646
      %v679 = vunpack.c.l.bf16 %v647
      %v680 = vunpack.c.l.bf16 %v648
      %v681 = vunpack.c.l.bf16 %v649
      %v682 = vunpack.c.l.bf16 %v650
      %v683 = vunpack.c.l.bf16 %v651
      %v684 = vadd.f32 %v494, %v652
      %v685 = vadd.f32 %v497, %v653
      %v686 = vadd.f32 %v502, %v654
      %v687 = vadd.f32 %v505, %v655
      %v688 = vadd.f32 %v510, %v656
      %v689 = vadd.f32 %v513, %v657
      %v690 = vadd.f32 %v518, %v658
      %v691 = vadd.f32 %v521, %v659
      %v692 = vadd.f32 %v526, %v660
      %v693 = vadd.f32 %v529, %v661
      %v694 = vadd.f32 %v534, %v662
      %v695 = vadd.f32 %v537, %v663
      %v696 = vadd.f32 %v542, %v664
      %v697 = vadd.f32 %v545, %v665
      %v698 = vadd.f32 %v550, %v666
      %v699 = vadd.f32 %v553, %v667
      %v700 = vadd.f32 %v558, %v668
      %v701 = vadd.f32 %v561, %v669
      %v702 = vadd.f32 %v566, %v670
      %v703 = vadd.f32 %v569, %v671
      %v704 = vadd.f32 %v574, %v672
      %v705 = vadd.f32 %v577, %v673
      %v706 = vadd.f32 %v582, %v674
      %v707 = vadd.f32 %v585, %v675
      %v708 = vadd.f32 %v590, %v676
      %v709 = vadd.f32 %v593, %v677
      %v710 = vadd.f32 %v598, %v678
      %v711 = vadd.f32 %v601, %v679
      %v712 = vadd.f32 %v606, %v680
      %v713 = vadd.f32 %v609, %v681
      %v714 = vadd.f32 %v614, %v682
      %v715 = vadd.f32 %v617, %v683
      %v716 = vmax.f32 %v684, 0.0
      %v717 = vmax.f32 %v685, 0.0
      %v718 = vmax.f32 %v686, 0.0
      %v719 = vmax.f32 %v687, 0.0
      %v720 = vmax.f32 %v688, 0.0
      %v721 = vmax.f32 %v689, 0.0
      %v722 = vmax.f32 %v690, 0.0
      %v723 = vmax.f32 %v691, 0.0
      %v724 = vmax.f32 %v692, 0.0
      %v725 = vmax.f32 %v693, 0.0
      %v726 = vmax.f32 %v694, 0.0
      %v727 = vmax.f32 %v695, 0.0
      %v728 = vmax.f32 %v696, 0.0
      %v729 = vmax.f32 %v697, 0.0
      %v730 = vmax.f32 %v698, 0.0
      %v731 = vmax.f32 %v699, 0.0
      %v732 = vmax.f32 %v700, 0.0
      %v733 = vmax.f32 %v701, 0.0
      %v734 = vmax.f32 %v702, 0.0
      %v735 = vmax.f32 %v703, 0.0
      %v736 = vmax.f32 %v704, 0.0
      %v737 = vmax.f32 %v705, 0.0
      %v738 = vmax.f32 %v706, 0.0
      %v739 = vmax.f32 %v707, 0.0
      %v740 = vmax.f32 %v708, 0.0
      %v741 = vmax.f32 %v709, 0.0
      %v742 = vmax.f32 %v710, 0.0
      %v743 = vmax.f32 %v711, 0.0
      %v744 = vmax.f32 %v712, 0.0
      %v745 = vmax.f32 %v713, 0.0
      %v746 = vmax.f32 %v714, 0.0
      %v747 = vmax.f32 %v715, 0.0
      %v748 = vpack.c.bf16 %v717, %v716
      %v749 = vpack.c.bf16 %v719, %v718
      %v750 = vpack.c.bf16 %v721, %v720
      %v751 = vpack.c.bf16 %v723, %v722
      %v752 = vpack.c.bf16 %v725, %v724
      %v753 = vpack.c.bf16 %v727, %v726
      %v754 = vpack.c.bf16 %v729, %v728
      %v755 = vpack.c.bf16 %v731, %v730
      %v756 = vpack.c.bf16 %v733, %v732
      %v757 = vpack.c.bf16 %v735, %v734
      %v758 = vpack.c.bf16 %v737, %v736
      %v759 = vpack.c.bf16 %v739, %v738
      %v760 = vpack.c.bf16 %v741, %v740
      %v761 = vpack.c.bf16 %v743, %v742
      %v762 = vpack.c.bf16 %v745, %v744
      %v763 = vpack.c.bf16 %v747, %v746
      %v780 = vunpack.c.l.b16 %v748
      %v781 = vunpack.c.h.b16 %v748
      %v782 = vunpack.c.l.b16 %v749
      %v783 = vunpack.c.h.b16 %v749
      %v784 = vunpack.c.l.b16 %v750
      %v785 = vunpack.c.h.b16 %v750
      %v786 = vunpack.c.l.b16 %v751
      %v787 = vunpack.c.h.b16 %v751
      %v788 = vunpack.c.l.b16 %v752
      %v789 = vunpack.c.h.b16 %v752
      %v790 = vunpack.c.l.b16 %v753
      %v791 = vunpack.c.h.b16 %v753
      %v792 = vunpack.c.l.b16 %v754
      %v793 = vunpack.c.h.b16 %v754
      %v794 = vunpack.c.l.b16 %v755
      %v795 = vunpack.c.h.b16 %v755
      %v796 = vunpack.c.l.b16 %v756
      %v797 = vunpack.c.h.b16 %v756
      %v798 = vunpack.c.l.b16 %v757
      %v799 = vunpack.c.h.b16 %v757
      %v800 = vunpack.c.l.b16 %v758
      %v801 = vunpack.c.h.b16 %v758
      %v802 = vunpack.c.l.b16 %v759
      %v803 = vunpack.c.h.b16 %v759
      %v804 = vunpack.c.l.b16 %v760
      %v805 = vunpack.c.h.b16 %v760
      %v806 = vunpack.c.l.b16 %v761
      %v807 = vunpack.c.h.b16 %v761
      %v808 = vunpack.c.l.b16 %v762
      %v809 = vunpack.c.h.b16 %v762
      %v810 = vunpack.c.l.b16 %v763
      %v811 = vunpack.c.h.b16 %v763
      %v812 = vpack.c.b16 %v780, %v780
      %v813 = vpack.c.b16 %v781, %v781
      %v814 = vpack.c.b16 %v782, %v782
      %v815 = vpack.c.b16 %v783, %v783
      %v816 = vpack.c.b16 %v784, %v784
      %v817 = vpack.c.b16 %v785, %v785
      %v818 = vpack.c.b16 %v786, %v786
      %v819 = vpack.c.b16 %v787, %v787
      %v820 = vpack.c.b16 %v788, %v788
      %v821 = vpack.c.b16 %v789, %v789
      %v822 = vpack.c.b16 %v790, %v790
      %v823 = vpack.c.b16 %v791, %v791
      %v824 = vpack.c.b16 %v792, %v792
      %v825 = vpack.c.b16 %v793, %v793
      %v826 = vpack.c.b16 %v794, %v794
      %v827 = vpack.c.b16 %v795, %v795
      %v828 = vpack.c.b16 %v796, %v796
      %v829 = vpack.c.b16 %v797, %v797
      %v830 = vpack.c.b16 %v798, %v798
      %v831 = vpack.c.b16 %v799, %v799
      %v832 = vpack.c.b16 %v800, %v800
      %v833 = vpack.c.b16 %v801, %v801
      %v834 = vpack.c.b16 %v802, %v802
      %v835 = vpack.c.b16 %v803, %v803
      %v836 = vpack.c.b16 %v804, %v804
      %v837 = vpack.c.b16 %v805, %v805
      %v838 = vpack.c.b16 %v806, %v806
      %v839 = vpack.c.b16 %v807, %v807
      %v840 = vpack.c.b16 %v808, %v808
      %v841 = vpack.c.b16 %v809, %v809
      %v842 = vpack.c.b16 %v810, %v810
      %v843 = vpack.c.b16 %v811, %v811
      %876 = vst [vmem:[%s221] sm:$0xf] %v812
      %877 = vst [vmem:[%s221 + $0x4] sm:$0xf] %v813
      %878 = vst [vmem:[%s221 + $0x8] sm:$0xf] %v814
      %879 = vst [vmem:[%s221 + $0xc] sm:$0xf] %v815
      %880 = vst [vmem:[%s221 + $0x10] sm:$0xf] %v816
      %881 = vst [vmem:[%s221 + $0x14] sm:$0xf] %v817
      %882 = vst [vmem:[%s221 + $0x18] sm:$0xf] %v818
      %883 = vst [vmem:[%s221 + $0x1c] sm:$0xf] %v819
      %884 = vst [vmem:[%s221 + $0x20] sm:$0xf] %v820
      %885 = vst [vmem:[%s221 + $0x24] sm:$0xf] %v821
      %886 = vst [vmem:[%s221 + $0x28] sm:$0xf] %v822
      %887 = vst [vmem:[%s221 + $0x2c] sm:$0xf] %v823
      %888 = vst [vmem:[%s221 + $0x30] sm:$0xf] %v824
      %889 = vst [vmem:[%s221 + $0x34] sm:$0xf] %v825
      %890 = vst [vmem:[%s221 + $0x38] sm:$0xf] %v826
      %891 = vst [vmem:[%s221 + $0x3c] sm:$0xf] %v827
      %892 = vst [vmem:[%s221 + $0x40] sm:$0xf] %v828
      %893 = vst [vmem:[%s221 + $0x44] sm:$0xf] %v829
      %894 = vst [vmem:[%s221 + $0x48] sm:$0xf] %v830
      %895 = vst [vmem:[%s221 + $0x4c] sm:$0xf] %v831
      %896 = vst [vmem:[%s221 + $0x50] sm:$0xf] %v832
      %897 = vst [vmem:[%s221 + $0x54] sm:$0xf] %v833
      %898 = vst [vmem:[%s221 + $0x58] sm:$0xf] %v834
      %899 = vst [vmem:[%s221 + $0x5c] sm:$0xf] %v835
      %900 = vst [vmem:[%s221 + $0x60] sm:$0xf] %v836
      %901 = vst [vmem:[%s221 + $0x64] sm:$0xf] %v837
      %902 = vst [vmem:[%s221 + $0x68] sm:$0xf] %v838
      %903 = vst [vmem:[%s221 + $0x6c] sm:$0xf] %v839
      %904 = vst [vmem:[%s221 + $0x70] sm:$0xf] %v840
      %905 = vst [vmem:[%s221 + $0x74] sm:$0xf] %v841
      %906 = vst [vmem:[%s221 + $0x78] sm:$0xf] %v842
      %907 = vst [vmem:[%s221 + $0x7c] sm:$0xf] %v843
      %s908 = smul.u32 32, %s15
      %p909 = scmp.lt.s32.totalorder %s908, 63
      %s910 = scalar_select %p909, %s908, 63
      %s911 = smul.addr %s910, 4
      %s912 = scalar_lea.vmem %s4, %s911
      // Predicated region
      $region37: #{resnet_forward.12} parent=35 // pred_check
        %p913 = pneg %p127
      $region38: #{resnet_forward.12} parent=35 // pred_check_branch
        %915 = sbr.rel (%p913) target = $region40
      $region39: #{resnet_forward.12} parent=35 // pred_region
        %s916 = smul.u32 32, %s15
      $region40: #{resnet_forward.12} parent=35 // pred_fallthru
        _
    $region36: #{resnet_forward.12} parent=5 // pred_fallthru
      _
    %p917 = scmp.le.s32.totalorder 2, %s10
    // Predicated region
    $region41: #{resnet_forward.12} parent=5 // pred_check
      %p918 = pneg %p917
    $region42: #{resnet_forward.12} parent=5 // pred_check_branch
      %920 = sbr.rel (%p918) target = $region44
    $region43: #{resnet_forward.12} parent=5 // pred_region
      %s921 = ssub.s32 %s10, 2
      // Predicated region
      $region45: #{resnet_forward.12} parent=43 // pred_check
        %p922 = pneg %p133
      $region46: #{resnet_forward.12} parent=43 // pred_check_branch
        %924 = sbr.rel (%p922) target = $region48
      $region47: #{resnet_forward.12} parent=43 // pred_region
        %s925 = smul.u32 32, %s16
        %p926 = scmp.lt.s32.totalorder %s925, 63
        %s927 = scalar_select %p926, %s925, 63
        %s928 = smul.addr %s927, 4
        %s929 = scalar_lea.vmem %s4, %s928
      $region48: #{resnet_forward.12} parent=43 // pred_fallthru
        _
    $region44: #{resnet_forward.12} parent=5 // pred_fallthru
      _
  $region6: #{resnet_forward.12} parent=0 // loop_footer
    %s14 = sadd.s32 1, %s10
  $region7: #{resnet_forward.12} parent=0 // loop_footer_branch
    %9 = sbr.rel target = $region3
  $region8: #{resnet_forward.12} parent=0 // loop_exit
    _

// kernel: resnet_forward.13
$region0: #{resnet_forward.13}
  #allocation0 [shape = 'u32[]', space=smem, size = 0x4, offset = 0x4, fixed_abs, tag = 'smem constant byte address 0x4 - core index']
  #allocation1 [shape = 'u32[144,128]{1,0:T(1,128)}', space=vmem, size = 0x12000, scoped, tag = 'internal scratch']
  %s0 = inlined_call_operand.vmem [shape: bf16[128,126], index: 0, kind: input, shape index: {}]
  %s1 = inlined_call_operand.vmem [shape: bf16[126,128], index: 1, kind: input, shape index: {}]
  %s2 = inlined_call_operand.vmem [shape: f32[1,128], index: 2, kind: input, shape index: {}]
  %s3 = inlined_call_operand.vmem [shape: bf16[128,128], index: 3, kind: output, shape index: {}]
  %s4 = sld [smem:[#allocation0]]
  $region22: #{resnet_forward.13} parent=0
    _
  %s6 = ssub.s32 1, %s4
  %s7 = scalar_select 0, %s6, %s4
  // Predicated region
  $region2: #{resnet_forward.13} parent=0 // pred_check
    _
  $region3: #{resnet_forward.13} parent=0 // pred_check_branch
    %9 = sbr.rel (0) target = $region5
  $region4: #{resnet_forward.13} parent=0 // pred_region
    _
  $region5: #{resnet_forward.13} parent=0 // pred_fallthru
    _
  // Predicated region
  $region6: #{resnet_forward.13} parent=0 // pred_check
    _
  $region7: #{resnet_forward.13} parent=0 // pred_check_branch
    %11 = sbr.rel (0) target = $region9
  $region8: #{resnet_forward.13} parent=0 // pred_region
    _
  $region9: #{resnet_forward.13} parent=0 // pred_fallthru
    _
  // Predicated region
  $region10: #{resnet_forward.13} parent=0 // pred_check
    _
  $region11: #{resnet_forward.13} parent=0 // pred_check_branch
    %13 = sbr.rel (0) target = $region13
  $region12: #{resnet_forward.13} parent=0 // pred_region
    _
  $region13: #{resnet_forward.13} parent=0 // pred_fallthru
    _
  %v15 = vld [vmem:[%s0] sm:$0xf]
  %v16 = vld [vmem:[%s0 + $0x4] sm:$0xf]
  %v17 = vld [vmem:[%s0 + $0x8] sm:$0xf]
  %v18 = vld [vmem:[%s0 + $0xc] sm:$0xf]
  %v19 = vld [vmem:[%s0 + $0x10] sm:$0xf]
  %v20 = vld [vmem:[%s0 + $0x14] sm:$0xf]
  %v21 = vld [vmem:[%s0 + $0x18] sm:$0xf]
  %v22 = vld [vmem:[%s0 + $0x1c] sm:$0xf]
  %v23 = vld [vmem:[%s0 + $0x20] sm:$0xf]
  %v24 = vld [vmem:[%s0 + $0x24] sm:$0xf]
  %v25 = vld [vmem:[%s0 + $0x28] sm:$0xf]
  %v26 = vld [vmem:[%s0 + $0x2c] sm:$0xf]
  %v27 = vld [vmem:[%s0 + $0x30] sm:$0xf]
  %v28 = vld [vmem:[%s0 + $0x34] sm:$0xf]
  %v29 = vld [vmem:[%s0 + $0x38] sm:$0xf]
  %v30 = vld [vmem:[%s0 + $0x3c] sm:$0xf]
  %v31 = vld [vmem:[%s1] sm:$0xf]
  %v32 = vld [vmem:[%s1 + $0x4] sm:$0xf]
  %v33 = vld [vmem:[%s1 + $0x8] sm:$0xf]
  %v34 = vld [vmem:[%s1 + $0xc] sm:$0xf]
  %v35 = vld [vmem:[%s1 + $0x10] sm:$0xf]
  %v36 = vld [vmem:[%s1 + $0x14] sm:$0xf]
  %v37 = vld [vmem:[%s1 + $0x18] sm:$0xf]
  %v38 = vld [vmem:[%s1 + $0x1c] sm:$0xf]
  %v39 = vld [vmem:[%s1 + $0x20] sm:$0xf]
  %v40 = vld [vmem:[%s1 + $0x24] sm:$0xf]
  %v41 = vld [vmem:[%s1 + $0x28] sm:$0xf]
  %v42 = vld [vmem:[%s1 + $0x2c] sm:$0xf]
  %v43 = vld [vmem:[%s1 + $0x30] sm:$0xf]
  %v44 = vld [vmem:[%s1 + $0x34] sm:$0xf]
  %v45 = vld [vmem:[%s1 + $0x38] sm:$0xf]
  %v46 = vld [vmem:[%s1 + $0x3c] sm:$0x7]
  %v47 = vld [vmem:[%s2] sm:$0x1]
  %v49 = vlaneseq
  %v50 = vshrl.u32 %v49, 7
  %v51 = vsub.s32 0, %v50
  %v52 = vrot.slane %v47, %v51
  %v70 = vunpack.c.l.b16 %v15
  %v71 = vunpack.c.l.b16 %v16
  %v72 = vunpack.c.l.b16 %v17
  %v73 = vunpack.c.l.b16 %v18
  %v74 = vunpack.c.l.b16 %v19
  %v75 = vunpack.c.l.b16 %v20
  %v76 = vunpack.c.l.b16 %v21
  %v77 = vunpack.c.l.b16 %v22
  %v78 = vunpack.c.l.b16 %v23
  %v79 = vunpack.c.l.b16 %v24
  %v80 = vunpack.c.l.b16 %v25
  %v81 = vunpack.c.l.b16 %v26
  %v82 = vunpack.c.l.b16 %v27
  %v83 = vunpack.c.l.b16 %v28
  %v84 = vunpack.c.l.b16 %v29
  %v85 = vunpack.c.l.b16 %v30
  %v86 = vpack.c.b16 %v71, %v70
  %v87 = vpack.c.b16 %v73, %v72
  %v88 = vpack.c.b16 %v75, %v74
  %v89 = vpack.c.b16 %v77, %v76
  %v90 = vpack.c.b16 %v79, %v78
  %v91 = vpack.c.b16 %v81, %v80
  %v92 = vpack.c.b16 %v83, %v82
  %v93 = vpack.c.b16 %v85, %v84
  %v110 = vunpack.c.l.b16 %v31
  %v111 = vunpack.c.l.b16 %v32
  %v112 = vunpack.c.l.b16 %v33
  %v113 = vunpack.c.l.b16 %v34
  %v114 = vunpack.c.l.b16 %v35
  %v115 = vunpack.c.l.b16 %v36
  %v116 = vunpack.c.l.b16 %v37
  %v117 = vunpack.c.l.b16 %v38
  %v118 = vunpack.c.l.b16 %v39
  %v119 = vunpack.c.l.b16 %v40
  %v120 = vunpack.c.l.b16 %v41
  %v121 = vunpack.c.l.b16 %v42
  %v122 = vunpack.c.l.b16 %v43
  %v123 = vunpack.c.l.b16 %v44
  %v124 = vunpack.c.l.b16 %v45
  %v125 = vunpack.c.l.b16 %v46
  %v126 = vpack.c.b16 %v111, %v110
  %v127 = vpack.c.b16 %v113, %v112
  %v128 = vpack.c.b16 %v115, %v114
  %v129 = vpack.c.b16 %v117, %v116
  %v130 = vpack.c.b16 %v119, %v118
  %v131 = vpack.c.b16 %v121, %v120
  %v132 = vpack.c.b16 %v123, %v122
  %v133 = vpack.c.b16 %v125, %v124
  %vm141 = vcmask 1031168
  %v143 = vsel %vm141, %v86, 0
  %v146 = vsel %vm141, %v87, 0
  %v149 = vsel %vm141, %v88, 0
  %v152 = vsel %vm141, %v89, 0
  %v155 = vsel %vm141, %v90, 0
  %v158 = vsel %vm141, %v91, 0
  %v161 = vsel %vm141, %v92, 0
  %v164 = vsel %vm141, %v93, 0
  %vm166 = vcmask 1046528
  %v168 = vsel %vm166, %v133, 0
  %170 = vmatprep.subr.bf16.mxu0 0
  %171 = vmatpush1.bf16.msra.mxu0 %v126
  %172 = vmatprep.subr.bf16.mxu0 0
  %173 = vmatpush1.bf16.msra.mxu0 %v127
  %174 = vmatprep.subr.bf16.mxu0 0
  %175 = vmatpush1.bf16.msra.mxu0 %v128
  %176 = vmatprep.subr.bf16.mxu0 0
  %177 = vmatpush1.bf16.msra.mxu0 %v129
  %178 = vmatprep.subr.bf16.mxu0 0
  %179 = vmatpush1.bf16.msra.mxu0 %v130
  %180 = vmatprep.subr.bf16.mxu0 0
  %181 = vmatpush1.bf16.msra.mxu0 %v131
  %182 = vmatprep.subr.bf16.mxu0 0
  %183 = vmatpush1.bf16.msra.mxu0 %v132
  %184 = vmatprep.subr.bf16.mxu0 0
  %185 = vmatpush1.bf16.msra.mxu0 %v168
  %186 = vmatprep.subr.bf16.mxu0 0
  %187 = vmatpush1.bf16.msra.mxu0 0
  %188 = vmatprep.subr.bf16.mxu0 0
  %189 = vmatpush1.bf16.msra.mxu0 0
  %190 = vmatprep.subr.bf16.mxu0 0
  %191 = vmatpush1.bf16.msra.mxu0 0
  %192 = vmatprep.subr.bf16.mxu0 0
  %193 = vmatpush1.bf16.msra.mxu0 0
  %194 = vmatprep.subr.bf16.mxu0 0
  %195 = vmatpush1.bf16.msra.mxu0 0
  %196 = vmatprep.subr.bf16.mxu0 0
  %197 = vmatpush1.bf16.msra.mxu0 0
  %198 = vmatprep.subr.bf16.mxu0 0
  %199 = vmatpush1.bf16.msra.mxu0 0
  %200 = vmatprep.subr.bf16.mxu0 0
  %201 = vmatpush1.bf16.msra.mxu0 0
  %202 = vmatprep.mubr.bf16.mxu0 0
  %203 = vmatmul.mubr.bf16.gmra.mrb[0].mxu0 %v143
  %v204 = vpop.f32.mrb[0].mxu0
  %v205 = vadd.f32 %v52, %v204
  %v206 = vpop.f32.mrb[0].mxu0
  %v207 = vpop.f32.mrb[0].mxu0
  %v208 = vadd.f32 %v52, %v207
  %v209 = vpop.f32.mrb[0].mxu0
  %210 = vmatprep.mubr.bf16.mxu0 0
  %211 = vmatmul.mubr.bf16.gmra.mrb[0].mxu0 %v146
  %v212 = vpop.f32.mrb[0].mxu0
  %v213 = vadd.f32 %v52, %v212
  %v214 = vpop.f32.mrb[0].mxu0
  %v215 = vpop.f32.mrb[0].mxu0
  %v216 = vadd.f32 %v52, %v215
  %v217 = vpop.f32.mrb[0].mxu0
  %218 = vmatprep.mubr.bf16.mxu0 0
  %219 = vmatmul.mubr.bf16.gmra.mrb[0].mxu0 %v149
  %v220 = vpop.f32.mrb[0].mxu0
  %v221 = vadd.f32 %v52, %v220
  %v222 = vpop.f32.mrb[0].mxu0
  %v223 = vpop.f32.mrb[0].mxu0
  %v224 = vadd.f32 %v52, %v223
  %v225 = vpop.f32.mrb[0].mxu0
  %226 = vmatprep.mubr.bf16.mxu0 0
  %227 = vmatmul.mubr.bf16.gmra.mrb[0].mxu0 %v152
  %v228 = vpop.f32.mrb[0].mxu0
  %v229 = vadd.f32 %v52, %v228
  %v230 = vpop.f32.mrb[0].mxu0
  %v231 = vpop.f32.mrb[0].mxu0
  %v232 = vadd.f32 %v52, %v231
  %v233 = vpop.f32.mrb[0].mxu0
  %234 = vmatprep.mubr.bf16.mxu0 0
  %235 = vmatmul.mubr.bf16.gmra.mrb[0].mxu0 %v155
  %v236 = vpop.f32.mrb[0].mxu0
  %v237 = vadd.f32 %v52, %v236
  %v238 = vpop.f32.mrb[0].mxu0
  %v239 = vpop.f32.mrb[0].mxu0
  %v240 = vadd.f32 %v52, %v239
  %v241 = vpop.f32.mrb[0].mxu0
  %242 = vmatprep.mubr.bf16.mxu0 0
  %243 = vmatmul.mubr.bf16.gmra.mrb[0].mxu0 %v158
  %v244 = vpop.f32.mrb[0].mxu0
  %v245 = vadd.f32 %v52, %v244
  %v246 = vpop.f32.mrb[0].mxu0
  %v247 = vpop.f32.mrb[0].mxu0
  %v248 = vadd.f32 %v52, %v247
  %v249 = vpop.f32.mrb[0].mxu0
  %250 = vmatprep.mubr.bf16.mxu0 0
  %251 = vmatmul.mubr.bf16.gmra.mrb[0].mxu0 %v161
  %v252 = vpop.f32.mrb[0].mxu0
  %v253 = vadd.f32 %v52, %v252
  %v254 = vpop.f32.mrb[0].mxu0
  %v255 = vpop.f32.mrb[0].mxu0
  %v256 = vadd.f32 %v52, %v255
  %v257 = vpop.f32.mrb[0].mxu0
  %258 = vmatprep.mubr.bf16.mxu0 0
  %259 = vmatmul.mubr.bf16.gmra.mrb[0].mxu0 %v164
  %v260 = vpop.f32.mrb[0].mxu0
  %v261 = vadd.f32 %v52, %v260
  %v262 = vpop.f32.mrb[0].mxu0
  %v263 = vpop.f32.mrb[0].mxu0
  %v264 = vadd.f32 %v52, %v263
  %v265 = vpop.f32.mrb[0].mxu0
  %266 = vdwg.mxu0
  %v267 = vmax.f32 %v205, 0.0
  %v268 = vmax.f32 %v208, 0.0
  %v269 = vmax.f32 %v213, 0.0
  %v270 = vmax.f32 %v216, 0.0
  %v271 = vmax.f32 %v221, 0.0
  %v272 = vmax.f32 %v224, 0.0
  %v273 = vmax.f32 %v229, 0.0
  %v274 = vmax.f32 %v232, 0.0
  %v275 = vmax.f32 %v237, 0.0
  %v276 = vmax.f32 %v240, 0.0
  %v277 = vmax.f32 %v245, 0.0
  %v278 = vmax.f32 %v248, 0.0
  %v279 = vmax.f32 %v253, 0.0
  %v280 = vmax.f32 %v256, 0.0
  %v281 = vmax.f32 %v261, 0.0
  %v282 = vmax.f32 %v264, 0.0
  %v283 = vpack.c.bf16 %v268, %v267
  %v284 = vpack.c.bf16 %v270, %v269
  %v285 = vpack.c.bf16 %v272, %v271
  %v286 = vpack.c.bf16 %v274, %v273
  %v287 = vpack.c.bf16 %v276, %v275
  %v288 = vpack.c.bf16 %v278, %v277
  %v289 = vpack.c.bf16 %v280, %v279
  %v290 = vpack.c.bf16 %v282, %v281
  %v299 = vunpack.c.l.b16 %v283
  %v300 = vunpack.c.h.b16 %v283
  %v301 = vunpack.c.l.b16 %v284
  %v302 = vunpack.c.h.b16 %v284
  %v303 = vunpack.c.l.b16 %v285
  %v304 = vunpack.c.h.b16 %v285
  %v305 = vunpack.c.l.b16 %v286
  %v306 = vunpack.c.h.b16 %v286
  %v307 = vunpack.c.l.b16 %v287
  %v308 = vunpack.c.h.b16 %v287
  %v309 = vunpack.c.l.b16 %v288
  %v310 = vunpack.c.h.b16 %v288
  %v311 = vunpack.c.l.b16 %v289
  %v312 = vunpack.c.h.b16 %v289
  %v313 = vunpack.c.l.b16 %v290
  %v314 = vunpack.c.h.b16 %v290
  %v315 = vpack.c.b16 %v299, %v299
  %v316 = vpack.c.b16 %v300, %v300
  %v317 = vpack.c.b16 %v301, %v301
  %v318 = vpack.c.b16 %v302, %v302
  %v319 = vpack.c.b16 %v303, %v303
  %v320 = vpack.c.b16 %v304, %v304
  %v321 = vpack.c.b16 %v305, %v305
  %v322 = vpack.c.b16 %v306, %v306
  %v323 = vpack.c.b16 %v307, %v307
  %v324 = vpack.c.b16 %v308, %v308
  %v325 = vpack.c.b16 %v309, %v309
  %v326 = vpack.c.b16 %v310, %v310
  %v327 = vpack.c.b16 %v311, %v311
  %v328 = vpack.c.b16 %v312, %v312
  %v329 = vpack.c.b16 %v313, %v313
  %v330 = vpack.c.b16 %v314, %v314
  %347 = vst [vmem:[%s3] sm:$0xf] %v315
  %348 = vst [vmem:[%s3 + $0x4] sm:$0xf] %v316
  %349 = vst [vmem:[%s3 + $0x8] sm:$0xf] %v317
  %350 = vst [vmem:[%s3 + $0xc] sm:$0xf] %v318
  %351 = vst [vmem:[%s3 + $0x10] sm:$0xf] %v319
  %352 = vst [vmem:[%s3 + $0x14] sm:$0xf] %v320
  %353 = vst [vmem:[%s3 + $0x18] sm:$0xf] %v321
  %354 = vst [vmem:[%s3 + $0x1c] sm:$0xf] %v322
  %355 = vst [vmem:[%s3 + $0x20] sm:$0xf] %v323
  %356 = vst [vmem:[%s3 + $0x24] sm:$0xf] %v324
  %357 = vst [vmem:[%s3 + $0x28] sm:$0xf] %v325
  %358 = vst [vmem:[%s3 + $0x2c] sm:$0xf] %v326
  %359 = vst [vmem:[%s3 + $0x30] sm:$0xf] %v327
  %360 = vst [vmem:[%s3 + $0x34] sm:$0xf] %v328
  %361 = vst [vmem:[%s3 + $0x38] sm:$0xf] %v329
  %362 = vst [vmem:[%s3 + $0x3c] sm:$0xf] %v330
  // Predicated region
  $region14: #{resnet_forward.13} parent=0 // pred_check
    _
  $region15: #{resnet_forward.13} parent=0 // pred_check_branch
    %364 = sbr.rel (0) target = $region17
  $region16: #{resnet_forward.13} parent=0 // pred_region
    _
  $region17: #{resnet_forward.13} parent=0 // pred_fallthru
    _
  // Predicated region
  $region18: #{resnet_forward.13} parent=0 // pred_check
    _
  $region19: #{resnet_forward.13} parent=0 // pred_check_branch
    %366 = sbr.rel (0) target = $region21
  $region20: #{resnet_forward.13} parent=0 // pred_region
    _
  $region21: #{resnet_forward.13} parent=0 // pred_fallthru
    _

// kernel: resnet_forward.17
$region0: #{resnet_forward.17}
  #allocation0 [shape = 'u32[]', space=smem, size = 0x4, offset = 0x4, fixed_abs, tag = 'smem constant byte address 0x4 - core index']
  #allocation1 [shape = 'u32[144,128]{1,0:T(1,128)}', space=vmem, size = 0x12000, scoped, tag = 'internal scratch']
  %s0 = inlined_call_operand.vmem [shape: bf16[32,28], index: 0, kind: input, shape index: {}]
  %s1 = inlined_call_operand.vmem [shape: bf16[28,128], index: 1, kind: input, shape index: {}]
  %s2 = inlined_call_operand.vmem [shape: f32[1,128], index: 2, kind: input, shape index: {}]
  %s3 = inlined_call_operand.vmem [shape: bf16[32,128], index: 3, kind: output, shape index: {}]
  %s4 = sld [smem:[#allocation0]]
  $region22: #{resnet_forward.17} parent=0
    _
  %s6 = ssub.s32 1, %s4
  %s7 = scalar_select 0, %s6, %s4
  // Predicated region
  $region2: #{resnet_forward.17} parent=0 // pred_check
    _
  $region3: #{resnet_forward.17} parent=0 // pred_check_branch
    %9 = sbr.rel (0) target = $region5
  $region4: #{resnet_forward.17} parent=0 // pred_region
    _
  $region5: #{resnet_forward.17} parent=0 // pred_fallthru
    _
  // Predicated region
  $region6: #{resnet_forward.17} parent=0 // pred_check
    _
  $region7: #{resnet_forward.17} parent=0 // pred_check_branch
    %11 = sbr.rel (0) target = $region9
  $region8: #{resnet_forward.17} parent=0 // pred_region
    _
  $region9: #{resnet_forward.17} parent=0 // pred_fallthru
    _
  // Predicated region
  $region10: #{resnet_forward.17} parent=0 // pred_check
    _
  $region11: #{resnet_forward.17} parent=0 // pred_check_branch
    %13 = sbr.rel (0) target = $region13
  $region12: #{resnet_forward.17} parent=0 // pred_region
    _
  $region13: #{resnet_forward.17} parent=0 // pred_fallthru
    _
  %v15 = vld [vmem:[%s0] sm:$0xf]
  %v16 = vld [vmem:[%s0 + $0x4] sm:$0xf]
  %v17 = vld [vmem:[%s0 + $0x8] sm:$0xf]
  %v18 = vld [vmem:[%s0 + $0xc] sm:$0xf]
  %v19 = vld [vmem:[%s1] sm:$0xf]
  %v20 = vld [vmem:[%s1 + $0x4] sm:$0xf]
  %v21 = vld [vmem:[%s1 + $0x8] sm:$0xf]
  %v22 = vld [vmem:[%s1 + $0xc] sm:$0x3]
  %v23 = vld [vmem:[%s2] sm:$0x1]
  %v25 = vlaneseq
  %v26 = vshrl.u32 %v25, 7
  %v27 = vsub.s32 0, %v26
  %v28 = vrot.slane %v23, %v27
  %v34 = vunpack.c.l.b16 %v15
  %v35 = vunpack.c.l.b16 %v16
  %v36 = vunpack.c.l.b16 %v17
  %v37 = vunpack.c.l.b16 %v18
  %v38 = vpack.c.b16 %v35, %v34
  %v39 = vpack.c.b16 %v37, %v36
  %v44 = vunpack.c.l.b16 %v19
  %v45 = vunpack.c.l.b16 %v20
  %v46 = vunpack.c.l.b16 %v21
  %v47 = vunpack.c.l.b16 %v22
  %v48 = vpack.c.b16 %v45, %v44
  %v49 = vpack.c.b16 %v47, %v46
  %vm51 = vcmask 228352
  %v53 = vsel %vm51, %v38, 0
  %v56 = vsel %vm51, %v39, 0
  %vm58 = vcmask 1045504
  %v60 = vsel %vm58, %v49, 0
  %62 = vmatprep.subr.bf16.mxu0 0
  %63 = vmatpush1.bf16.msra.mxu0 %v48
  %64 = vmatprep.subr.bf16.mxu0 0
  %65 = vmatpush1.bf16.msra.mxu0 %v60
  %66 = vmatprep.subr.bf16.mxu0 0
  %67 = vmatpush1.bf16.msra.mxu0 0
  %68 = vmatprep.subr.bf16.mxu0 0
  %69 = vmatpush1.bf16.msra.mxu0 0
  %70 = vmatprep.subr.bf16.mxu0 0
  %71 = vmatpush1.bf16.msra.mxu0 0
  %72 = vmatprep.subr.bf16.mxu0 0
  %73 = vmatpush1.bf16.msra.mxu0 0
  %74 = vmatprep.subr.bf16.mxu0 0
  %75 = vmatpush1.bf16.msra.mxu0 0
  %76 = vmatprep.subr.bf16.mxu0 0
  %77 = vmatpush1.bf16.msra.mxu0 0
  %78 = vmatprep.subr.bf16.mxu0 0
  %79 = vmatpush1.bf16.msra.mxu0 0
  %80 = vmatprep.subr.bf16.mxu0 0
  %81 = vmatpush1.bf16.msra.mxu0 0
  %82 = vmatprep.subr.bf16.mxu0 0
  %83 = vmatpush1.bf16.msra.mxu0 0
  %84 = vmatprep.subr.bf16.mxu0 0
  %85 = vmatpush1.bf16.msra.mxu0 0
  %86 = vmatprep.subr.bf16.mxu0 0
  %87 = vmatpush1.bf16.msra.mxu0 0
  %88 = vmatprep.subr.bf16.mxu0 0
  %89 = vmatpush1.bf16.msra.mxu0 0
  %90 = vmatprep.subr.bf16.mxu0 0
  %91 = vmatpush1.bf16.msra.mxu0 0
  %92 = vmatprep.subr.bf16.mxu0 0
  %93 = vmatpush1.bf16.msra.mxu0 0
  %94 = vmatprep.mubr.bf16.mxu0 0
  %95 = vmatmul.mubr.bf16.gmra.mrb[0].mxu0 %v53
  %v96 = vpop.f32.mrb[0].mxu0
  %v97 = vadd.f32 %v28, %v96
  %v98 = vpop.f32.mrb[0].mxu0
  %v99 = vpop.f32.mrb[0].mxu0
  %v100 = vadd.f32 %v28, %v99
  %v101 = vpop.f32.mrb[0].mxu0
  %102 = vmatprep.mubr.bf16.mxu0 0
  %103 = vmatmul.mubr.bf16.gmra.mrb[0].mxu0 %v56
  %v104 = vpop.f32.mrb[0].mxu0
  %v105 = vadd.f32 %v28, %v104
  %v106 = vpop.f32.mrb[0].mxu0
  %v107 = vpop.f32.mrb[0].mxu0
  %v108 = vadd.f32 %v28, %v107
  %v109 = vpop.f32.mrb[0].mxu0
  %110 = vdwg.mxu0
  %v111 = vpack.c.bf16 %v100, %v97
  %v112 = vpack.c.bf16 %v108, %v105
  %v115 = vunpack.c.l.b16 %v111
  %v116 = vunpack.c.h.b16 %v111
  %v117 = vunpack.c.l.b16 %v112
  %v118 = vunpack.c.h.b16 %v112
  %v119 = vpack.c.b16 %v115, %v115
  %v120 = vpack.c.b16 %v116, %v116
  %v121 = vpack.c.b16 %v117, %v117
  %v122 = vpack.c.b16 %v118, %v118
  %127 = vst [vmem:[%s3] sm:$0xf] %v119
  %128 = vst [vmem:[%s3 + $0x4] sm:$0xf] %v120
  %129 = vst [vmem:[%s3 + $0x8] sm:$0xf] %v121
  %130 = vst [vmem:[%s3 + $0xc] sm:$0xf] %v122
  // Predicated region
  $region14: #{resnet_forward.17} parent=0 // pred_check
    _
  $region15: #{resnet_forward.17} parent=0 // pred_check_branch
    %132 = sbr.rel (0) target = $region17
  $region16: #{resnet_forward.17} parent=0 // pred_region
    _
  $region17: #{resnet_forward.17} parent=0 // pred_fallthru
    _
  // Predicated region
  $region18: #{resnet_forward.17} parent=0 // pred_check
    _
  $region19: #{resnet_forward.17} parent=0 // pred_check_branch
    %134 = sbr.rel (0) target = $region21
  $region20: #{resnet_forward.17} parent=0 // pred_region
    _
  $region21: #{resnet_forward.17} parent=0 // pred_fallthru
    _

// kernel: resnet_forward.15
$region0: #{resnet_forward.15}
  #allocation0 [shape = 'u32[]', space=smem, size = 0x4, offset = 0x4, fixed_abs, tag = 'smem constant byte address 0x4 - core index']
  #allocation1 [shape = 'u32[144,128]{1,0:T(1,128)}', space=vmem, size = 0x12000, scoped, tag = 'internal scratch']
  %s0 = inlined_call_operand.vmem [shape: bf16[128,252], index: 0, kind: input, shape index: {}]
  %s1 = inlined_call_operand.vmem [shape: bf16[252,128], index: 1, kind: input, shape index: {}]
  %s2 = inlined_call_operand.vmem [shape: f32[1,128], index: 2, kind: input, shape index: {}]
  %s3 = inlined_call_operand.vmem [shape: bf16[128,128], index: 3, kind: input, shape index: {}]
  %s4 = inlined_call_operand.vmem [shape: bf16[128,128], index: 4, kind: output, shape index: {}]
  %s5 = sld [smem:[#allocation0]]
  $region26: #{resnet_forward.15} parent=0
    _
  %s7 = ssub.s32 1, %s5
  %s8 = scalar_select 0, %s7, %s5
  // Predicated region
  $region2: #{resnet_forward.15} parent=0 // pred_check
    _
  $region3: #{resnet_forward.15} parent=0 // pred_check_branch
    %10 = sbr.rel (0) target = $region5
  $region4: #{resnet_forward.15} parent=0 // pred_region
    _
  $region5: #{resnet_forward.15} parent=0 // pred_fallthru
    _
  // Predicated region
  $region6: #{resnet_forward.15} parent=0 // pred_check
    _
  $region7: #{resnet_forward.15} parent=0 // pred_check_branch
    %12 = sbr.rel (0) target = $region9
  $region8: #{resnet_forward.15} parent=0 // pred_region
    _
  $region9: #{resnet_forward.15} parent=0 // pred_fallthru
    _
  // Predicated region
  $region10: #{resnet_forward.15} parent=0 // pred_check
    _
  $region11: #{resnet_forward.15} parent=0 // pred_check_branch
    %14 = sbr.rel (0) target = $region13
  $region12: #{resnet_forward.15} parent=0 // pred_region
    _
  $region13: #{resnet_forward.15} parent=0 // pred_fallthru
    _
  // Predicated region
  $region14: #{resnet_forward.15} parent=0 // pred_check
    _
  $region15: #{resnet_forward.15} parent=0 // pred_check_branch
    %16 = sbr.rel (0) target = $region17
  $region16: #{resnet_forward.15} parent=0 // pred_region
    _
  $region17: #{resnet_forward.15} parent=0 // pred_fallthru
    _
  %v18 = vld [vmem:[%s0] sm:$0xff]
  %v19 = vld [vmem:[%s0 + $0x8] sm:$0xff]
  %v20 = vld [vmem:[%s0 + $0x10] sm:$0xff]
  %v21 = vld [vmem:[%s0 + $0x18] sm:$0xff]
  %v22 = vld [vmem:[%s0 + $0x20] sm:$0xff]
  %v23 = vld [vmem:[%s0 + $0x28] sm:$0xff]
  %v24 = vld [vmem:[%s0 + $0x30] sm:$0xff]
  %v25 = vld [vmem:[%s0 + $0x38] sm:$0xff]
  %v26 = vld [vmem:[%s0 + $0x40] sm:$0xff]
  %v27 = vld [vmem:[%s0 + $0x48] sm:$0xff]
  %v28 = vld [vmem:[%s0 + $0x50] sm:$0xff]
  %v29 = vld [vmem:[%s0 + $0x58] sm:$0xff]
  %v30 = vld [vmem:[%s0 + $0x60] sm:$0xff]
  %v31 = vld [vmem:[%s0 + $0x68] sm:$0xff]
  %v32 = vld [vmem:[%s0 + $0x70] sm:$0xff]
  %v33 = vld [vmem:[%s0 + $0x78] sm:$0xff]
  %v34 = vld [vmem:[%s1] sm:$0xf]
  %v35 = vld [vmem:[%s1 + $0x4] sm:$0xf]
  %v36 = vld [vmem:[%s1 + $0x8] sm:$0xf]
  %v37 = vld [vmem:[%s1 + $0xc] sm:$0xf]
  %v38 = vld [vmem:[%s1 + $0x10] sm:$0xf]
  %v39 = vld [vmem:[%s1 + $0x14] sm:$0xf]
  %v40 = vld [vmem:[%s1 + $0x18] sm:$0xf]
  %v41 = vld [vmem:[%s1 + $0x1c] sm:$0xf]
  %v42 = vld [vmem:[%s1 + $0x20] sm:$0xf]
  %v43 = vld [vmem:[%s1 + $0x24] sm:$0xf]
  %v44 = vld [vmem:[%s1 + $0x28] sm:$0xf]
  %v45 = vld [vmem:[%s1 + $0x2c] sm:$0xf]
  %v46 = vld [vmem:[%s1 + $0x30] sm:$0xf]
  %v47 = vld [vmem:[%s1 + $0x34] sm:$0xf]
  %v48 = vld [vmem:[%s1 + $0x38] sm:$0xf]
  %v49 = vld [vmem:[%s1 + $0x3c] sm:$0xf]
  %v50 = vld [vmem:[%s1 + $0x40] sm:$0xf]
  %v51 = vld [vmem:[%s1 + $0x44] sm:$0xf]
  %v52 = vld [vmem:[%s1 + $0x48] sm:$0xf]
  %v53 = vld [vmem:[%s1 + $0x4c] sm:$0xf]
  %v54 = vld [vmem:[%s1 + $0x50] sm:$0xf]
  %v55 = vld [vmem:[%s1 + $0x54] sm:$0xf]
  %v56 = vld [vmem:[%s1 + $0x58] sm:$0xf]
  %v57 = vld [vmem:[%s1 + $0x5c] sm:$0xf]
  %v58 = vld [vmem:[%s1 + $0x60] sm:$0xf]
  %v59 = vld [vmem:[%s1 + $0x64] sm:$0xf]
  %v60 = vld [vmem:[%s1 + $0x68] sm:$0xf]
  %v61 = vld [vmem:[%s1 + $0x6c] sm:$0xf]
  %v62 = vld [vmem:[%s1 + $0x70] sm:$0xf]
  %v63 = vld [vmem:[%s1 + $0x74] sm:$0xf]
  %v64 = vld [vmem:[%s1 + $0x78] sm:$0xf]
  %v65 = vld [vmem:[%s1 + $0x7c] sm:$0x3]
  %v66 = vld [vmem:[%s2] sm:$0x1]
  %v68 = vlaneseq
  %v69 = vshrl.u32 %v68, 7
  %v70 = vsub.s32 0, %v69
  %v71 = vrot.slane %v66, %v70
  %v89 = vunpack.c.l.b16 %v18
  %v90 = vunpack.c.h.b16 %v18
  %v91 = vunpack.c.l.b16 %v19
  %v92 = vunpack.c.h.b16 %v19
  %v93 = vunpack.c.l.b16 %v20
  %v94 = vunpack.c.h.b16 %v20
  %v95 = vunpack.c.l.b16 %v21
  %v96 = vunpack.c.h.b16 %v21
  %v97 = vunpack.c.l.b16 %v22
  %v98 = vunpack.c.h.b16 %v22
  %v99 = vunpack.c.l.b16 %v23
  %v100 = vunpack.c.h.b16 %v23
  %v101 = vunpack.c.l.b16 %v24
  %v102 = vunpack.c.h.b16 %v24
  %v103 = vunpack.c.l.b16 %v25
  %v104 = vunpack.c.h.b16 %v25
  %v105 = vunpack.c.l.b16 %v26
  %v106 = vunpack.c.h.b16 %v26
  %v107 = vunpack.c.l.b16 %v27
  %v108 = vunpack.c.h.b16 %v27
  %v109 = vunpack.c.l.b16 %v28
  %v110 = vunpack.c.h.b16 %v28
  %v111 = vunpack.c.l.b16 %v29
  %v112 = vunpack.c.h.b16 %v29
  %v113 = vunpack.c.l.b16 %v30
  %v114 = vunpack.c.h.b16 %v30
  %v115 = vunpack.c.l.b16 %v31
  %v116 = vunpack.c.h.b16 %v31
  %v117 = vunpack.c.l.b16 %v32
  %v118 = vunpack.c.h.b16 %v32
  %v119 = vunpack.c.l.b16 %v33
  %v120 = vunpack.c.h.b16 %v33
  %v121 = vpack.c.b16 %v91, %v89
  %v122 = vpack.c.b16 %v92, %v90
  %v123 = vpack.c.b16 %v95, %v93
  %v124 = vpack.c.b16 %v96, %v94
  %v125 = vpack.c.b16 %v99, %v97
  %v126 = vpack.c.b16 %v100, %v98
  %v127 = vpack.c.b16 %v103, %v101
  %v128 = vpack.c.b16 %v104, %v102
  %v129 = vpack.c.b16 %v107, %v105
  %v130 = vpack.c.b16 %v108, %v106
  %v131 = vpack.c.b16 %v111, %v109
  %v132 = vpack.c.b16 %v112, %v110
  %v133 = vpack.c.b16 %v115, %v113
  %v134 = vpack.c.b16 %v116, %v114
  %v135 = vpack.c.b16 %v119, %v117
  %v136 = vpack.c.b16 %v120, %v118
  %v177 = vunpack.c.l.b16 %v34
  %v178 = vunpack.c.l.b16 %v35
  %v179 = vunpack.c.l.b16 %v36
  %v180 = vunpack.c.l.b16 %v37
  %v181 = vunpack.c.l.b16 %v38
  %v182 = vunpack.c.l.b16 %v39
  %v183 = vunpack.c.l.b16 %v40
  %v184 = vunpack.c.l.b16 %v41
  %v185 = vunpack.c.l.b16 %v42
  %v186 = vunpack.c.l.b16 %v43
  %v187 = vunpack.c.l.b16 %v44
  %v188 = vunpack.c.l.b16 %v45
  %v189 = vunpack.c.l.b16 %v46
  %v190 = vunpack.c.l.b16 %v47
  %v191 = vunpack.c.l.b16 %v48
  %v192 = vunpack.c.l.b16 %v49
  %v193 = vunpack.c.l.b16 %v50
  %v194 = vunpack.c.l.b16 %v51
  %v195 = vunpack.c.l.b16 %v52
  %v196 = vunpack.c.l.b16 %v53
  %v197 = vunpack.c.l.b16 %v54
  %v198 = vunpack.c.l.b16 %v55
  %v199 = vunpack.c.l.b16 %v56
  %v200 = vunpack.c.l.b16 %v57
  %v201 = vunpack.c.l.b16 %v58
  %v202 = vunpack.c.l.b16 %v59
  %v203 = vunpack.c.l.b16 %v60
  %v204 = vunpack.c.l.b16 %v61
  %v205 = vunpack.c.l.b16 %v62
  %v206 = vunpack.c.l.b16 %v63
  %v207 = vunpack.c.l.b16 %v64
  %v208 = vunpack.c.l.b16 %v65
  %v209 = vpack.c.b16 %v178, %v177
  %v210 = vpack.c.b16 %v180, %v179
  %v211 = vpack.c.b16 %v182, %v181
  %v212 = vpack.c.b16 %v184, %v183
  %v213 = vpack.c.b16 %v186, %v185
  %v214 = vpack.c.b16 %v188, %v187
  %v215 = vpack.c.b16 %v190, %v189
  %v216 = vpack.c.b16 %v192, %v191
  %v217 = vpack.c.b16 %v194, %v193
  %v218 = vpack.c.b16 %v196, %v195
  %v219 = vpack.c.b16 %v198, %v197
  %v220 = vpack.c.b16 %v200, %v199
  %v221 = vpack.c.b16 %v202, %v201
  %v222 = vpack.c.b16 %v204, %v203
  %v223 = vpack.c.b16 %v206, %v205
  %v224 = vpack.c.b16 %v208, %v207
  %vm240 = vcmask 1014784
  %v242 = vsel %vm240, %v122, 0
  %v245 = vsel %vm240, %v124, 0
  %v248 = vsel %vm240, %v126, 0
  %v251 = vsel %vm240, %v128, 0
  %v254 = vsel %vm240, %v130, 0
  %v257 = vsel %vm240, %v132, 0
  %v260 = vsel %vm240, %v134, 0
  %v263 = vsel %vm240, %v136, 0
  %vm265 = vcmask 1045504
  %v267 = vsel %vm265, %v224, 0
  %269 = vmatprep.subr.bf16.mxu0 0
  %270 = vmatpush1.bf16.msra.mxu0 %v209
  %271 = vmatprep.subr.bf16.mxu0 0
  %272 = vmatpush1.bf16.msra.mxu0 %v210
  %273 = vmatprep.subr.bf16.mxu0 0
  %274 = vmatpush1.bf16.msra.mxu0 %v211
  %275 = vmatprep.subr.bf16.mxu0 0
  %276 = vmatpush1.bf16.msra.mxu0 %v212
  %277 = vmatprep.subr.bf16.mxu0 0
  %278 = vmatpush1.bf16.msra.mxu0 %v213
  %279 = vmatprep.subr.bf16.mxu0 0
  %280 = vmatpush1.bf16.msra.mxu0 %v214
  %281 = vmatprep.subr.bf16.mxu0 0
  %282 = vmatpush1.bf16.msra.mxu0 %v215
  %283 = vmatprep.subr.bf16.mxu0 0
  %284 = vmatpush1.bf16.msra.mxu0 %v216
  %285 = vmatprep.subr.bf16.mxu0 0
  %286 = vmatpush1.bf16.msra.mxu0 %v217
  %287 = vmatprep.subr.bf16.mxu0 0
  %288 = vmatpush1.bf16.msra.mxu0 %v218
  %289 = vmatprep.subr.bf16.mxu0 0
  %290 = vmatpush1.bf16.msra.mxu0 %v219
  %291 = vmatprep.subr.bf16.mxu0 0
  %292 = vmatpush1.bf16.msra.mxu0 %v220
  %293 = vmatprep.subr.bf16.mxu0 0
  %294 = vmatpush1.bf16.msra.mxu0 %v221
  %295 = vmatprep.subr.bf16.mxu0 0
  %296 = vmatpush1.bf16.msra.mxu0 %v222
  %297 = vmatprep.subr.bf16.mxu0 0
  %298 = vmatpush1.bf16.msra.mxu0 %v223
  %299 = vmatprep.subr.bf16.mxu0 0
  %300 = vmatpush1.bf16.msra.mxu0 %v267
  %301 = vmatprep.mubr.bf16.mxu0 %v242
  %302 = vmatmul.mubr.bf16.gmra.mrb[0].mxu0 %v121
  %v303 = vpop.f32.mrb[0].mxu0
  %v304 = vadd.f32 %v71, %v303
  %v305 = vpop.f32.mrb[0].mxu0
  %v306 = vpop.f32.mrb[0].mxu0
  %v307 = vadd.f32 %v71, %v306
  %v308 = vpop.f32.mrb[0].mxu0
  %309 = vmatprep.mubr.bf16.mxu0 %v245
  %310 = vmatmul.mubr.bf16.gmra.mrb[0].mxu0 %v123
  %v311 = vpop.f32.mrb[0].mxu0
  %v312 = vadd.f32 %v71, %v311
  %v313 = vpop.f32.mrb[0].mxu0
  %v314 = vpop.f32.mrb[0].mxu0
  %v315 = vadd.f32 %v71, %v314
  %v316 = vpop.f32.mrb[0].mxu0
  %317 = vmatprep.mubr.bf16.mxu0 %v248
  %318 = vmatmul.mubr.bf16.gmra.mrb[0].mxu0 %v125
  %v319 = vpop.f32.mrb[0].mxu0
  %v320 = vadd.f32 %v71, %v319
  %v321 = vpop.f32.mrb[0].mxu0
  %v322 = vpop.f32.mrb[0].mxu0
  %v323 = vadd.f32 %v71, %v322
  %v324 = vpop.f32.mrb[0].mxu0
  %325 = vmatprep.mubr.bf16.mxu0 %v251
  %326 = vmatmul.mubr.bf16.gmra.mrb[0].mxu0 %v127
  %v327 = vpop.f32.mrb[0].mxu0
  %v328 = vadd.f32 %v71, %v327
  %v329 = vpop.f32.mrb[0].mxu0
  %v330 = vpop.f32.mrb[0].mxu0
  %v331 = vadd.f32 %v71, %v330
  %v332 = vpop.f32.mrb[0].mxu0
  %333 = vmatprep.mubr.bf16.mxu0 %v254
  %334 = vmatmul.mubr.bf16.gmra.mrb[0].mxu0 %v129
  %v335 = vpop.f32.mrb[0].mxu0
  %v336 = vadd.f32 %v71, %v335
  %v337 = vpop.f32.mrb[0].mxu0
  %v338 = vpop.f32.mrb[0].mxu0
  %v339 = vadd.f32 %v71, %v338
  %v340 = vpop.f32.mrb[0].mxu0
  %341 = vmatprep.mubr.bf16.mxu0 %v257
  %342 = vmatmul.mubr.bf16.gmra.mrb[0].mxu0 %v131
  %v343 = vpop.f32.mrb[0].mxu0
  %v344 = vadd.f32 %v71, %v343
  %v345 = vpop.f32.mrb[0].mxu0
  %v346 = vpop.f32.mrb[0].mxu0
  %v347 = vadd.f32 %v71, %v346
  %v348 = vpop.f32.mrb[0].mxu0
  %349 = vmatprep.mubr.bf16.mxu0 %v260
  %350 = vmatmul.mubr.bf16.gmra.mrb[0].mxu0 %v133
  %v351 = vpop.f32.mrb[0].mxu0
  %v352 = vadd.f32 %v71, %v351
  %v353 = vpop.f32.mrb[0].mxu0
  %v354 = vpop.f32.mrb[0].mxu0
  %v355 = vadd.f32 %v71, %v354
  %v356 = vpop.f32.mrb[0].mxu0
  %357 = vmatprep.mubr.bf16.mxu0 %v263
  %358 = vmatmul.mubr.bf16.gmra.mrb[0].mxu0 %v135
  %v359 = vpop.f32.mrb[0].mxu0
  %v360 = vadd.f32 %v71, %v359
  %v361 = vpop.f32.mrb[0].mxu0
  %v362 = vpop.f32.mrb[0].mxu0
  %v363 = vadd.f32 %v71, %v362
  %v364 = vpop.f32.mrb[0].mxu0
  %365 = vdwg.mxu0
  %v366 = vld [vmem:[%s3] sm:$0xf]
  %v367 = vld [vmem:[%s3 + $0x4] sm:$0xf]
  %v368 = vld [vmem:[%s3 + $0x8] sm:$0xf]
  %v369 = vld [vmem:[%s3 + $0xc] sm:$0xf]
  %v370 = vld [vmem:[%s3 + $0x10] sm:$0xf]
  %v371 = vld [vmem:[%s3 + $0x14] sm:$0xf]
  %v372 = vld [vmem:[%s3 + $0x18] sm:$0xf]
  %v373 = vld [vmem:[%s3 + $0x1c] sm:$0xf]
  %v374 = vld [vmem:[%s3 + $0x20] sm:$0xf]
  %v375 = vld [vmem:[%s3 + $0x24] sm:$0xf]
  %v376 = vld [vmem:[%s3 + $0x28] sm:$0xf]
  %v377 = vld [vmem:[%s3 + $0x2c] sm:$0xf]
  %v378 = vld [vmem:[%s3 + $0x30] sm:$0xf]
  %v379 = vld [vmem:[%s3 + $0x34] sm:$0xf]
  %v380 = vld [vmem:[%s3 + $0x38] sm:$0xf]
  %v381 = vld [vmem:[%s3 + $0x3c] sm:$0xf]
  %v382 = vunpack.c.l.bf16 %v366
  %v383 = vunpack.c.l.bf16 %v367
  %v384 = vunpack.c.l.bf16 %v368
  %v385 = vunpack.c.l.bf16 %v369
  %v386 = vunpack.c.l.bf16 %v370
  %v387 = vunpack.c.l.bf16 %v371
  %v388 = vunpack.c.l.bf16 %v372
  %v389 = vunpack.c.l.bf16 %v373
  %v390 = vunpack.c.l.bf16 %v374
  %v391 = vunpack.c.l.bf16 %v375
  %v392 = vunpack.c.l.bf16 %v376
  %v393 = vunpack.c.l.bf16 %v377
  %v394 = vunpack.c.l.bf16 %v378
  %v395 = vunpack.c.l.bf16 %v379
  %v396 = vunpack.c.l.bf16 %v380
  %v397 = vunpack.c.l.bf16 %v381
  %v398 = vadd.f32 %v304, %v382
  %v399 = vadd.f32 %v307, %v383
  %v400 = vadd.f32 %v312, %v384
  %v401 = vadd.f32 %v315, %v385
  %v402 = vadd.f32 %v320, %v386
  %v403 = vadd.f32 %v323, %v387
  %v404 = vadd.f32 %v328, %v388
  %v405 = vadd.f32 %v331, %v389
  %v406 = vadd.f32 %v336, %v390
  %v407 = vadd.f32 %v339, %v391
  %v408 = vadd.f32 %v344, %v392
  %v409 = vadd.f32 %v347, %v393
  %v410 = vadd.f32 %v352, %v394
  %v411 = vadd.f32 %v355, %v395
  %v412 = vadd.f32 %v360, %v396
  %v413 = vadd.f32 %v363, %v397
  %v414 = vmax.f32 %v398, 0.0
  %v415 = vmax.f32 %v399, 0.0
  %v416 = vmax.f32 %v400, 0.0
  %v417 = vmax.f32 %v401, 0.0
  %v418 = vmax.f32 %v402, 0.0
  %v419 = vmax.f32 %v403, 0.0
  %v420 = vmax.f32 %v404, 0.0
  %v421 = vmax.f32 %v405, 0.0
  %v422 = vmax.f32 %v406, 0.0
  %v423 = vmax.f32 %v407, 0.0
  %v424 = vmax.f32 %v408, 0.0
  %v425 = vmax.f32 %v409, 0.0
  %v426 = vmax.f32 %v410, 0.0
  %v427 = vmax.f32 %v411, 0.0
  %v428 = vmax.f32 %v412, 0.0
  %v429 = vmax.f32 %v413, 0.0
  %v430 = vpack.c.bf16 %v415, %v414
  %v431 = vpack.c.bf16 %v417, %v416
  %v432 = vpack.c.bf16 %v419, %v418
  %v433 = vpack.c.bf16 %v421, %v420
  %v434 = vpack.c.bf16 %v423, %v422
  %v435 = vpack.c.bf16 %v425, %v424
  %v436 = vpack.c.bf16 %v427, %v426
  %v437 = vpack.c.bf16 %v429, %v428
  %v446 = vunpack.c.l.b16 %v430
  %v447 = vunpack.c.h.b16 %v430
  %v448 = vunpack.c.l.b16 %v431
  %v449 = vunpack.c.h.b16 %v431
  %v450 = vunpack.c.l.b16 %v432
  %v451 = vunpack.c.h.b16 %v432
  %v452 = vunpack.c.l.b16 %v433
  %v453 = vunpack.c.h.b16 %v433
  %v454 = vunpack.c.l.b16 %v434
  %v455 = vunpack.c.h.b16 %v434
  %v456 = vunpack.c.l.b16 %v435
  %v457 = vunpack.c.h.b16 %v435
  %v458 = vunpack.c.l.b16 %v436
  %v459 = vunpack.c.h.b16 %v436
  %v460 = vunpack.c.l.b16 %v437
  %v461 = vunpack.c.h.b16 %v437
  %v462 = vpack.c.b16 %v446, %v446
  %v463 = vpack.c.b16 %v447, %v447
  %v464 = vpack.c.b16 %v448, %v448
  %v465 = vpack.c.b16 %v449, %v449
  %v466 = vpack.c.b16 %v450, %v450
  %v467 = vpack.c.b16 %v451, %v451
  %v468 = vpack.c.b16 %v452, %v452
  %v469 = vpack.c.b16 %v453, %v453
  %v470 = vpack.c.b16 %v454, %v454
  %v471 = vpack.c.b16 %v455, %v455
  %v472 = vpack.c.b16 %v456, %v456
  %v473 = vpack.c.b16 %v457, %v457
  %v474 = vpack.c.b16 %v458, %v458
  %v475 = vpack.c.b16 %v459, %v459
  %v476 = vpack.c.b16 %v460, %v460
  %v477 = vpack.c.b16 %v461, %v461
  %494 = vst [vmem:[%s4] sm:$0xf] %v462
  %495 = vst [vmem:[%s4 + $0x4] sm:$0xf] %v463
  %496 = vst [vmem:[%s4 + $0x8] sm:$0xf] %v464
  %497 = vst [vmem:[%s4 + $0xc] sm:$0xf] %v465
  %498 = vst [vmem:[%s4 + $0x10] sm:$0xf] %v466
  %499 = vst [vmem:[%s4 + $0x14] sm:$0xf] %v467
  %500 = vst [vmem:[%s4 + $0x18] sm:$0xf] %v468
  %501 = vst [vmem:[%s4 + $0x1c] sm:$0xf] %v469
  %502 = vst [vmem:[%s4 + $0x20] sm:$0xf] %v470
  %503 = vst [vmem:[%s4 + $0x24] sm:$0xf] %v471
  %504 = vst [vmem:[%s4 + $0x28] sm:$0xf] %v472
  %505 = vst [vmem:[%s4 + $0x2c] sm:$0xf] %v473
  %506 = vst [vmem:[%s4 + $0x30] sm:$0xf] %v474
  %507 = vst [vmem:[%s4 + $0x34] sm:$0xf] %v475
  %508 = vst [vmem:[%s4 + $0x38] sm:$0xf] %v476
  %509 = vst [vmem:[%s4 + $0x3c] sm:$0xf] %v477
  // Predicated region
  $region18: #{resnet_forward.15} parent=0 // pred_check
    _
  $region19: #{resnet_forward.15} parent=0 // pred_check_branch
    %511 = sbr.rel (0) target = $region21
  $region20: #{resnet_forward.15} parent=0 // pred_region
    _
  $region21: #{resnet_forward.15} parent=0 // pred_fallthru
    _
  // Predicated region
  $region22: #{resnet_forward.15} parent=0 // pred_check
    _
  $region23: #{resnet_forward.15} parent=0 // pred_check_branch
    %513 = sbr.rel (0) target = $region25
  $region24: #{resnet_forward.15} parent=0 // pred_region
    _
  $region25: #{resnet_forward.15} parent=0 // pred_fallthru
    _

// kernel: resnet_forward.16
$region0: #{resnet_forward.16}
  #allocation0 [shape = 'u32[]', space=smem, size = 0x4, offset = 0x4, fixed_abs, tag = 'smem constant byte address 0x4 - core index']
  #allocation1 [shape = 'u32[144,128]{1,0:T(1,128)}', space=vmem, size = 0x12000, scoped, tag = 'internal scratch']
  %s0 = inlined_call_operand.vmem [shape: bf16[32,252], index: 0, kind: input, shape index: {}]
  %s1 = inlined_call_operand.vmem [shape: bf16[252,128], index: 1, kind: input, shape index: {}]
  %s2 = inlined_call_operand.vmem [shape: f32[1,128], index: 2, kind: input, shape index: {}]
  %s3 = inlined_call_operand.vmem [shape: bf16[32,128], index: 3, kind: output, shape index: {}]
  %s4 = sld [smem:[#allocation0]]
  $region22: #{resnet_forward.16} parent=0
    _
  %s6 = ssub.s32 1, %s4
  %s7 = scalar_select 0, %s6, %s4
  // Predicated region
  $region2: #{resnet_forward.16} parent=0 // pred_check
    _
  $region3: #{resnet_forward.16} parent=0 // pred_check_branch
    %9 = sbr.rel (0) target = $region5
  $region4: #{resnet_forward.16} parent=0 // pred_region
    _
  $region5: #{resnet_forward.16} parent=0 // pred_fallthru
    _
  // Predicated region
  $region6: #{resnet_forward.16} parent=0 // pred_check
    _
  $region7: #{resnet_forward.16} parent=0 // pred_check_branch
    %11 = sbr.rel (0) target = $region9
  $region8: #{resnet_forward.16} parent=0 // pred_region
    _
  $region9: #{resnet_forward.16} parent=0 // pred_fallthru
    _
  // Predicated region
  $region10: #{resnet_forward.16} parent=0 // pred_check
    _
  $region11: #{resnet_forward.16} parent=0 // pred_check_branch
    %13 = sbr.rel (0) target = $region13
  $region12: #{resnet_forward.16} parent=0 // pred_region
    _
  $region13: #{resnet_forward.16} parent=0 // pred_fallthru
    _
  %v15 = vld [vmem:[%s0] sm:$0xff]
  %v16 = vld [vmem:[%s0 + $0x8] sm:$0xff]
  %v17 = vld [vmem:[%s0 + $0x10] sm:$0xff]
  %v18 = vld [vmem:[%s0 + $0x18] sm:$0xff]
  %v19 = vld [vmem:[%s1] sm:$0xf]
  %v20 = vld [vmem:[%s1 + $0x4] sm:$0xf]
  %v21 = vld [vmem:[%s1 + $0x8] sm:$0xf]
  %v22 = vld [vmem:[%s1 + $0xc] sm:$0xf]
  %v23 = vld [vmem:[%s1 + $0x10] sm:$0xf]
  %v24 = vld [vmem:[%s1 + $0x14] sm:$0xf]
  %v25 = vld [vmem:[%s1 + $0x18] sm:$0xf]
  %v26 = vld [vmem:[%s1 + $0x1c] sm:$0xf]
  %v27 = vld [vmem:[%s1 + $0x20] sm:$0xf]
  %v28 = vld [vmem:[%s1 + $0x24] sm:$0xf]
  %v29 = vld [vmem:[%s1 + $0x28] sm:$0xf]
  %v30 = vld [vmem:[%s1 + $0x2c] sm:$0xf]
  %v31 = vld [vmem:[%s1 + $0x30] sm:$0xf]
  %v32 = vld [vmem:[%s1 + $0x34] sm:$0xf]
  %v33 = vld [vmem:[%s1 + $0x38] sm:$0xf]
  %v34 = vld [vmem:[%s1 + $0x3c] sm:$0xf]
  %v35 = vld [vmem:[%s1 + $0x40] sm:$0xf]
  %v36 = vld [vmem:[%s1 + $0x44] sm:$0xf]
  %v37 = vld [vmem:[%s1 + $0x48] sm:$0xf]
  %v38 = vld [vmem:[%s1 + $0x4c] sm:$0xf]
  %v39 = vld [vmem:[%s1 + $0x50] sm:$0xf]
  %v40 = vld [vmem:[%s1 + $0x54] sm:$0xf]
  %v41 = vld [vmem:[%s1 + $0x58] sm:$0xf]
  %v42 = vld [vmem:[%s1 + $0x5c] sm:$0xf]
  %v43 = vld [vmem:[%s1 + $0x60] sm:$0xf]
  %v44 = vld [vmem:[%s1 + $0x64] sm:$0xf]
  %v45 = vld [vmem:[%s1 + $0x68] sm:$0xf]
  %v46 = vld [vmem:[%s1 + $0x6c] sm:$0xf]
  %v47 = vld [vmem:[%s1 + $0x70] sm:$0xf]
  %v48 = vld [vmem:[%s1 + $0x74] sm:$0xf]
  %v49 = vld [vmem:[%s1 + $0x78] sm:$0xf]
  %v50 = vld [vmem:[%s1 + $0x7c] sm:$0x3]
  %v51 = vld [vmem:[%s2] sm:$0x1]
  %v53 = vlaneseq
  %v54 = vshrl.u32 %v53, 7
  %v55 = vsub.s32 0, %v54
  %v56 = vrot.slane %v51, %v55
  %v62 = vunpack.c.l.b16 %v15
  %v63 = vunpack.c.h.b16 %v15
  %v64 = vunpack.c.l.b16 %v16
  %v65 = vunpack.c.h.b16 %v16
  %v66 = vunpack.c.l.b16 %v17
  %v67 = vunpack.c.h.b16 %v17
  %v68 = vunpack.c.l.b16 %v18
  %v69 = vunpack.c.h.b16 %v18
  %v70 = vpack.c.b16 %v64, %v62
  %v71 = vpack.c.b16 %v65, %v63
  %v72 = vpack.c.b16 %v68, %v66
  %v73 = vpack.c.b16 %v69, %v67
  %v108 = vunpack.c.l.b16 %v19
  %v109 = vunpack.c.l.b16 %v20
  %v110 = vunpack.c.l.b16 %v21
  %v111 = vunpack.c.l.b16 %v22
  %v112 = vunpack.c.l.b16 %v23
  %v113 = vunpack.c.l.b16 %v24
  %v114 = vunpack.c.l.b16 %v25
  %v115 = vunpack.c.l.b16 %v26
  %v116 = vunpack.c.l.b16 %v27
  %v117 = vunpack.c.l.b16 %v28
  %v118 = vunpack.c.l.b16 %v29
  %v119 = vunpack.c.l.b16 %v30
  %v120 = vunpack.c.l.b16 %v31
  %v121 = vunpack.c.l.b16 %v32
  %v122 = vunpack.c.l.b16 %v33
  %v123 = vunpack.c.l.b16 %v34
  %v124 = vunpack.c.l.b16 %v35
  %v125 = vunpack.c.l.b16 %v36
  %v126 = vunpack.c.l.b16 %v37
  %v127 = vunpack.c.l.b16 %v38
  %v128 = vunpack.c.l.b16 %v39
  %v129 = vunpack.c.l.b16 %v40
  %v130 = vunpack.c.l.b16 %v41
  %v131 = vunpack.c.l.b16 %v42
  %v132 = vunpack.c.l.b16 %v43
  %v133 = vunpack.c.l.b16 %v44
  %v134 = vunpack.c.l.b16 %v45
  %v135 = vunpack.c.l.b16 %v46
  %v136 = vunpack.c.l.b16 %v47
  %v137 = vunpack.c.l.b16 %v48
  %v138 = vunpack.c.l.b16 %v49
  %v139 = vunpack.c.l.b16 %v50
  %v140 = vpack.c.b16 %v109, %v108
  %v141 = vpack.c.b16 %v111, %v110
  %v142 = vpack.c.b16 %v113, %v112
  %v143 = vpack.c.b16 %v115, %v114
  %v144 = vpack.c.b16 %v117, %v116
  %v145 = vpack.c.b16 %v119, %v118
  %v146 = vpack.c.b16 %v121, %v120
  %v147 = vpack.c.b16 %v123, %v122
  %v148 = vpack.c.b16 %v125, %v124
  %v149 = vpack.c.b16 %v127, %v126
  %v150 = vpack.c.b16 %v129, %v128
  %v151 = vpack.c.b16 %v131, %v130
  %v152 = vpack.c.b16 %v133, %v132
  %v153 = vpack.c.b16 %v135, %v134
  %v154 = vpack.c.b16 %v137, %v136
  %v155 = vpack.c.b16 %v139, %v138
  %vm171 = vcmask 1014784
  %v173 = vsel %vm171, %v71, 0
  %v176 = vsel %vm171, %v73, 0
  %vm178 = vcmask 1045504
  %v180 = vsel %vm178, %v155, 0
  %182 = vmatprep.subr.bf16.mxu0 0
  %183 = vmatpush1.bf16.msra.mxu0 %v140
  %184 = vmatprep.subr.bf16.mxu0 0
  %185 = vmatpush1.bf16.msra.mxu0 %v141
  %186 = vmatprep.subr.bf16.mxu0 0
  %187 = vmatpush1.bf16.msra.mxu0 %v142
  %188 = vmatprep.subr.bf16.mxu0 0
  %189 = vmatpush1.bf16.msra.mxu0 %v143
  %190 = vmatprep.subr.bf16.mxu0 0
  %191 = vmatpush1.bf16.msra.mxu0 %v144
  %192 = vmatprep.subr.bf16.mxu0 0
  %193 = vmatpush1.bf16.msra.mxu0 %v145
  %194 = vmatprep.subr.bf16.mxu0 0
  %195 = vmatpush1.bf16.msra.mxu0 %v146
  %196 = vmatprep.subr.bf16.mxu0 0
  %197 = vmatpush1.bf16.msra.mxu0 %v147
  %198 = vmatprep.subr.bf16.mxu0 0
  %199 = vmatpush1.bf16.msra.mxu0 %v148
  %200 = vmatprep.subr.bf16.mxu0 0
  %201 = vmatpush1.bf16.msra.mxu0 %v149
  %202 = vmatprep.subr.bf16.mxu0 0
  %203 = vmatpush1.bf16.msra.mxu0 %v150
  %204 = vmatprep.subr.bf16.mxu0 0
  %205 = vmatpush1.bf16.msra.mxu0 %v151
  %206 = vmatprep.subr.bf16.mxu0 0
  %207 = vmatpush1.bf16.msra.mxu0 %v152
  %208 = vmatprep.subr.bf16.mxu0 0
  %209 = vmatpush1.bf16.msra.mxu0 %v153
  %210 = vmatprep.subr.bf16.mxu0 0
  %211 = vmatpush1.bf16.msra.mxu0 %v154
  %212 = vmatprep.subr.bf16.mxu0 0
  %213 = vmatpush1.bf16.msra.mxu0 %v180
  %214 = vmatprep.mubr.bf16.mxu0 %v173
  %215 = vmatmul.mubr.bf16.gmra.mrb[0].mxu0 %v70
  %v216 = vpop.f32.mrb[0].mxu0
  %v217 = vadd.f32 %v56, %v216
  %v218 = vpop.f32.mrb[0].mxu0
  %v219 = vpop.f32.mrb[0].mxu0
  %v220 = vadd.f32 %v56, %v219
  %v221 = vpop.f32.mrb[0].mxu0
  %222 = vmatprep.mubr.bf16.mxu0 %v176
  %223 = vmatmul.mubr.bf16.gmra.mrb[0].mxu0 %v72
  %v224 = vpop.f32.mrb[0].mxu0
  %v225 = vadd.f32 %v56, %v224
  %v226 = vpop.f32.mrb[0].mxu0
  %v227 = vpop.f32.mrb[0].mxu0
  %v228 = vadd.f32 %v56, %v227
  %v229 = vpop.f32.mrb[0].mxu0
  %230 = vdwg.mxu0
  %v231 = vmax.f32 %v217, 0.0
  %v232 = vmax.f32 %v220, 0.0
  %v233 = vmax.f32 %v225, 0.0
  %v234 = vmax.f32 %v228, 0.0
  %v235 = vpack.c.bf16 %v232, %v231
  %v236 = vpack.c.bf16 %v234, %v233
  %v239 = vunpack.c.l.b16 %v235
  %v240 = vunpack.c.h.b16 %v235
  %v241 = vunpack.c.l.b16 %v236
  %v242 = vunpack.c.h.b16 %v236
  %v243 = vpack.c.b16 %v239, %v239
  %v244 = vpack.c.b16 %v240, %v240
  %v245 = vpack.c.b16 %v241, %v241
  %v246 = vpack.c.b16 %v242, %v242
  %251 = vst [vmem:[%s3] sm:$0xf] %v243
  %252 = vst [vmem:[%s3 + $0x4] sm:$0xf] %v244
  %253 = vst [vmem:[%s3 + $0x8] sm:$0xf] %v245
  %254 = vst [vmem:[%s3 + $0xc] sm:$0xf] %v246
  // Predicated region
  $region14: #{resnet_forward.16} parent=0 // pred_check
    _
  $region15: #{resnet_forward.16} parent=0 // pred_check_branch
    %256 = sbr.rel (0) target = $region17
  $region16: #{resnet_forward.16} parent=0 // pred_region
    _
  $region17: #{resnet_forward.16} parent=0 // pred_fallthru
    _
  // Predicated region
  $region18: #{resnet_forward.16} parent=0 // pred_check
    _
  $region19: #{resnet_forward.16} parent=0 // pred_check_branch
    %258 = sbr.rel (0) target = $region21
  $region20: #{resnet_forward.16} parent=0 // pred_region
    _
  $region21: #{resnet_forward.16} parent=0 // pred_fallthru
    _

// kernel: resnet_forward.19
$region0: #{resnet_forward.19}
  #allocation0 [shape = 'u32[]', space=smem, size = 0x4, offset = 0x4, fixed_abs, tag = 'smem constant byte address 0x4 - core index']
  #allocation1 [shape = 'u32[144,128]{1,0:T(1,128)}', space=vmem, size = 0x12000, scoped, tag = 'internal scratch']
  %s0 = inlined_call_operand.vmem [shape: bf16[2,16,128], index: 0, kind: input, shape index: {}]
  %s1 = inlined_call_operand.vmem [shape: f32[128,128], index: 1, kind: input, shape index: {}]
  %s2 = inlined_call_operand.vmem [shape: f32[1,128], index: 2, kind: input, shape index: {}]
  %s3 = inlined_call_operand.hbm [shape: f32[2,128], index: 3, kind: output, shape index: {}]
  %s4 = sld [smem:[#allocation0]]
  $region22: #{resnet_forward.19} parent=0
    _
  %s6 = ssub.s32 1, %s4
  %s7 = scalar_select 0, %s6, %s4
  $region1: #{resnet_forward.19} parent=0
    #allocation2 [shape = 'u8[1024]{0}', space=vmem, size = 0x400, scoped, tag = 'output window, operand 0, single buffered']
    #allocation3 [shape = 's32[1]{0}', space=sflag, size = 0x4, scoped, tag = 'scoped memory for resnet_forward.19']
    %8 = vsyncpa [#allocation3], 0
    // Predicated region
    $region2: #{resnet_forward.19} parent=1 // pred_check
      _
    $region3: #{resnet_forward.19} parent=1 // pred_check_branch
      %10 = sbr.rel (0) target = $region5
    $region4: #{resnet_forward.19} parent=1 // pred_region
      _
    $region5: #{resnet_forward.19} parent=1 // pred_fallthru
      _
    // Predicated region
    $region6: #{resnet_forward.19} parent=1 // pred_check
      _
    $region7: #{resnet_forward.19} parent=1 // pred_check_branch
      %12 = sbr.rel (0) target = $region9
    $region8: #{resnet_forward.19} parent=1 // pred_region
      _
    $region9: #{resnet_forward.19} parent=1 // pred_fallthru
      _
    // Predicated region
    $region10: #{resnet_forward.19} parent=1 // pred_check
      _
    $region11: #{resnet_forward.19} parent=1 // pred_check_branch
      %14 = sbr.rel (0) target = $region13
    $region12: #{resnet_forward.19} parent=1 // pred_region
      _
    $region13: #{resnet_forward.19} parent=1 // pred_fallthru
      _
    %v15 = vld [vmem:[%s0] sm:$0xf]
    %v16 = vld [vmem:[%s0 + $0x4] sm:$0xf]
    %v17 = vld [vmem:[%s0 + $0x8] sm:$0xf]
    %v18 = vld [vmem:[%s0 + $0xc] sm:$0xf]
    %v19 = vunpack.c.l.bf16 %v15
    %v20 = vunpack.c.l.bf16 %v16
    %v21 = vunpack.c.l.bf16 %v17
    %v22 = vunpack.c.l.bf16 %v18
    %v23 = vadd.f32 %v19, %v20
    %v24 = vrot.slane %v23, 4
    %v25 = vadd.f32 %v23, %v24
    %v26 = vrot.slane %v25, 2
    %v27 = vadd.f32 %v25, %v26
    %v28 = vrot.slane %v27, 1
    %v29 = vadd.f32 %v27, %v28
    %v30 = vadd.f32 %v21, %v22
    %v31 = vrot.slane %v30, 4
    %v32 = vadd.f32 %v30, %v31
    %v33 = vrot.slane %v32, 2
    %v34 = vadd.f32 %v32, %v33
    %v35 = vrot.slane %v34, 1
    %v36 = vadd.f32 %v34, %v35
    %v37 = vrcp.pop 16.0
    %v38 = vmul.f32 %v29, %v37
    %v39 = vmul.f32 %v36, %v37
    %v40 = vld [vmem:[%s1] sm:$0xff]
    %v41 = vld [vmem:[%s1 + $0x8] sm:$0xff]
    %v42 = vld [vmem:[%s1 + $0x10] sm:$0xff]
    %v43 = vld [vmem:[%s1 + $0x18] sm:$0xff]
    %v44 = vld [vmem:[%s1 + $0x20] sm:$0xff]
    %v45 = vld [vmem:[%s1 + $0x28] sm:$0xff]
    %v46 = vld [vmem:[%s1 + $0x30] sm:$0xff]
    %v47 = vld [vmem:[%s1 + $0x38] sm:$0xff]
    %v48 = vld [vmem:[%s1 + $0x40] sm:$0xff]
    %v49 = vld [vmem:[%s1 + $0x48] sm:$0xff]
    %v50 = vld [vmem:[%s1 + $0x50] sm:$0xff]
    %v51 = vld [vmem:[%s1 + $0x58] sm:$0xff]
    %v52 = vld [vmem:[%s1 + $0x60] sm:$0xff]
    %v53 = vld [vmem:[%s1 + $0x68] sm:$0xff]
    %v54 = vld [vmem:[%s1 + $0x70] sm:$0xff]
    %v55 = vld [vmem:[%s1 + $0x78] sm:$0xff]
    %v56 = vld [vmem:[%s2] sm:$0x1]
    %v58 = vlaneseq
    %v59 = vshrl.u32 %v58, 7
    %v60 = vsub.s32 0, %v59
    %v61 = vrot.slane %v56, %v60
    %vm65 = vcmask 1041409
    %v66 = vsel %vm65, %v39, %v38
    %68 = vmatprep.subr.mxu0 0.0
    %69 = vmatpush1.msra.mxu0 %v40
    %70 = vmatprep.subr.mxu0 0.0
    %71 = vmatpush1.msra.mxu0 %v41
    %72 = vmatprep.subr.mxu0 0.0
    %73 = vmatpush1.msra.mxu0 %v42
    %74 = vmatprep.subr.mxu0 0.0
    %75 = vmatpush1.msra.mxu0 %v43
    %76 = vmatprep.subr.mxu0 0.0
    %77 = vmatpush1.msra.mxu0 %v44
    %78 = vmatprep.subr.mxu0 0.0
    %79 = vmatpush1.msra.mxu0 %v45
    %80 = vmatprep.subr.mxu0 0.0
    %81 = vmatpush1.msra.mxu0 %v46
    %82 = vmatprep.subr.mxu0 0.0
    %83 = vmatpush1.msra.mxu0 %v47
    %84 = vmatprep.subr.mxu0 0.0
    %85 = vmatpush1.msra.mxu0 %v48
    %86 = vmatprep.subr.mxu0 0.0
    %87 = vmatpush1.msra.mxu0 %v49
    %88 = vmatprep.subr.mxu0 0.0
    %89 = vmatpush1.msra.mxu0 %v50
    %90 = vmatprep.subr.mxu0 0.0
    %91 = vmatpush1.msra.mxu0 %v51
    %92 = vmatprep.subr.mxu0 0.0
    %93 = vmatpush1.msra.mxu0 %v52
    %94 = vmatprep.subr.mxu0 0.0
    %95 = vmatpush1.msra.mxu0 %v53
    %96 = vmatprep.subr.mxu0 0.0
    %97 = vmatpush1.msra.mxu0 %v54
    %98 = vmatprep.subr.mxu0 0.0
    %99 = vmatpush1.msra.mxu0 %v55
    %100 = vmatprep.subr.mxu0 0.0
    %101 = vmatpush1.msra.mxu0 0.0
    %102 = vmatprep.subr.mxu0 0.0
    %103 = vmatpush1.msra.mxu0 0.0
    %104 = vmatprep.subr.mxu0 0.0
    %105 = vmatpush1.msra.mxu0 0.0
    %106 = vmatprep.subr.mxu0 0.0
    %107 = vmatpush1.msra.mxu0 0.0
    %108 = vmatprep.subr.mxu0 0.0
    %109 = vmatpush1.msra.mxu0 0.0
    %110 = vmatprep.subr.mxu0 0.0
    %111 = vmatpush1.msra.mxu0 0.0
    %112 = vmatprep.subr.mxu0 0.0
    %113 = vmatpush1.msra.mxu0 0.0
    %114 = vmatprep.subr.mxu0 0.0
    %115 = vmatpush1.msra.mxu0 0.0
    %116 = vmatprep.subr.mxu0 0.0
    %117 = vmatpush1.msra.mxu0 0.0
    %118 = vmatprep.subr.mxu0 0.0
    %119 = vmatpush1.msra.mxu0 0.0
    %120 = vmatprep.subr.mxu0 0.0
    %121 = vmatpush1.msra.mxu0 0.0
    %122 = vmatprep.subr.mxu0 0.0
    %123 = vmatpush1.msra.mxu0 0.0
    %124 = vmatprep.subr.mxu0 0.0
    %125 = vmatpush1.msra.mxu0 0.0
    %126 = vmatprep.subr.mxu0 0.0
    %127 = vmatpush1.msra.mxu0 0.0
    %128 = vmatprep.subr.mxu0 0.0
    %129 = vmatpush1.msra.mxu0 0.0
    %130 = vmatprep.subr.mxu0 0.0
    %131 = vmatpush1.msra.mxu0 0.0
    %132 = vmatprep.mubr.f32.mxu0 0.0
    %133 = vmatmul.mubr.f32.gmra.mrb[0].mxu0 %v66
    %v134 = vpop.f32.mrb[0].mxu0
    %v135 = vadd.f32 %v61, %v134
    %v136 = vpop.f32.mrb[0].mxu0
    %137 = vdwg.mxu0
    %138 = vst [vmem:[#allocation2] sm:$0x3] %v135
    // Predicated region
    $region14: #{resnet_forward.19} parent=1 // pred_check
      _
    $region15: #{resnet_forward.19} parent=1 // pred_check_branch
      %140 = sbr.rel (0) target = $region17
    $region16: #{resnet_forward.19} parent=1 // pred_region
      %s142 = ssub.s32 32, 32
      %143 = vsyncadd [#allocation3], %s142
      %s145 = sshll.u32 [#allocation2], 4
      %s146 = int_to_ptr.vmem [resolvable:$true] %s145
      %148 = dma.vmem_to_hbm [thread:$0]  %s146, 32, %s3, [#allocation3]
    $region17: #{resnet_forward.19} parent=1 // pred_fallthru
      _
    // Predicated region
    $region18: #{resnet_forward.19} parent=1 // pred_check
      _
    $region19: #{resnet_forward.19} parent=1 // pred_check_branch
      %150 = sbr.rel (0) target = $region21
    $region20: #{resnet_forward.19} parent=1 // pred_region
      %151 = dma.done [#allocation3], 32
    $region21: #{resnet_forward.19} parent=1 // pred_fallthru
      _
    %152 = vsyncpa [#allocation3], 1

// kernel: resnet_forward.18
$region0: #{resnet_forward.18}
  #allocation0 [shape = 'u32[]', space=smem, size = 0x4, offset = 0x4, fixed_abs, tag = 'smem constant byte address 0x4 - core index']
  #allocation1 [shape = 'u32[144,128]{1,0:T(1,128)}', space=vmem, size = 0x12000, scoped, tag = 'internal scratch']
  %s0 = inlined_call_operand.vmem [shape: bf16[32,504], index: 0, kind: input, shape index: {}]
  %s1 = inlined_call_operand.vmem [shape: bf16[504,128], index: 1, kind: input, shape index: {}]
  %s2 = inlined_call_operand.vmem [shape: f32[1,128], index: 2, kind: input, shape index: {}]
  %s3 = inlined_call_operand.vmem [shape: bf16[32,128], index: 3, kind: input, shape index: {}]
  %s4 = inlined_call_operand.vmem [shape: bf16[32,128], index: 4, kind: output, shape index: {}]
  %s5 = sld [smem:[#allocation0]]
  $region26: #{resnet_forward.18} parent=0
    _
  %s7 = ssub.s32 1, %s5
  %s8 = scalar_select 0, %s7, %s5
  // Predicated region
  $region2: #{resnet_forward.18} parent=0 // pred_check
    _
  $region3: #{resnet_forward.18} parent=0 // pred_check_branch
    %10 = sbr.rel (0) target = $region5
  $region4: #{resnet_forward.18} parent=0 // pred_region
    _
  $region5: #{resnet_forward.18} parent=0 // pred_fallthru
    _
  // Predicated region
  $region6: #{resnet_forward.18} parent=0 // pred_check
    _
  $region7: #{resnet_forward.18} parent=0 // pred_check_branch
    %12 = sbr.rel (0) target = $region9
  $region8: #{resnet_forward.18} parent=0 // pred_region
    _
  $region9: #{resnet_forward.18} parent=0 // pred_fallthru
    _
  // Predicated region
  $region10: #{resnet_forward.18} parent=0 // pred_check
    _
  $region11: #{resnet_forward.18} parent=0 // pred_check_branch
    %14 = sbr.rel (0) target = $region13
  $region12: #{resnet_forward.18} parent=0 // pred_region
    _
  $region13: #{resnet_forward.18} parent=0 // pred_fallthru
    _
  // Predicated region
  $region14: #{resnet_forward.18} parent=0 // pred_check
    _
  $region15: #{resnet_forward.18} parent=0 // pred_check_branch
    %16 = sbr.rel (0) target = $region17
  $region16: #{resnet_forward.18} parent=0 // pred_region
    _
  $region17: #{resnet_forward.18} parent=0 // pred_fallthru
    _
  %v18 = vld [vmem:[%s0] sm:$0xff]
  %v19 = vld [vmem:[%s0 + $0x8] sm:$0xff]
  %v20 = vld [vmem:[%s0 + $0x10] sm:$0xff]
  %v21 = vld [vmem:[%s0 + $0x18] sm:$0xff]
  %v22 = vld [vmem:[%s0 + $0x20] sm:$0xff]
  %v23 = vld [vmem:[%s0 + $0x28] sm:$0xff]
  %v24 = vld [vmem:[%s0 + $0x30] sm:$0xff]
  %v25 = vld [vmem:[%s0 + $0x38] sm:$0xff]
  %v26 = vld [vmem:[%s1] sm:$0xf]
  %v27 = vld [vmem:[%s1 + $0x4] sm:$0xf]
  %v28 = vld [vmem:[%s1 + $0x8] sm:$0xf]
  %v29 = vld [vmem:[%s1 + $0xc] sm:$0xf]
  %v30 = vld [vmem:[%s1 + $0x10] sm:$0xf]
  %v31 = vld [vmem:[%s1 + $0x14] sm:$0xf]
  %v32 = vld [vmem:[%s1 + $0x18] sm:$0xf]
  %v33 = vld [vmem:[%s1 + $0x1c] sm:$0xf]
  %v34 = vld [vmem:[%s1 + $0x20] sm:$0xf]
  %v35 = vld [vmem:[%s1 + $0x24] sm:$0xf]
  %v36 = vld [vmem:[%s1 + $0x28] sm:$0xf]
  %v37 = vld [vmem:[%s1 + $0x2c] sm:$0xf]
  %v38 = vld [vmem:[%s1 + $0x30] sm:$0xf]
  %v39 = vld [vmem:[%s1 + $0x34] sm:$0xf]
  %v40 = vld [vmem:[%s1 + $0x38] sm:$0xf]
  %v41 = vld [vmem:[%s1 + $0x3c] sm:$0xf]
  %v42 = vld [vmem:[%s1 + $0x40] sm:$0xf]
  %v43 = vld [vmem:[%s1 + $0x44] sm:$0xf]
  %v44 = vld [vmem:[%s1 + $0x48] sm:$0xf]
  %v45 = vld [vmem:[%s1 + $0x4c] sm:$0xf]
  %v46 = vld [vmem:[%s1 + $0x50] sm:$0xf]
  %v47 = vld [vmem:[%s1 + $0x54] sm:$0xf]
  %v48 = vld [vmem:[%s1 + $0x58] sm:$0xf]
  %v49 = vld [vmem:[%s1 + $0x5c] sm:$0xf]
  %v50 = vld [vmem:[%s1 + $0x60] sm:$0xf]
  %v51 = vld [vmem:[%s1 + $0x64] sm:$0xf]
  %v52 = vld [vmem:[%s1 + $0x68] sm:$0xf]
  %v53 = vld [vmem:[%s1 + $0x6c] sm:$0xf]
  %v54 = vld [vmem:[%s1 + $0x70] sm:$0xf]
  %v55 = vld [vmem:[%s1 + $0x74] sm:$0xf]
  %v56 = vld [vmem:[%s1 + $0x78] sm:$0xf]
  %v57 = vld [vmem:[%s1 + $0x7c] sm:$0xf]
  %v58 = vld [vmem:[%s1 + $0x80] sm:$0xf]
  %v59 = vld [vmem:[%s1 + $0x84] sm:$0xf]
  %v60 = vld [vmem:[%s1 + $0x88] sm:$0xf]
  %v61 = vld [vmem:[%s1 + $0x8c] sm:$0xf]
  %v62 = vld [vmem:[%s1 + $0x90] sm:$0xf]
  %v63 = vld [vmem:[%s1 + $0x94] sm:$0xf]
  %v64 = vld [vmem:[%s1 + $0x98] sm:$0xf]
  %v65 = vld [vmem:[%s1 + $0x9c] sm:$0xf]
  %v66 = vld [vmem:[%s1 + $0xa0] sm:$0xf]
  %v67 = vld [vmem:[%s1 + $0xa4] sm:$0xf]
  %v68 = vld [vmem:[%s1 + $0xa8] sm:$0xf]
  %v69 = vld [vmem:[%s1 + $0xac] sm:$0xf]
  %v70 = vld [vmem:[%s1 + $0xb0] sm:$0xf]
  %v71 = vld [vmem:[%s1 + $0xb4] sm:$0xf]
  %v72 = vld [vmem:[%s1 + $0xb8] sm:$0xf]
  %v73 = vld [vmem:[%s1 + $0xbc] sm:$0xf]
  %v74 = vld [vmem:[%s1 + $0xc0] sm:$0xf]
  %v75 = vld [vmem:[%s1 + $0xc4] sm:$0xf]
  %v76 = vld [vmem:[%s1 + $0xc8] sm:$0xf]
  %v77 = vld [vmem:[%s1 + $0xcc] sm:$0xf]
  %v78 = vld [vmem:[%s1 + $0xd0] sm:$0xf]
  %v79 = vld [vmem:[%s1 + $0xd4] sm:$0xf]
  %v80 = vld [vmem:[%s1 + $0xd8] sm:$0xf]
  %v81 = vld [vmem:[%s1 + $0xdc] sm:$0xf]
  %v82 = vld [vmem:[%s1 + $0xe0] sm:$0xf]
  %v83 = vld [vmem:[%s1 + $0xe4] sm:$0xf]
  %v84 = vld [vmem:[%s1 + $0xe8] sm:$0xf]
  %v85 = vld [vmem:[%s1 + $0xec] sm:$0xf]
  %v86 = vld [vmem:[%s1 + $0xf0] sm:$0xf]
  %v87 = vld [vmem:[%s1 + $0xf4] sm:$0xf]
  %v88 = vld [vmem:[%s1 + $0xf8] sm:$0xf]
  %v89 = vld [vmem:[%s2] sm:$0x1]
  %v91 = vlaneseq
  %v92 = vshrl.u32 %v91, 7
  %v93 = vsub.s32 0, %v92
  %v94 = vrot.slane %v89, %v93
  %v104 = vunpack.c.l.b16 %v18
  %v105 = vunpack.c.h.b16 %v18
  %v106 = vunpack.c.l.b16 %v19
  %v107 = vunpack.c.h.b16 %v19
  %v108 = vunpack.c.l.b16 %v20
  %v109 = vunpack.c.h.b16 %v20
  %v110 = vunpack.c.l.b16 %v21
  %v111 = vunpack.c.h.b16 %v21
  %v112 = vunpack.c.l.b16 %v22
  %v113 = vunpack.c.h.b16 %v22
  %v114 = vunpack.c.l.b16 %v23
  %v115 = vunpack.c.h.b16 %v23
  %v116 = vunpack.c.l.b16 %v24
  %v117 = vunpack.c.h.b16 %v24
  %v118 = vunpack.c.l.b16 %v25
  %v119 = vunpack.c.h.b16 %v25
  %v120 = vpack.c.b16 %v108, %v104
  %v121 = vpack.c.b16 %v109, %v105
  %v122 = vpack.c.b16 %v110, %v106
  %v123 = vpack.c.b16 %v111, %v107
  %v124 = vpack.c.b16 %v116, %v112
  %v125 = vpack.c.b16 %v117, %v113
  %v126 = vpack.c.b16 %v118, %v114
  %v127 = vpack.c.b16 %v119, %v115
  %v197 = vunpack.c.l.b16 %v26
  %v198 = vunpack.c.l.b16 %v27
  %v199 = vunpack.c.l.b16 %v28
  %v200 = vunpack.c.l.b16 %v29
  %v201 = vunpack.c.l.b16 %v30
  %v202 = vunpack.c.l.b16 %v31
  %v203 = vunpack.c.l.b16 %v32
  %v204 = vunpack.c.l.b16 %v33
  %v205 = vunpack.c.l.b16 %v34
  %v206 = vunpack.c.l.b16 %v35
  %v207 = vunpack.c.l.b16 %v36
  %v208 = vunpack.c.l.b16 %v37
  %v209 = vunpack.c.l.b16 %v38
  %v210 = vunpack.c.l.b16 %v39
  %v211 = vunpack.c.l.b16 %v40
  %v212 = vunpack.c.l.b16 %v41
  %v213 = vunpack.c.l.b16 %v42
  %v214 = vunpack.c.l.b16 %v43
  %v215 = vunpack.c.l.b16 %v44
  %v216 = vunpack.c.l.b16 %v45
  %v217 = vunpack.c.l.b16 %v46
  %v218 = vunpack.c.l.b16 %v47
  %v219 = vunpack.c.l.b16 %v48
  %v220 = vunpack.c.l.b16 %v49
  %v221 = vunpack.c.l.b16 %v50
  %v222 = vunpack.c.l.b16 %v51
  %v223 = vunpack.c.l.b16 %v52
  %v224 = vunpack.c.l.b16 %v53
  %v225 = vunpack.c.l.b16 %v54
  %v226 = vunpack.c.l.b16 %v55
  %v227 = vunpack.c.l.b16 %v56
  %v228 = vunpack.c.l.b16 %v57
  %v229 = vunpack.c.l.b16 %v58
  %v230 = vunpack.c.l.b16 %v59
  %v231 = vunpack.c.l.b16 %v60
  %v232 = vunpack.c.l.b16 %v61
  %v233 = vunpack.c.l.b16 %v62
  %v234 = vunpack.c.l.b16 %v63
  %v235 = vunpack.c.l.b16 %v64
  %v236 = vunpack.c.l.b16 %v65
  %v237 = vunpack.c.l.b16 %v66
  %v238 = vunpack.c.l.b16 %v67
  %v239 = vunpack.c.l.b16 %v68
  %v240 = vunpack.c.l.b16 %v69
  %v241 = vunpack.c.l.b16 %v70
  %v242 = vunpack.c.l.b16 %v71
  %v243 = vunpack.c.l.b16 %v72
  %v244 = vunpack.c.l.b16 %v73
  %v245 = vunpack.c.l.b16 %v74
  %v246 = vunpack.c.l.b16 %v75
  %v247 = vunpack.c.l.b16 %v76
  %v248 = vunpack.c.l.b16 %v77
  %v249 = vunpack.c.l.b16 %v78
  %v250 = vunpack.c.l.b16 %v79
  %v251 = vunpack.c.l.b16 %v80
  %v252 = vunpack.c.l.b16 %v81
  %v253 = vunpack.c.l.b16 %v82
  %v254 = vunpack.c.l.b16 %v83
  %v255 = vunpack.c.l.b16 %v84
  %v256 = vunpack.c.l.b16 %v85
  %v257 = vunpack.c.l.b16 %v86
  %v258 = vunpack.c.l.b16 %v87
  %v259 = vunpack.c.l.b16 %v88
  %v260 = vpack.c.b16 %v198, %v197
  %v261 = vpack.c.b16 %v200, %v199
  %v262 = vpack.c.b16 %v202, %v201
  %v263 = vpack.c.b16 %v204, %v203
  %v264 = vpack.c.b16 %v206, %v205
  %v265 = vpack.c.b16 %v208, %v207
  %v266 = vpack.c.b16 %v210, %v209
  %v267 = vpack.c.b16 %v212, %v211
  %v268 = vpack.c.b16 %v214, %v213
  %v269 = vpack.c.b16 %v216, %v215
  %v270 = vpack.c.b16 %v218, %v217
  %v271 = vpack.c.b16 %v220, %v219
  %v272 = vpack.c.b16 %v222, %v221
  %v273 = vpack.c.b16 %v224, %v223
  %v274 = vpack.c.b16 %v226, %v225
  %v275 = vpack.c.b16 %v228, %v227
  %v276 = vpack.c.b16 %v230, %v229
  %v277 = vpack.c.b16 %v232, %v231
  %v278 = vpack.c.b16 %v234, %v233
  %v279 = vpack.c.b16 %v236, %v235
  %v280 = vpack.c.b16 %v238, %v237
  %v281 = vpack.c.b16 %v240, %v239
  %v282 = vpack.c.b16 %v242, %v241
  %v283 = vpack.c.b16 %v244, %v243
  %v284 = vpack.c.b16 %v246, %v245
  %v285 = vpack.c.b16 %v248, %v247
  %v286 = vpack.c.b16 %v250, %v249
  %v287 = vpack.c.b16 %v252, %v251
  %v288 = vpack.c.b16 %v254, %v253
  %v289 = vpack.c.b16 %v256, %v255
  %v290 = vpack.c.b16 %v258, %v257
  %v291 = vpack.c.b16 %v259, %v259
  %vm323 = vcmask 982016
  %v325 = vsel %vm323, %v123, 0
  %v328 = vsel %vm323, %v127, 0
  %vm330 = vcmask 1043456
  %v332 = vsel %vm330, %v291, 0
  %334 = vmatprep.subr.bf16.mxu0 0
  %335 = vmatpush1.bf16.msra.mxu0 %v260
  %336 = vmatprep.subr.bf16.mxu0 0
  %337 = vmatpush1.bf16.msra.mxu0 %v261
  %338 = vmatprep.subr.bf16.mxu0 0
  %339 = vmatpush1.bf16.msra.mxu0 %v262
  %340 = vmatprep.subr.bf16.mxu0 0
  %341 = vmatpush1.bf16.msra.mxu0 %v263
  %342 = vmatprep.subr.bf16.mxu0 0
  %343 = vmatpush1.bf16.msra.mxu0 %v264
  %344 = vmatprep.subr.bf16.mxu0 0
  %345 = vmatpush1.bf16.msra.mxu0 %v265
  %346 = vmatprep.subr.bf16.mxu0 0
  %347 = vmatpush1.bf16.msra.mxu0 %v266
  %348 = vmatprep.subr.bf16.mxu0 0
  %349 = vmatpush1.bf16.msra.mxu0 %v267
  %350 = vmatprep.subr.bf16.mxu0 0
  %351 = vmatpush1.bf16.msra.mxu0 %v268
  %352 = vmatprep.subr.bf16.mxu0 0
  %353 = vmatpush1.bf16.msra.mxu0 %v269
  %354 = vmatprep.subr.bf16.mxu0 0
  %355 = vmatpush1.bf16.msra.mxu0 %v270
  %356 = vmatprep.subr.bf16.mxu0 0
  %357 = vmatpush1.bf16.msra.mxu0 %v271
  %358 = vmatprep.subr.bf16.mxu0 0
  %359 = vmatpush1.bf16.msra.mxu0 %v272
  %360 = vmatprep.subr.bf16.mxu0 0
  %361 = vmatpush1.bf16.msra.mxu0 %v273
  %362 = vmatprep.subr.bf16.mxu0 0
  %363 = vmatpush1.bf16.msra.mxu0 %v274
  %364 = vmatprep.subr.bf16.mxu0 0
  %365 = vmatpush1.bf16.msra.mxu0 %v275
  %366 = vmatprep.mubr.bf16.mxu0 %v121
  %367 = vmatmul.mubr.bf16.gmra.mrb[0].mxu0 %v120
  %v368 = vpop.f32.mrb[0].mxu0
  %v369 = vadd.f32 %v94, %v368
  %v370 = vpop.f32.mrb[0].mxu0
  %v371 = vpop.f32.mrb[0].mxu0
  %v372 = vadd.f32 %v94, %v371
  %v373 = vpop.f32.mrb[0].mxu0
  %374 = vmatprep.mubr.bf16.mxu0 %v125
  %375 = vmatmul.mubr.bf16.gmra.mrb[0].mxu0 %v124
  %v376 = vpop.f32.mrb[0].mxu0
  %v377 = vadd.f32 %v94, %v376
  %v378 = vpop.f32.mrb[0].mxu0
  %v379 = vpop.f32.mrb[0].mxu0
  %v380 = vadd.f32 %v94, %v379
  %v381 = vpop.f32.mrb[0].mxu0
  %382 = vdwg.mxu0
  %383 = vmatprep.subr.bf16.mxu0 0
  %384 = vmatpush1.bf16.msra.mxu0 %v276
  %385 = vmatprep.subr.bf16.mxu0 0
  %386 = vmatpush1.bf16.msra.mxu0 %v277
  %387 = vmatprep.subr.bf16.mxu0 0
  %388 = vmatpush1.bf16.msra.mxu0 %v278
  %389 = vmatprep.subr.bf16.mxu0 0
  %390 = vmatpush1.bf16.msra.mxu0 %v279
  %391 = vmatprep.subr.bf16.mxu0 0
  %392 = vmatpush1.bf16.msra.mxu0 %v280
  %393 = vmatprep.subr.bf16.mxu0 0
  %394 = vmatpush1.bf16.msra.mxu0 %v281
  %395 = vmatprep.subr.bf16.mxu0 0
  %396 = vmatpush1.bf16.msra.mxu0 %v282
  %397 = vmatprep.subr.bf16.mxu0 0
  %398 = vmatpush1.bf16.msra.mxu0 %v283
  %399 = vmatprep.subr.bf16.mxu0 0
  %400 = vmatpush1.bf16.msra.mxu0 %v284
  %401 = vmatprep.subr.bf16.mxu0 0
  %402 = vmatpush1.bf16.msra.mxu0 %v285
  %403 = vmatprep.subr.bf16.mxu0 0
  %404 = vmatpush1.bf16.msra.mxu0 %v286
  %405 = vmatprep.subr.bf16.mxu0 0
  %406 = vmatpush1.bf16.msra.mxu0 %v287
  %407 = vmatprep.subr.bf16.mxu0 0
  %408 = vmatpush1.bf16.msra.mxu0 %v288
  %409 = vmatprep.subr.bf16.mxu0 0
  %410 = vmatpush1.bf16.msra.mxu0 %v289
  %411 = vmatprep.subr.bf16.mxu0 0
  %412 = vmatpush1.bf16.msra.mxu0 %v290
  %413 = vmatprep.subr.bf16.mxu0 0
  %414 = vmatpush1.bf16.msra.mxu0 %v332
  %415 = vmatprep.mubr.bf16.mxu0 %v325
  %416 = vmatmul.mubr.bf16.gmra.mrb[0].mxu0 %v122
  %v417 = vpop.f32.mrb[0].mxu0
  %v418 = vadd.f32 %v369, %v417
  %v419 = vpop.f32.mrb[0].mxu0
  %v420 = vpop.f32.mrb[0].mxu0
  %v421 = vadd.f32 %v372, %v420
  %v422 = vpop.f32.mrb[0].mxu0
  %423 = vmatprep.mubr.bf16.mxu0 %v328
  %424 = vmatmul.mubr.bf16.gmra.mrb[0].mxu0 %v126
  %v425 = vpop.f32.mrb[0].mxu0
  %v426 = vadd.f32 %v377, %v425
  %v427 = vpop.f32.mrb[0].mxu0
  %v428 = vpop.f32.mrb[0].mxu0
  %v429 = vadd.f32 %v380, %v428
  %v430 = vpop.f32.mrb[0].mxu0
  %431 = vdwg.mxu0
  %v432 = vld [vmem:[%s3] sm:$0xf]
  %v433 = vld [vmem:[%s3 + $0x4] sm:$0xf]
  %v434 = vld [vmem:[%s3 + $0x8] sm:$0xf]
  %v435 = vld [vmem:[%s3 + $0xc] sm:$0xf]
  %v436 = vunpack.c.l.bf16 %v432
  %v437 = vunpack.c.l.bf16 %v433
  %v438 = vunpack.c.l.bf16 %v434
  %v439 = vunpack.c.l.bf16 %v435
  %v440 = vadd.f32 %v418, %v436
  %v441 = vadd.f32 %v421, %v437
  %v442 = vadd.f32 %v426, %v438
  %v443 = vadd.f32 %v429, %v439
  %v444 = vmax.f32 %v440, 0.0
  %v445 = vmax.f32 %v441, 0.0
  %v446 = vmax.f32 %v442, 0.0
  %v447 = vmax.f32 %v443, 0.0
  %v448 = vpack.c.bf16 %v445, %v444
  %v449 = vpack.c.bf16 %v447, %v446
  %v452 = vunpack.c.l.b16 %v448
  %v453 = vunpack.c.h.b16 %v448
  %v454 = vunpack.c.l.b16 %v449
  %v455 = vunpack.c.h.b16 %v449
  %v456 = vpack.c.b16 %v452, %v452
  %v457 = vpack.c.b16 %v453, %v453
  %v458 = vpack.c.b16 %v454, %v454
  %v459 = vpack.c.b16 %v455, %v455
  %464 = vst [vmem:[%s4] sm:$0xf] %v456
  %465 = vst [vmem:[%s4 + $0x4] sm:$0xf] %v457
  %466 = vst [vmem:[%s4 + $0x8] sm:$0xf] %v458
  %467 = vst [vmem:[%s4 + $0xc] sm:$0xf] %v459
  // Predicated region
  $region18: #{resnet_forward.18} parent=0 // pred_check
    _
  $region19: #{resnet_forward.18} parent=0 // pred_check_branch
    %469 = sbr.rel (0) target = $region21
  $region20: #{resnet_forward.18} parent=0 // pred_region
    _
  $region21: #{resnet_forward.18} parent=0 // pred_fallthru
    _
  // Predicated region
  $region22: #{resnet_forward.18} parent=0 // pred_check
    _
  $region23: #{resnet_forward.18} parent=0 // pred_check_branch
    %471 = sbr.rel (0) target = $region25
  $region24: #{resnet_forward.18} parent=0 // pred_region
    _
  $region25: #{resnet_forward.18} parent=0 // pred_fallthru
    _

</llo_original>
